<compile_context>
chip_gen: v7x
topology: tpu7x:2x2x1
jax: 0.10.0
libtpu: 0.0.40
codegen_flags: <defaults>
</compile_context>

<pallas_src>
import functools

import jax
import jax.numpy as jnp
import numpy as np
from jax import lax
from jax.experimental import pallas as pl
from jax.experimental.pallas import tpu as pltpu


# ----------------------------------------------------------------------------
# Kernels
# ----------------------------------------------------------------------------
def _conv3x3_kernel(x_ref, w_ref, b_ref, *out_refs, stride, hout, wout,
                    apply_relu, pool, out_halo):
    """3x3 conv (+ folded-BN bias, optional ReLU) for one batch element.

    x_ref : (s*s, Hp, Wp, Cin)   space-to-depth phases of the padded input
    w_ref : (9, Cin, Cout)       bf16 taps with BN scale folded in
    b_ref : (1, Cout)            f32 folded BN bias
    out_refs[0] : (1, Hout(+2), Wout(+2), Cout)  output (zero halo iff out_halo)
    out_refs[1] : (1, 1, Cout)   f32 channel sums (SE squeeze), when pool=True
    """
    s = stride
    cin = x_ref.shape[-1]
    cout = w_ref.shape[-1]
    m = hout * wout
    y_ref = out_refs[0]

    # Tap-by-tap accumulation: 9 MXU matmuls into a resident f32 accumulator.
    # out[h, w] uses xpad[s*h + kh, s*w + kw] = phase[(kh%s)*s + kw%s][h + kh//s, w + kw//s].
    acc = jnp.zeros((m, cout), jnp.float32)
    for kh in range(3):
        for kw in range(3):
            p = (kh % s) * s + (kw % s)
            qh, qw = kh // s, kw // s
            tap = x_ref[p, pl.ds(qh, hout), pl.ds(qw, wout), :].reshape(m, cin)
            acc = acc + jnp.dot(tap, w_ref[kh * 3 + kw],
                                preferred_element_type=jnp.float32)

    out = acc + b_ref[...]                     # folded BN bias (f32 epilogue)
    if apply_relu:
        out = jnp.maximum(out, 0.0)

    interior = out.reshape(hout, wout, cout).astype(y_ref.dtype)
    if out_halo:
        # Write the zero halo so the next 3x3 conv reads this block directly (no XLA pad).
        y_ref[...] = jnp.zeros_like(y_ref)
        y_ref[0, pl.ds(1, hout), pl.ds(1, wout), :] = interior
    else:
        y_ref[0] = interior

    if pool:
        out_refs[1][0] = jnp.sum(out, axis=0, keepdims=True)      # (1, Cout) f32


def _se_residual_kernel(y_ref, x_ref, *rest, has_shortcut, hout, wout, q):
    """Fused: identity (optional 1x1 conv + folded BN) + SE scale + residual add + ReLU.

    y_ref : (1, Hout, Wout, C)   main-branch output (conv2 + BN)
    x_ref : (1, Hp, Wp, Cin)     the single phase of the padded block input that
                                 carries x[s*h, s*w] (selected by the index_map)
    rest  : (w_ref(Cin,C), b_ref(1,C), s_ref(1,1,C), o_ref) if has_shortcut
            else (s_ref(1,1,C), o_ref)
    """
    if has_shortcut:
        w_ref, b_ref, s_ref, o_ref = rest
    else:
        s_ref, o_ref = rest
    c = y_ref.shape[-1]
    m = hout * wout

    y = y_ref[0].reshape(m, c).astype(jnp.float32)
    xr = x_ref[0, pl.ds(q, hout), pl.ds(q, wout), :]
    if has_shortcut:
        cin = x_ref.shape[-1]
        idn = jnp.dot(xr.reshape(m, cin), w_ref[...],
                      preferred_element_type=jnp.float32) + b_ref[...]
    else:
        idn = xr.reshape(m, c).astype(jnp.float32)

    out = jnp.maximum(y * s_ref[0] + idn, 0.0)
    o_ref[0] = out.reshape(hout, wout, c).astype(o_ref.dtype)


# ----------------------------------------------------------------------------
# Wrappers
# ----------------------------------------------------------------------------
def conv3x3_bn(xph, w, scale, bias, *, n, stride, hout, wout,
               relu=False, pool=False, out_halo=False):
    """xph: (n*s*s, Hp, Wp, Cin) phase-decomposed padded input; w: (3, 3, Cin, Cout)."""
    s = stride
    ss = s * s
    _, hp, wp, cin = xph.shape
    cout = w.shape[-1]

    # Fold BN scale into the weights outside the kernel; bias stays f32 for the epilogue.
    wf = (w.reshape(9, cin, cout) * scale[None, None, :]).astype(jnp.bfloat16)
    b2 = bias.reshape(1, cout).astype(jnp.float32)

    ho2 = hout + 2 if out_halo else hout
    wo2 = wout + 2 if out_halo else wout

    out_shapes = [jax.ShapeDtypeStruct((n, ho2, wo2, cout), jnp.bfloat16)]
    out_specs = [pl.BlockSpec((1, ho2, wo2, cout), lambda b: (b, 0, 0, 0))]
    if pool:
        out_shapes.append(jax.ShapeDtypeStruct((n, 1, cout), jnp.float32))
        out_specs.append(pl.BlockSpec((1, 1, cout), lambda b: (b, 0, 0)))

    res = pl.pallas_call(
        functools.partial(_conv3x3_kernel, stride=s, hout=hout, wout=wout,
                          apply_relu=relu, pool=pool, out_halo=out_halo),
        out_shape=tuple(out_shapes),
        grid=(n,),
        in_specs=[
            pl.BlockSpec((ss, hp, wp, cin), lambda b: (b, 0, 0, 0)),
            pl.BlockSpec((9, cin, cout), lambda b: (0, 0, 0)),
            pl.BlockSpec((1, cout), lambda b: (0, 0)),
        ],
        out_specs=tuple(out_specs),
        compiler_params=pltpu.CompilerParams(dimension_semantics=("parallel",)),
    )(xph, wf, b2)
    return res if pool else res[0]


def se_residual(y2, xph, w_sc, sc_scale, sc_bias, s_se, *, n, stride, hout, wout,
                has_shortcut):
    """Fused SE-scale + (optional 1x1 shortcut conv+BN) + residual add + ReLU."""
    s = stride
    ss = s * s
    _, hp, wp, cin = xph.shape
    c = y2.shape[-1]
    p_idx = (1 % s) * s + (1 % s)     # phase whose rows/cols hold x[s*h, s*w]
    q = 1 // s                        # in-phase row/col offset

    in_arrays = [y2, xph]
    in_specs = [
        pl.BlockSpec((1, hout, wout, c), lambda b: (b, 0, 0, 0)),
        # Only the phase actually needed for the identity is DMA'd in.
        pl.BlockSpec((1, hp, wp, cin), lambda b: (b * ss + p_idx, 0, 0, 0)),
    ]
    if has_shortcut:
        wf = (w_sc * sc_scale[None, :]).astype(jnp.bfloat16)
        b2 = sc_bias.reshape(1, c).astype(jnp.float32)
        in_arrays += [wf, b2]
        in_specs += [pl.BlockSpec((cin, c), lambda b: (0, 0)),
                     pl.BlockSpec((1, c), lambda b: (0, 0))]
    in_arrays.append(s_se.reshape(n, 1, c).astype(jnp.float32))
    in_specs.append(pl.BlockSpec((1, 1, c), lambda b: (b, 0, 0)))

    return pl.pallas_call(
        functools.partial(_se_residual_kernel, has_shortcut=has_shortcut,
                          hout=hout, wout=wout, q=q),
        out_shape=jax.ShapeDtypeStruct((n, hout, wout, c), jnp.bfloat16),
        grid=(n,),
        in_specs=in_specs,
        out_specs=pl.BlockSpec((1, hout, wout, c), lambda b: (b, 0, 0, 0)),
        compiler_params=pltpu.CompilerParams(dimension_semantics=("parallel",)),
    )(*in_arrays)


# ----------------------------------------------------------------------------
# BasicBlock (Pallas) + parameters
# ----------------------------------------------------------------------------
def fold_bn(gamma, beta, mean, var, eps=1e-5):
    scale = gamma / jnp.sqrt(var + eps)
    bias = beta - mean * scale
    return scale, bias


def make_params(key, in_channels, channels, r=16):
    hidden = max(1, channels // r)
    keys = iter(jax.random.split(key, 24))

    def bn(c):
        gamma = 1.0 + 0.1 * jax.random.normal(next(keys), (c,), jnp.float32)
        beta = 0.1 * jax.random.normal(next(keys), (c,), jnp.float32)
        mean = 0.1 * jax.random.normal(next(keys), (c,), jnp.float32)
        var = 0.5 + jax.random.uniform(next(keys), (c,), jnp.float32)
        return fold_bn(gamma, beta, mean, var)

    p = {}
    p["w1"] = 0.1 * jax.random.normal(next(keys), (3, 3, in_channels, channels), jnp.float32)
    p["bn1_scale"], p["bn1_bias"] = bn(channels)
    p["w2"] = 0.1 * jax.random.normal(next(keys), (3, 3, channels, channels), jnp.float32)
    p["bn2_scale"], p["bn2_bias"] = bn(channels)
    p["w_sc"] = 0.1 * jax.random.normal(next(keys), (in_channels, channels), jnp.float32)
    p["sc_scale"], p["sc_bias"] = bn(channels)
    p["se_w1"] = 0.1 * jax.random.normal(next(keys), (channels, hidden), jnp.float32)
    p["se_b1"] = 0.1 * jnp.arange(hidden, dtype=jnp.float32)
    p["se_w2"] = 0.1 * jax.random.normal(next(keys), (hidden, channels), jnp.float32)
    p["se_b2"] = 0.01 * jnp.arange(channels, dtype=jnp.float32)
    return p


@functools.partial(jax.jit, static_argnames=("stride", "in_channels", "channels"))
def basic_block_pallas(x_nchw, p, *, stride, in_channels, channels):
    s = stride
    x = jnp.transpose(x_nchw, (0, 2, 3, 1)).astype(jnp.bfloat16)   # NCHW -> NHWC, bf16 MXU path
    N, H, W, Cin = x.shape
    Hout, Wout = H // s, W // s
    halo = 2 // s                       # extra rows/cols each phase needs (k=3, pad=1, stride s)
    hp, wp = Hout + halo, Wout + halo

    # Pad the block input once + space-to-depth phase decomposition (pure repartition,
    # exact for k=3, pad=1, stride s).  This array is shared by conv1 and the final kernel.
    xpad = jnp.pad(x, ((0, 0), (1, 1), (1, 1), (0, 0)))
    phases = [xpad[:, ph::s, pw::s, :][:, :hp, :wp, :]
              for ph in range(s) for pw in range(s)]
    xph = jnp.stack(phases, axis=1).reshape(N * s * s, hp, wp, Cin)

    # conv1 + BN + ReLU (stride s).  Output carries its own zero halo so conv2 reads it directly.
    y1pad = conv3x3_bn(xph, p["w1"], p["bn1_scale"], p["bn1_bias"],
                       n=N, stride=s, hout=Hout, wout=Wout, relu=True, out_halo=True)

    # conv2 + BN (stride 1); second output is the per-image channel sums for the SE squeeze.
    y2, csum = conv3x3_bn(y1pad, p["w2"], p["bn2_scale"], p["bn2_bias"],
                          n=N, stride=1, hout=Hout, wout=Wout, relu=False, pool=True)

    # SE excitation: tiny (N, C) MLP + sigmoid -- plain JAX (near-zero MXU fill in a kernel).
    pooled = csum[:, 0, :] / float(Hout * Wout)                    # global average pool
    hdn = jnp.maximum(pooled @ p["se_w1"] + p["se_b1"], 0.0)
    s_se = jax.nn.sigmoid(hdn @ p["se_w2"] + p["se_b2"])           # (N, C)

    # Fused final pass: shortcut (1x1 conv + BN when present) + SE scale + residual + ReLU.
    has_shortcut = (s != 1) or (in_channels != channels)
    out = se_residual(y2, xph, p["w_sc"], p["sc_scale"], p["sc_bias"], s_se,
                      n=N, stride=s, hout=Hout, wout=Wout, has_shortcut=has_shortcut)
    return jnp.transpose(out, (0, 3, 1, 2))                        # NHWC -> NCHW (bf16)


# ----------------------------------------------------------------------------
# Pure-JAX f32 reference (for the correctness check)
# ----------------------------------------------------------------------------
def basic_block_ref(x_nchw, p, *, stride, in_channels, channels):
    x = jnp.transpose(x_nchw, (0, 2, 3, 1))
    dn = ("NHWC", "HWIO", "NHWC")
    if stride != 1 or in_channels != channels:
        idn = lax.conv_general_dilated(
            x, p["w_sc"].reshape(1, 1, in_channels, channels),
            (stride, stride), "VALID", dimension_numbers=dn)
        idn = idn * p["sc_scale"] + p["sc_bias"]
    else:
        idn = x
    y = lax.conv_general_dilated(x, p["w1"], (stride, stride),
                                 ((1, 1), (1, 1)), dimension_numbers=dn)
    y = jnp.maximum(y * p["bn1_scale"] + p["bn1_bias"], 0.0)
    y = lax.conv_general_dilated(y, p["w2"], (1, 1),
                                 ((1, 1), (1, 1)), dimension_numbers=dn)
    y = y * p["bn2_scale"] + p["bn2_bias"]
    pooled = jnp.mean(y, axis=(1, 2))
    h = jnp.maximum(pooled @ p["se_w1"] + p["se_b1"], 0.0)
    s = jax.nn.sigmoid(h @ p["se_w2"] + p["se_b2"])
    out = jnp.maximum(y * s[:, None, None, :] + idn, 0.0)
    return jnp.transpose(out, (0, 3, 1, 2))


# ----------------------------------------------------------------------------
if __name__ == "__main__":
    N, IN_C, C, H, W, STRIDE = 2, 16, 32, 16, 16, 2   # SE hidden = C // 16 = 2

    key = jax.random.PRNGKey(0)
    kx, kp = jax.random.split(key)
    x = jax.random.normal(kx, (N, IN_C, H, W), jnp.float32)   # PyTorch-style NCHW input
    params = make_params(kp, IN_C, C)

    out = basic_block_pallas(x, params, stride=STRIDE, in_channels=IN_C, channels=C)
    out = jax.block_until_ready(out)

    ref = basic_block_ref(x, params, stride=STRIDE, in_channels=IN_C, channels=C)
    assert out.shape == (N, C, H // STRIDE, W // STRIDE), out.shape
    # bf16 MXU inputs + bf16 final output (f32 accumulation) vs. f32 reference -> relaxed tol.
    np.testing.assert_allclose(np.asarray(out.astype(jnp.float32)), np.asarray(ref),
                               rtol=5e-2, atol=5e-2)

    print("KERNEL_OK")
</pallas_src>

<mosaic_0001>
module attributes {stable_mosaic.version = 11 : i64} {
  func.func @_conv3x3_kernel(%arg0: i32, %arg1: memref<4x9x9x16xbf16, #tpu.memory_space<vmem>>, %arg2: memref<9x16x32xbf16, #tpu.memory_space<vmem>>, %arg3: memref<1x32xf32, #tpu.memory_space<vmem>>, %arg4: memref<1x10x10x32xbf16, #tpu.memory_space<vmem>>) attributes {dimension_semantics = [#tpu.dimension_semantics<parallel>], iteration_bounds = array<i64: 2>, scalar_prefetch = 0 : i64, scratch_operands = 0 : i64, tpu.core_type = #tpu.core_type<tc>, window_params = [{transform_indices = @transform_0, window_bounds = array<i64: 4, 9, 9, 16>}, {pipeline_mode = #tpu.pipeline_mode<synchronous>, transform_indices = @transform_1, window_bounds = array<i64: 9, 16, 32>}, {pipeline_mode = #tpu.pipeline_mode<synchronous>, transform_indices = @transform_2, window_bounds = array<i64: 1, 32>}, {transform_indices = @transform_3, window_bounds = array<i64: 1, 10, 10, 32>}]} {
    %cst = arith.constant 0.000000e+00 : f32
    %0 = vector.broadcast %cst : f32 to vector<64x32xf32>
    %c0 = arith.constant 0 : index
    %c0_0 = arith.constant 0 : index
    %c0_1 = arith.constant 0 : index
    %c0_2 = arith.constant 0 : index
    %1 = vector.load %arg1[%c0, %c0_0, %c0_1, %c0_2] : memref<4x9x9x16xbf16, #tpu.memory_space<vmem>>, vector<1x8x8x16xbf16>
    %2 = vector.shape_cast %1 : vector<1x8x8x16xbf16> to vector<8x8x16xbf16>
    %3 = vector.shape_cast %2 : vector<8x8x16xbf16> to vector<64x16xbf16>
    %c0_3 = arith.constant 0 : index
    %c0_4 = arith.constant 0 : index
    %c0_5 = arith.constant 0 : index
    %4 = vector.load %arg2[%c0_3, %c0_4, %c0_5] : memref<9x16x32xbf16, #tpu.memory_space<vmem>>, vector<1x16x32xbf16>
    %5 = vector.shape_cast %4 : vector<1x16x32xbf16> to vector<16x32xbf16>
    %cst_6 = arith.constant dense<0.000000e+00> : vector<64x32xf32>
    %6 = tpu.matmul %3, %5, %cst_6 {dimension_numbers = #tpu.dot_dimension_numbers<[1], [0], [0], [1], [0, 0, 1, 1], [], []>} : vector<64x16xbf16>, vector<16x32xbf16>, vector<64x32xf32> -> vector<64x32xf32>
    %7 = arith.addf %0, %6 : vector<64x32xf32>
    %c1 = arith.constant 1 : index
    %c0_7 = arith.constant 0 : index
    %c0_8 = arith.constant 0 : index
    %c0_9 = arith.constant 0 : index
    %8 = vector.load %arg1[%c1, %c0_7, %c0_8, %c0_9] : memref<4x9x9x16xbf16, #tpu.memory_space<vmem>>, vector<1x8x8x16xbf16>
    %9 = vector.shape_cast %8 : vector<1x8x8x16xbf16> to vector<8x8x16xbf16>
    %10 = vector.shape_cast %9 : vector<8x8x16xbf16> to vector<64x16xbf16>
    %c1_10 = arith.constant 1 : index
    %c0_11 = arith.constant 0 : index
    %c0_12 = arith.constant 0 : index
    %11 = vector.load %arg2[%c1_10, %c0_11, %c0_12] : memref<9x16x32xbf16, #tpu.memory_space<vmem>>, vector<1x16x32xbf16>
    %12 = vector.shape_cast %11 : vector<1x16x32xbf16> to vector<16x32xbf16>
    %cst_13 = arith.constant dense<0.000000e+00> : vector<64x32xf32>
    %13 = tpu.matmul %10, %12, %cst_13 {dimension_numbers = #tpu.dot_dimension_numbers<[1], [0], [0], [1], [0, 0, 1, 1], [], []>} : vector<64x16xbf16>, vector<16x32xbf16>, vector<64x32xf32> -> vector<64x32xf32>
    %14 = arith.addf %7, %13 : vector<64x32xf32>
    %c0_14 = arith.constant 0 : index
    %c0_15 = arith.constant 0 : index
    %c1_16 = arith.constant 1 : index
    %c0_17 = arith.constant 0 : index
    %15 = vector.load %arg1[%c0_14, %c0_15, %c1_16, %c0_17] : memref<4x9x9x16xbf16, #tpu.memory_space<vmem>>, vector<1x8x8x16xbf16>
    %16 = vector.shape_cast %15 : vector<1x8x8x16xbf16> to vector<8x8x16xbf16>
    %17 = vector.shape_cast %16 : vector<8x8x16xbf16> to vector<64x16xbf16>
    %c2 = arith.constant 2 : index
    %c0_18 = arith.constant 0 : index
    %c0_19 = arith.constant 0 : index
    %18 = vector.load %arg2[%c2, %c0_18, %c0_19] : memref<9x16x32xbf16, #tpu.memory_space<vmem>>, vector<1x16x32xbf16>
    %19 = vector.shape_cast %18 : vector<1x16x32xbf16> to vector<16x32xbf16>
    %cst_20 = arith.constant dense<0.000000e+00> : vector<64x32xf32>
    %20 = tpu.matmul %17, %19, %cst_20 {dimension_numbers = #tpu.dot_dimension_numbers<[1], [0], [0], [1], [0, 0, 1, 1], [], []>} : vector<64x16xbf16>, vector<16x32xbf16>, vector<64x32xf32> -> vector<64x32xf32>
    %21 = arith.addf %14, %20 : vector<64x32xf32>
    %c2_21 = arith.constant 2 : index
    %c0_22 = arith.constant 0 : index
    %c0_23 = arith.constant 0 : index
    %c0_24 = arith.constant 0 : index
    %22 = vector.load %arg1[%c2_21, %c0_22, %c0_23, %c0_24] : memref<4x9x9x16xbf16, #tpu.memory_space<vmem>>, vector<1x8x8x16xbf16>
    %23 = vector.shape_cast %22 : vector<1x8x8x16xbf16> to vector<8x8x16xbf16>
    %24 = vector.shape_cast %23 : vector<8x8x16xbf16> to vector<64x16xbf16>
    %c3 = arith.constant 3 : index
    %c0_25 = arith.constant 0 : index
    %c0_26 = arith.constant 0 : index
    %25 = vector.load %arg2[%c3, %c0_25, %c0_26] : memref<9x16x32xbf16, #tpu.memory_space<vmem>>, vector<1x16x32xbf16>
    %26 = vector.shape_cast %25 : vector<1x16x32xbf16> to vector<16x32xbf16>
    %cst_27 = arith.constant dense<0.000000e+00> : vector<64x32xf32>
    %27 = tpu.matmul %24, %26, %cst_27 {dimension_numbers = #tpu.dot_dimension_numbers<[1], [0], [0], [1], [0, 0, 1, 1], [], []>} : vector<64x16xbf16>, vector<16x32xbf16>, vector<64x32xf32> -> vector<64x32xf32>
    %28 = arith.addf %21, %27 : vector<64x32xf32>
    %c3_28 = arith.constant 3 : index
    %c0_29 = arith.constant 0 : index
    %c0_30 = arith.constant 0 : index
    %c0_31 = arith.constant 0 : index
    %29 = vector.load %arg1[%c3_28, %c0_29, %c0_30, %c0_31] : memref<4x9x9x16xbf16, #tpu.memory_space<vmem>>, vector<1x8x8x16xbf16>
    %30 = vector.shape_cast %29 : vector<1x8x8x16xbf16> to vector<8x8x16xbf16>
    %31 = vector.shape_cast %30 : vector<8x8x16xbf16> to vector<64x16xbf16>
    %c4 = arith.constant 4 : index
    %c0_32 = arith.constant 0 : index
    %c0_33 = arith.constant 0 : index
    %32 = vector.load %arg2[%c4, %c0_32, %c0_33] : memref<9x16x32xbf16, #tpu.memory_space<vmem>>, vector<1x16x32xbf16>
    %33 = vector.shape_cast %32 : vector<1x16x32xbf16> to vector<16x32xbf16>
    %cst_34 = arith.constant dense<0.000000e+00> : vector<64x32xf32>
    %34 = tpu.matmul %31, %33, %cst_34 {dimension_numbers = #tpu.dot_dimension_numbers<[1], [0], [0], [1], [0, 0, 1, 1], [], []>} : vector<64x16xbf16>, vector<16x32xbf16>, vector<64x32xf32> -> vector<64x32xf32>
    %35 = arith.addf %28, %34 : vector<64x32xf32>
    %c2_35 = arith.constant 2 : index
    %c0_36 = arith.constant 0 : index
    %c1_37 = arith.constant 1 : index
    %c0_38 = arith.constant 0 : index
    %36 = vector.load %arg1[%c2_35, %c0_36, %c1_37, %c0_38] : memref<4x9x9x16xbf16, #tpu.memory_space<vmem>>, vector<1x8x8x16xbf16>
    %37 = vector.shape_cast %36 : vector<1x8x8x16xbf16> to vector<8x8x16xbf16>
    %38 = vector.shape_cast %37 : vector<8x8x16xbf16> to vector<64x16xbf16>
    %c5 = arith.constant 5 : index
    %c0_39 = arith.constant 0 : index
    %c0_40 = arith.constant 0 : index
    %39 = vector.load %arg2[%c5, %c0_39, %c0_40] : memref<9x16x32xbf16, #tpu.memory_space<vmem>>, vector<1x16x32xbf16>
    %40 = vector.shape_cast %39 : vector<1x16x32xbf16> to vector<16x32xbf16>
    %cst_41 = arith.constant dense<0.000000e+00> : vector<64x32xf32>
    %41 = tpu.matmul %38, %40, %cst_41 {dimension_numbers = #tpu.dot_dimension_numbers<[1], [0], [0], [1], [0, 0, 1, 1], [], []>} : vector<64x16xbf16>, vector<16x32xbf16>, vector<64x32xf32> -> vector<64x32xf32>
    %42 = arith.addf %35, %41 : vector<64x32xf32>
    %c0_42 = arith.constant 0 : index
    %c1_43 = arith.constant 1 : index
    %c0_44 = arith.constant 0 : index
    %c0_45 = arith.constant 0 : index
    %43 = vector.load %arg1[%c0_42, %c1_43, %c0_44, %c0_45] : memref<4x9x9x16xbf16, #tpu.memory_space<vmem>>, vector<1x8x8x16xbf16>
    %44 = vector.shape_cast %43 : vector<1x8x8x16xbf16> to vector<8x8x16xbf16>
    %45 = vector.shape_cast %44 : vector<8x8x16xbf16> to vector<64x16xbf16>
    %c6 = arith.constant 6 : index
    %c0_46 = arith.constant 0 : index
    %c0_47 = arith.constant 0 : index
    %46 = vector.load %arg2[%c6, %c0_46, %c0_47] : memref<9x16x32xbf16, #tpu.memory_space<vmem>>, vector<1x16x32xbf16>
    %47 = vector.shape_cast %46 : vector<1x16x32xbf16> to vector<16x32xbf16>
    %cst_48 = arith.constant dense<0.000000e+00> : vector<64x32xf32>
    %48 = tpu.matmul %45, %47, %cst_48 {dimension_numbers = #tpu.dot_dimension_numbers<[1], [0], [0], [1], [0, 0, 1, 1], [], []>} : vector<64x16xbf16>, vector<16x32xbf16>, vector<64x32xf32> -> vector<64x32xf32>
    %49 = arith.addf %42, %48 : vector<64x32xf32>
    %c1_49 = arith.constant 1 : index
    %c1_50 = arith.constant 1 : index
    %c0_51 = arith.constant 0 : index
    %c0_52 = arith.constant 0 : index
    %50 = vector.load %arg1[%c1_49, %c1_50, %c0_51, %c0_52] : memref<4x9x9x16xbf16, #tpu.memory_space<vmem>>, vector<1x8x8x16xbf16>
    %51 = vector.shape_cast %50 : vector<1x8x8x16xbf16> to vector<8x8x16xbf16>
    %52 = vector.shape_cast %51 : vector<8x8x16xbf16> to vector<64x16xbf16>
    %c7 = arith.constant 7 : index
    %c0_53 = arith.constant 0 : index
    %c0_54 = arith.constant 0 : index
    %53 = vector.load %arg2[%c7, %c0_53, %c0_54] : memref<9x16x32xbf16, #tpu.memory_space<vmem>>, vector<1x16x32xbf16>
    %54 = vector.shape_cast %53 : vector<1x16x32xbf16> to vector<16x32xbf16>
    %cst_55 = arith.constant dense<0.000000e+00> : vector<64x32xf32>
    %55 = tpu.matmul %52, %54, %cst_55 {dimension_numbers = #tpu.dot_dimension_numbers<[1], [0], [0], [1], [0, 0, 1, 1], [], []>} : vector<64x16xbf16>, vector<16x32xbf16>, vector<64x32xf32> -> vector<64x32xf32>
    %56 = arith.addf %49, %55 : vector<64x32xf32>
    %c0_56 = arith.constant 0 : index
    %c1_57 = arith.constant 1 : index
    %c1_58 = arith.constant 1 : index
    %c0_59 = arith.constant 0 : index
    %57 = vector.load %arg1[%c0_56, %c1_57, %c1_58, %c0_59] : memref<4x9x9x16xbf16, #tpu.memory_space<vmem>>, vector<1x8x8x16xbf16>
    %58 = vector.shape_cast %57 : vector<1x8x8x16xbf16> to vector<8x8x16xbf16>
    %59 = vector.shape_cast %58 : vector<8x8x16xbf16> to vector<64x16xbf16>
    %c8 = arith.constant 8 : index
    %c0_60 = arith.constant 0 : index
    %c0_61 = arith.constant 0 : index
    %60 = vector.load %arg2[%c8, %c0_60, %c0_61] : memref<9x16x32xbf16, #tpu.memory_space<vmem>>, vector<1x16x32xbf16>
    %61 = vector.shape_cast %60 : vector<1x16x32xbf16> to vector<16x32xbf16>
    %cst_62 = arith.constant dense<0.000000e+00> : vector<64x32xf32>
    %62 = tpu.matmul %59, %61, %cst_62 {dimension_numbers = #tpu.dot_dimension_numbers<[1], [0], [0], [1], [0, 0, 1, 1], [], []>} : vector<64x16xbf16>, vector<16x32xbf16>, vector<64x32xf32> -> vector<64x32xf32>
    %63 = arith.addf %56, %62 : vector<64x32xf32>
    %c0_63 = arith.constant 0 : index
    %c0_64 = arith.constant 0 : index
    %64 = vector.load %arg3[%c0_63, %c0_64] : memref<1x32xf32, #tpu.memory_space<vmem>>, vector<1x32xf32>
    %65 = vector.broadcast %64 : vector<1x32xf32> to vector<64x32xf32>
    %66 = arith.addf %63, %65 : vector<64x32xf32>
    %cst_65 = arith.constant 0.000000e+00 : f32
    %67 = vector.broadcast %cst_65 : f32 to vector<64x32xf32>
    %68 = arith.maximumf %66, %67 : vector<64x32xf32>
    %69 = vector.shape_cast %68 : vector<64x32xf32> to vector<8x8x32xf32>
    %70 = arith.truncf %69 : vector<8x8x32xf32> to vector<8x8x32xbf16>
    %cst_66 = arith.constant 0.000000e+00 : bf16
    %71 = vector.broadcast %cst_66 : bf16 to vector<1x10x10x32xbf16>
    %c0_67 = arith.constant 0 : index
    %c0_68 = arith.constant 0 : index
    %c0_69 = arith.constant 0 : index
    %c0_70 = arith.constant 0 : index
    %72 = vector.load %arg4[%c0_67, %c0_68, %c0_69, %c0_70] : memref<1x10x10x32xbf16, #tpu.memory_space<vmem>>, vector<1x10x10x32xbf16>
    tpu.vector_store %arg4[%c0_67, %c0_68, %c0_69, %c0_70], %71 {strides = array<i32>} : memref<1x10x10x32xbf16, #tpu.memory_space<vmem>>, vector<1x10x10x32xbf16>,
    %c0_71 = arith.constant 0 : index
    %c1_72 = arith.constant 1 : index
    %c1_73 = arith.constant 1 : index
    %c0_74 = arith.constant 0 : index
    %73 = vector.load %arg4[%c0_71, %c1_72, %c1_73, %c0_74] : memref<1x10x10x32xbf16, #tpu.memory_space<vmem>>, vector<1x8x8x32xbf16>
    %74 = vector.shape_cast %73 : vector<1x8x8x32xbf16> to vector<8x8x32xbf16>
    %75 = vector.shape_cast %70 : vector<8x8x32xbf16> to vector<1x8x8x32xbf16>
    tpu.vector_store %arg4[%c0_71, %c1_72, %c1_73, %c0_74], %75 {strides = array<i32>} : memref<1x10x10x32xbf16, #tpu.memory_space<vmem>>, vector<1x8x8x32xbf16>,
    return
  }
  func.func @transform_0(%arg0: i32) -> (i32, i32, i32, i32) {
    %c0_i32 = arith.constant 0 : i32
    %c0_i32_0 = arith.constant 0 : i32
    %c0_i32_1 = arith.constant 0 : i32
    %c0_i32_2 = arith.constant 0 : i32
    return %arg0, %c0_i32, %c0_i32_0, %c0_i32_1 : i32, i32, i32, i32
  }
  func.func @transform_1(%arg0: i32) -> (i32, i32, i32) {
    %c0_i32 = arith.constant 0 : i32
    %c0_i32_0 = arith.constant 0 : i32
    %c0_i32_1 = arith.constant 0 : i32
    %c0_i32_2 = arith.constant 0 : i32
    return %c0_i32, %c0_i32_0, %c0_i32_1 : i32, i32, i32
  }
  func.func @transform_2(%arg0: i32) -> (i32, i32) {
    %c0_i32 = arith.constant 0 : i32
    %c0_i32_0 = arith.constant 0 : i32
    %c0_i32_1 = arith.constant 0 : i32
    return %c0_i32, %c0_i32_0 : i32, i32
  }
  func.func @transform_3(%arg0: i32) -> (i32, i32, i32, i32) {
    %c0_i32 = arith.constant 0 : i32
    %c0_i32_0 = arith.constant 0 : i32
    %c0_i32_1 = arith.constant 0 : i32
    %c0_i32_2 = arith.constant 0 : i32
    return %arg0, %c0_i32, %c0_i32_0, %c0_i32_1 : i32, i32, i32, i32
  }
}

module attributes {stable_mosaic.version = 11 : i64} {
  func.func @_conv3x3_kernel(%arg0: i32, %arg1: memref<1x10x10x32xbf16, #tpu.memory_space<vmem>>, %arg2: memref<9x32x32xbf16, #tpu.memory_space<vmem>>, %arg3: memref<1x32xf32, #tpu.memory_space<vmem>>, %arg4: memref<1x8x8x32xbf16, #tpu.memory_space<vmem>>, %arg5: memref<1x1x32xf32, #tpu.memory_space<vmem>>) attributes {dimension_semantics = [#tpu.dimension_semantics<parallel>], iteration_bounds = array<i64: 2>, scalar_prefetch = 0 : i64, scratch_operands = 0 : i64, tpu.core_type = #tpu.core_type<tc>, window_params = [{transform_indices = @transform_0, window_bounds = array<i64: 1, 10, 10, 32>}, {pipeline_mode = #tpu.pipeline_mode<synchronous>, transform_indices = @transform_1, window_bounds = array<i64: 9, 32, 32>}, {pipeline_mode = #tpu.pipeline_mode<synchronous>, transform_indices = @transform_2, window_bounds = array<i64: 1, 32>}, {transform_indices = @transform_3, window_bounds = array<i64: 1, 8, 8, 32>}, {transform_indices = @transform_4, window_bounds = array<i64: 1, 1, 32>}]} {
    %cst = arith.constant 0.000000e+00 : f32
    %0 = vector.broadcast %cst : f32 to vector<64x32xf32>
    %c0 = arith.constant 0 : index
    %c0_0 = arith.constant 0 : index
    %c0_1 = arith.constant 0 : index
    %c0_2 = arith.constant 0 : index
    %1 = vector.load %arg1[%c0, %c0_0, %c0_1, %c0_2] : memref<1x10x10x32xbf16, #tpu.memory_space<vmem>>, vector<1x8x8x32xbf16>
    %2 = vector.shape_cast %1 : vector<1x8x8x32xbf16> to vector<8x8x32xbf16>
    %3 = vector.shape_cast %2 : vector<8x8x32xbf16> to vector<64x32xbf16>
    %c0_3 = arith.constant 0 : index
    %c0_4 = arith.constant 0 : index
    %c0_5 = arith.constant 0 : index
    %4 = vector.load %arg2[%c0_3, %c0_4, %c0_5] : memref<9x32x32xbf16, #tpu.memory_space<vmem>>, vector<1x32x32xbf16>
    %5 = vector.shape_cast %4 : vector<1x32x32xbf16> to vector<32x32xbf16>
    %cst_6 = arith.constant dense<0.000000e+00> : vector<64x32xf32>
    %6 = tpu.matmul %3, %5, %cst_6 {dimension_numbers = #tpu.dot_dimension_numbers<[1], [0], [0], [1], [0, 0, 1, 1], [], []>} : vector<64x32xbf16>, vector<32x32xbf16>, vector<64x32xf32> -> vector<64x32xf32>
    %7 = arith.addf %0, %6 : vector<64x32xf32>
    %c0_7 = arith.constant 0 : index
    %c0_8 = arith.constant 0 : index
    %c1 = arith.constant 1 : index
    %c0_9 = arith.constant 0 : index
    %8 = vector.load %arg1[%c0_7, %c0_8, %c1, %c0_9] : memref<1x10x10x32xbf16, #tpu.memory_space<vmem>>, vector<1x8x8x32xbf16>
    %9 = vector.shape_cast %8 : vector<1x8x8x32xbf16> to vector<8x8x32xbf16>
    %10 = vector.shape_cast %9 : vector<8x8x32xbf16> to vector<64x32xbf16>
    %c1_10 = arith.constant 1 : index
    %c0_11 = arith.constant 0 : index
    %c0_12 = arith.constant 0 : index
    %11 = vector.load %arg2[%c1_10, %c0_11, %c0_12] : memref<9x32x32xbf16, #tpu.memory_space<vmem>>, vector<1x32x32xbf16>
    %12 = vector.shape_cast %11 : vector<1x32x32xbf16> to vector<32x32xbf16>
    %cst_13 = arith.constant dense<0.000000e+00> : vector<64x32xf32>
    %13 = tpu.matmul %10, %12, %cst_13 {dimension_numbers = #tpu.dot_dimension_numbers<[1], [0], [0], [1], [0, 0, 1, 1], [], []>} : vector<64x32xbf16>, vector<32x32xbf16>, vector<64x32xf32> -> vector<64x32xf32>
    %14 = arith.addf %7, %13 : vector<64x32xf32>
    %c0_14 = arith.constant 0 : index
    %c0_15 = arith.constant 0 : index
    %c2 = arith.constant 2 : index
    %c0_16 = arith.constant 0 : index
    %15 = vector.load %arg1[%c0_14, %c0_15, %c2, %c0_16] : memref<1x10x10x32xbf16, #tpu.memory_space<vmem>>, vector<1x8x8x32xbf16>
    %16 = vector.shape_cast %15 : vector<1x8x8x32xbf16> to vector<8x8x32xbf16>
    %17 = vector.shape_cast %16 : vector<8x8x32xbf16> to vector<64x32xbf16>
    %c2_17 = arith.constant 2 : index
    %c0_18 = arith.constant 0 : index
    %c0_19 = arith.constant 0 : index
    %18 = vector.load %arg2[%c2_17, %c0_18, %c0_19] : memref<9x32x32xbf16, #tpu.memory_space<vmem>>, vector<1x32x32xbf16>
    %19 = vector.shape_cast %18 : vector<1x32x32xbf16> to vector<32x32xbf16>
    %cst_20 = arith.constant dense<0.000000e+00> : vector<64x32xf32>
    %20 = tpu.matmul %17, %19, %cst_20 {dimension_numbers = #tpu.dot_dimension_numbers<[1], [0], [0], [1], [0, 0, 1, 1], [], []>} : vector<64x32xbf16>, vector<32x32xbf16>, vector<64x32xf32> -> vector<64x32xf32>
    %21 = arith.addf %14, %20 : vector<64x32xf32>
    %c0_21 = arith.constant 0 : index
    %c1_22 = arith.constant 1 : index
    %c0_23 = arith.constant 0 : index
    %c0_24 = arith.constant 0 : index
    %22 = vector.load %arg1[%c0_21, %c1_22, %c0_23, %c0_24] : memref<1x10x10x32xbf16, #tpu.memory_space<vmem>>, vector<1x8x8x32xbf16>
    %23 = vector.shape_cast %22 : vector<1x8x8x32xbf16> to vector<8x8x32xbf16>
    %24 = vector.shape_cast %23 : vector<8x8x32xbf16> to vector<64x32xbf16>
    %c3 = arith.constant 3 : index
    %c0_25 = arith.constant 0 : index
    %c0_26 = arith.constant 0 : index
    %25 = vector.load %arg2[%c3, %c0_25, %c0_26] : memref<9x32x32xbf16, #tpu.memory_space<vmem>>, vector<1x32x32xbf16>
    %26 = vector.shape_cast %25 : vector<1x32x32xbf16> to vector<32x32xbf16>
    %cst_27 = arith.constant dense<0.000000e+00> : vector<64x32xf32>
    %27 = tpu.matmul %24, %26, %cst_27 {dimension_numbers = #tpu.dot_dimension_numbers<[1], [0], [0], [1], [0, 0, 1, 1], [], []>} : vector<64x32xbf16>, vector<32x32xbf16>, vector<64x32xf32> -> vector<64x32xf32>
    %28 = arith.addf %21, %27 : vector<64x32xf32>
    %c0_28 = arith.constant 0 : index
    %c1_29 = arith.constant 1 : index
    %c1_30 = arith.constant 1 : index
    %c0_31 = arith.constant 0 : index
    %29 = vector.load %arg1[%c0_28, %c1_29, %c1_30, %c0_31] : memref<1x10x10x32xbf16, #tpu.memory_space<vmem>>, vector<1x8x8x32xbf16>
    %30 = vector.shape_cast %29 : vector<1x8x8x32xbf16> to vector<8x8x32xbf16>
    %31 = vector.shape_cast %30 : vector<8x8x32xbf16> to vector<64x32xbf16>
    %c4 = arith.constant 4 : index
    %c0_32 = arith.constant 0 : index
    %c0_33 = arith.constant 0 : index
    %32 = vector.load %arg2[%c4, %c0_32, %c0_33] : memref<9x32x32xbf16, #tpu.memory_space<vmem>>, vector<1x32x32xbf16>
    %33 = vector.shape_cast %32 : vector<1x32x32xbf16> to vector<32x32xbf16>
    %cst_34 = arith.constant dense<0.000000e+00> : vector<64x32xf32>
    %34 = tpu.matmul %31, %33, %cst_34 {dimension_numbers = #tpu.dot_dimension_numbers<[1], [0], [0], [1], [0, 0, 1, 1], [], []>} : vector<64x32xbf16>, vector<32x32xbf16>, vector<64x32xf32> -> vector<64x32xf32>
    %35 = arith.addf %28, %34 : vector<64x32xf32>
    %c0_35 = arith.constant 0 : index
    %c1_36 = arith.constant 1 : index
    %c2_37 = arith.constant 2 : index
    %c0_38 = arith.constant 0 : index
    %36 = vector.load %arg1[%c0_35, %c1_36, %c2_37, %c0_38] : memref<1x10x10x32xbf16, #tpu.memory_space<vmem>>, vector<1x8x8x32xbf16>
    %37 = vector.shape_cast %36 : vector<1x8x8x32xbf16> to vector<8x8x32xbf16>
    %38 = vector.shape_cast %37 : vector<8x8x32xbf16> to vector<64x32xbf16>
    %c5 = arith.constant 5 : index
    %c0_39 = arith.constant 0 : index
    %c0_40 = arith.constant 0 : index
    %39 = vector.load %arg2[%c5, %c0_39, %c0_40] : memref<9x32x32xbf16, #tpu.memory_space<vmem>>, vector<1x32x32xbf16>
    %40 = vector.shape_cast %39 : vector<1x32x32xbf16> to vector<32x32xbf16>
    %cst_41 = arith.constant dense<0.000000e+00> : vector<64x32xf32>
    %41 = tpu.matmul %38, %40, %cst_41 {dimension_numbers = #tpu.dot_dimension_numbers<[1], [0], [0], [1], [0, 0, 1, 1], [], []>} : vector<64x32xbf16>, vector<32x32xbf16>, vector<64x32xf32> -> vector<64x32xf32>
    %42 = arith.addf %35, %41 : vector<64x32xf32>
    %c0_42 = arith.constant 0 : index
    %c2_43 = arith.constant 2 : index
    %c0_44 = arith.constant 0 : index
    %c0_45 = arith.constant 0 : index
    %43 = vector.load %arg1[%c0_42, %c2_43, %c0_44, %c0_45] : memref<1x10x10x32xbf16, #tpu.memory_space<vmem>>, vector<1x8x8x32xbf16>
    %44 = vector.shape_cast %43 : vector<1x8x8x32xbf16> to vector<8x8x32xbf16>
    %45 = vector.shape_cast %44 : vector<8x8x32xbf16> to vector<64x32xbf16>
    %c6 = arith.constant 6 : index
    %c0_46 = arith.constant 0 : index
    %c0_47 = arith.constant 0 : index
    %46 = vector.load %arg2[%c6, %c0_46, %c0_47] : memref<9x32x32xbf16, #tpu.memory_space<vmem>>, vector<1x32x32xbf16>
    %47 = vector.shape_cast %46 : vector<1x32x32xbf16> to vector<32x32xbf16>
    %cst_48 = arith.constant dense<0.000000e+00> : vector<64x32xf32>
    %48 = tpu.matmul %45, %47, %cst_48 {dimension_numbers = #tpu.dot_dimension_numbers<[1], [0], [0], [1], [0, 0, 1, 1], [], []>} : vector<64x32xbf16>, vector<32x32xbf16>, vector<64x32xf32> -> vector<64x32xf32>
    %49 = arith.addf %42, %48 : vector<64x32xf32>
    %c0_49 = arith.constant 0 : index
    %c2_50 = arith.constant 2 : index
    %c1_51 = arith.constant 1 : index
    %c0_52 = arith.constant 0 : index
    %50 = vector.load %arg1[%c0_49, %c2_50, %c1_51, %c0_52] : memref<1x10x10x32xbf16, #tpu.memory_space<vmem>>, vector<1x8x8x32xbf16>
    %51 = vector.shape_cast %50 : vector<1x8x8x32xbf16> to vector<8x8x32xbf16>
    %52 = vector.shape_cast %51 : vector<8x8x32xbf16> to vector<64x32xbf16>
    %c7 = arith.constant 7 : index
    %c0_53 = arith.constant 0 : index
    %c0_54 = arith.constant 0 : index
    %53 = vector.load %arg2[%c7, %c0_53, %c0_54] : memref<9x32x32xbf16, #tpu.memory_space<vmem>>, vector<1x32x32xbf16>
    %54 = vector.shape_cast %53 : vector<1x32x32xbf16> to vector<32x32xbf16>
    %cst_55 = arith.constant dense<0.000000e+00> : vector<64x32xf32>
    %55 = tpu.matmul %52, %54, %cst_55 {dimension_numbers = #tpu.dot_dimension_numbers<[1], [0], [0], [1], [0, 0, 1, 1], [], []>} : vector<64x32xbf16>, vector<32x32xbf16>, vector<64x32xf32> -> vector<64x32xf32>
    %56 = arith.addf %49, %55 : vector<64x32xf32>
    %c0_56 = arith.constant 0 : index
    %c2_57 = arith.constant 2 : index
    %c2_58 = arith.constant 2 : index
    %c0_59 = arith.constant 0 : index
    %57 = vector.load %arg1[%c0_56, %c2_57, %c2_58, %c0_59] : memref<1x10x10x32xbf16, #tpu.memory_space<vmem>>, vector<1x8x8x32xbf16>
    %58 = vector.shape_cast %57 : vector<1x8x8x32xbf16> to vector<8x8x32xbf16>
    %59 = vector.shape_cast %58 : vector<8x8x32xbf16> to vector<64x32xbf16>
    %c8 = arith.constant 8 : index
    %c0_60 = arith.constant 0 : index
    %c0_61 = arith.constant 0 : index
    %60 = vector.load %arg2[%c8, %c0_60, %c0_61] : memref<9x32x32xbf16, #tpu.memory_space<vmem>>, vector<1x32x32xbf16>
    %61 = vector.shape_cast %60 : vector<1x32x32xbf16> to vector<32x32xbf16>
    %cst_62 = arith.constant dense<0.000000e+00> : vector<64x32xf32>
    %62 = tpu.matmul %59, %61, %cst_62 {dimension_numbers = #tpu.dot_dimension_numbers<[1], [0], [0], [1], [0, 0, 1, 1], [], []>} : vector<64x32xbf16>, vector<32x32xbf16>, vector<64x32xf32> -> vector<64x32xf32>
    %63 = arith.addf %56, %62 : vector<64x32xf32>
    %c0_63 = arith.constant 0 : index
    %c0_64 = arith.constant 0 : index
    %64 = vector.load %arg3[%c0_63, %c0_64] : memref<1x32xf32, #tpu.memory_space<vmem>>, vector<1x32xf32>
    %65 = vector.broadcast %64 : vector<1x32xf32> to vector<64x32xf32>
    %66 = arith.addf %63, %65 : vector<64x32xf32>
    %67 = vector.shape_cast %66 : vector<64x32xf32> to vector<8x8x32xf32>
    %68 = arith.truncf %67 : vector<8x8x32xf32> to vector<8x8x32xbf16>
    %c0_65 = arith.constant 0 : index
    %c0_66 = arith.constant 0 : index
    %c0_67 = arith.constant 0 : index
    %c0_68 = arith.constant 0 : index
    %69 = vector.load %arg4[%c0_65, %c0_66, %c0_67, %c0_68] : memref<1x8x8x32xbf16, #tpu.memory_space<vmem>>, vector<1x8x8x32xbf16>
    %70 = vector.shape_cast %69 : vector<1x8x8x32xbf16> to vector<8x8x32xbf16>
    %71 = vector.shape_cast %68 : vector<8x8x32xbf16> to vector<1x8x8x32xbf16>
    tpu.vector_store %arg4[%c0_65, %c0_66, %c0_67, %c0_68], %71 {strides = array<i32>} : memref<1x8x8x32xbf16, #tpu.memory_space<vmem>>, vector<1x8x8x32xbf16>,
    %cst_69 = arith.constant dense<0.000000e+00> : vector<32xf32>
    %72 = vector.multi_reduction <add>, %66, %cst_69 [0] : vector<64x32xf32> to vector<32xf32>
    %73 = vector.shape_cast %72 : vector<32xf32> to vector<1x32xf32>
    %c0_70 = arith.constant 0 : index
    %c0_71 = arith.constant 0 : index
    %c0_72 = arith.constant 0 : index
    %74 = vector.load %arg5[%c0_70, %c0_71, %c0_72] : memref<1x1x32xf32, #tpu.memory_space<vmem>>, vector<1x1x32xf32>
    %75 = vector.shape_cast %74 : vector<1x1x32xf32> to vector<1x32xf32>
    %76 = vector.shape_cast %73 : vector<1x32xf32> to vector<1x1x32xf32>
    tpu.vector_store %arg5[%c0_70, %c0_71, %c0_72], %76 {strides = array<i32>} : memref<1x1x32xf32, #tpu.memory_space<vmem>>, vector<1x1x32xf32>,
    return
  }
  func.func @transform_0(%arg0: i32) -> (i32, i32, i32, i32) {
    %c0_i32 = arith.constant 0 : i32
    %c0_i32_0 = arith.constant 0 : i32
    %c0_i32_1 = arith.constant 0 : i32
    %c0_i32_2 = arith.constant 0 : i32
    return %arg0, %c0_i32, %c0_i32_0, %c0_i32_1 : i32, i32, i32, i32
  }
  func.func @transform_1(%arg0: i32) -> (i32, i32, i32) {
    %c0_i32 = arith.constant 0 : i32
    %c0_i32_0 = arith.constant 0 : i32
    %c0_i32_1 = arith.constant 0 : i32
    %c0_i32_2 = arith.constant 0 : i32
    return %c0_i32, %c0_i32_0, %c0_i32_1 : i32, i32, i32
  }
  func.func @transform_2(%arg0: i32) -> (i32, i32) {
    %c0_i32 = arith.constant 0 : i32
    %c0_i32_0 = arith.constant 0 : i32
    %c0_i32_1 = arith.constant 0 : i32
    return %c0_i32, %c0_i32_0 : i32, i32
  }
  func.func @transform_3(%arg0: i32) -> (i32, i32, i32, i32) {
    %c0_i32 = arith.constant 0 : i32
    %c0_i32_0 = arith.constant 0 : i32
    %c0_i32_1 = arith.constant 0 : i32
    %c0_i32_2 = arith.constant 0 : i32
    return %arg0, %c0_i32, %c0_i32_0, %c0_i32_1 : i32, i32, i32, i32
  }
  func.func @transform_4(%arg0: i32) -> (i32, i32, i32) {
    %c0_i32 = arith.constant 0 : i32
    %c0_i32_0 = arith.constant 0 : i32
    %c0_i32_1 = arith.constant 0 : i32
    return %arg0, %c0_i32, %c0_i32_0 : i32, i32, i32
  }
}

module attributes {stable_mosaic.version = 11 : i64} {
  func.func @_se_residual_kernel(%arg0: i32, %arg1: memref<1x8x8x32xbf16, #tpu.memory_space<vmem>>, %arg2: memref<1x9x9x16xbf16, #tpu.memory_space<vmem>>, %arg3: memref<16x32xbf16, #tpu.memory_space<vmem>>, %arg4: memref<1x32xf32, #tpu.memory_space<vmem>>, %arg5: memref<1x1x32xf32, #tpu.memory_space<vmem>>, %arg6: memref<1x8x8x32xbf16, #tpu.memory_space<vmem>>) attributes {dimension_semantics = [#tpu.dimension_semantics<parallel>], iteration_bounds = array<i64: 2>, scalar_prefetch = 0 : i64, scratch_operands = 0 : i64, tpu.core_type = #tpu.core_type<tc>, window_params = [{transform_indices = @transform_0, window_bounds = array<i64: 1, 8, 8, 32>}, {transform_indices = @transform_1, window_bounds = array<i64: 1, 9, 9, 16>}, {pipeline_mode = #tpu.pipeline_mode<synchronous>, transform_indices = @transform_2, window_bounds = array<i64: 16, 32>}, {pipeline_mode = #tpu.pipeline_mode<synchronous>, transform_indices = @transform_3, window_bounds = array<i64: 1, 32>}, {transform_indices = @transform_4, window_bounds = array<i64: 1, 1, 32>}, {transform_indices = @transform_5, window_bounds = array<i64: 1, 8, 8, 32>}]} {
    %c0 = arith.constant 0 : index
    %c0_0 = arith.constant 0 : index
    %c0_1 = arith.constant 0 : index
    %c0_2 = arith.constant 0 : index
    %0 = vector.load %arg1[%c0, %c0_0, %c0_1, %c0_2] : memref<1x8x8x32xbf16, #tpu.memory_space<vmem>>, vector<1x8x8x32xbf16>
    %1 = vector.shape_cast %0 : vector<1x8x8x32xbf16> to vector<8x8x32xbf16>
    %2 = vector.shape_cast %1 : vector<8x8x32xbf16> to vector<64x32xbf16>
    %3 = arith.extf %2 : vector<64x32xbf16> to vector<64x32xf32>
    %c0_3 = arith.constant 0 : index
    %c0_4 = arith.constant 0 : index
    %c0_5 = arith.constant 0 : index
    %c0_6 = arith.constant 0 : index
    %4 = vector.load %arg2[%c0_3, %c0_4, %c0_5, %c0_6] : memref<1x9x9x16xbf16, #tpu.memory_space<vmem>>, vector<1x8x8x16xbf16>
    %5 = vector.shape_cast %4 : vector<1x8x8x16xbf16> to vector<8x8x16xbf16>
    %6 = vector.shape_cast %5 : vector<8x8x16xbf16> to vector<64x16xbf16>
    %c0_7 = arith.constant 0 : index
    %c0_8 = arith.constant 0 : index
    %7 = vector.load %arg3[%c0_7, %c0_8] : memref<16x32xbf16, #tpu.memory_space<vmem>>, vector<16x32xbf16>
    %cst = arith.constant dense<0.000000e+00> : vector<64x32xf32>
    %8 = tpu.matmul %6, %7, %cst {dimension_numbers = #tpu.dot_dimension_numbers<[1], [0], [0], [1], [0, 0, 1, 1], [], []>} : vector<64x16xbf16>, vector<16x32xbf16>, vector<64x32xf32> -> vector<64x32xf32>
    %c0_9 = arith.constant 0 : index
    %c0_10 = arith.constant 0 : index
    %9 = vector.load %arg4[%c0_9, %c0_10] : memref<1x32xf32, #tpu.memory_space<vmem>>, vector<1x32xf32>
    %10 = vector.broadcast %9 : vector<1x32xf32> to vector<64x32xf32>
    %11 = arith.addf %8, %10 : vector<64x32xf32>
    %c0_11 = arith.constant 0 : index
    %c0_12 = arith.constant 0 : index
    %c0_13 = arith.constant 0 : index
    %12 = vector.load %arg5[%c0_11, %c0_12, %c0_13] : memref<1x1x32xf32, #tpu.memory_space<vmem>>, vector<1x1x32xf32>
    %13 = vector.shape_cast %12 : vector<1x1x32xf32> to vector<1x32xf32>
    %14 = vector.broadcast %13 : vector<1x32xf32> to vector<64x32xf32>
    %15 = arith.mulf %3, %14 : vector<64x32xf32>
    %16 = arith.addf %15, %11 : vector<64x32xf32>
    %cst_14 = arith.constant 0.000000e+00 : f32
    %17 = vector.broadcast %cst_14 : f32 to vector<64x32xf32>
    %18 = arith.maximumf %16, %17 : vector<64x32xf32>
    %19 = vector.shape_cast %18 : vector<64x32xf32> to vector<8x8x32xf32>
    %20 = arith.truncf %19 : vector<8x8x32xf32> to vector<8x8x32xbf16>
    %c0_15 = arith.constant 0 : index
    %c0_16 = arith.constant 0 : index
    %c0_17 = arith.constant 0 : index
    %c0_18 = arith.constant 0 : index
    %21 = vector.load %arg6[%c0_15, %c0_16, %c0_17, %c0_18] : memref<1x8x8x32xbf16, #tpu.memory_space<vmem>>, vector<1x8x8x32xbf16>
    %22 = vector.shape_cast %21 : vector<1x8x8x32xbf16> to vector<8x8x32xbf16>
    %23 = vector.shape_cast %20 : vector<8x8x32xbf16> to vector<1x8x8x32xbf16>
    tpu.vector_store %arg6[%c0_15, %c0_16, %c0_17, %c0_18], %23 {strides = array<i32>} : memref<1x8x8x32xbf16, #tpu.memory_space<vmem>>, vector<1x8x8x32xbf16>,
    return
  }
  func.func @transform_0(%arg0: i32) -> (i32, i32, i32, i32) {
    %c0_i32 = arith.constant 0 : i32
    %c0_i32_0 = arith.constant 0 : i32
    %c0_i32_1 = arith.constant 0 : i32
    %c0_i32_2 = arith.constant 0 : i32
    return %arg0, %c0_i32, %c0_i32_0, %c0_i32_1 : i32, i32, i32, i32
  }
  func.func @transform_1(%arg0: i32) -> (i32, i32, i32, i32) {
    %c4_i32 = arith.constant 4 : i32
    %0 = arith.muli %arg0, %c4_i32 : i32
    %c3_i32 = arith.constant 3 : i32
    %1 = arith.addi %0, %c3_i32 : i32
    %c0_i32 = arith.constant 0 : i32
    %c0_i32_0 = arith.constant 0 : i32
    %c0_i32_1 = arith.constant 0 : i32
    %c0_i32_2 = arith.constant 0 : i32
    return %1, %c0_i32, %c0_i32_0, %c0_i32_1 : i32, i32, i32, i32
  }
  func.func @transform_2(%arg0: i32) -> (i32, i32) {
    %c0_i32 = arith.constant 0 : i32
    %c0_i32_0 = arith.constant 0 : i32
    %c0_i32_1 = arith.constant 0 : i32
    return %c0_i32, %c0_i32_0 : i32, i32
  }
  func.func @transform_3(%arg0: i32) -> (i32, i32) {
    %c0_i32 = arith.constant 0 : i32
    %c0_i32_0 = arith.constant 0 : i32
    %c0_i32_1 = arith.constant 0 : i32
    return %c0_i32, %c0_i32_0 : i32, i32
  }
  func.func @transform_4(%arg0: i32) -> (i32, i32, i32) {
    %c0_i32 = arith.constant 0 : i32
    %c0_i32_0 = arith.constant 0 : i32
    %c0_i32_1 = arith.constant 0 : i32
    return %arg0, %c0_i32, %c0_i32_0 : i32, i32, i32
  }
  func.func @transform_5(%arg0: i32) -> (i32, i32, i32, i32) {
    %c0_i32 = arith.constant 0 : i32
    %c0_i32_0 = arith.constant 0 : i32
    %c0_i32_1 = arith.constant 0 : i32
    %c0_i32_2 = arith.constant 0 : i32
    return %arg0, %c0_i32, %c0_i32_0, %c0_i32_1 : i32, i32, i32, i32
  }
}

</mosaic_0001>

<llo_original>
// kernel: basic_block_pallas.5
$region0: #{basic_block_pallas.5}
  #allocation0 [shape = 'u32[]', space=smem, size = 0x4, offset = 0x4, fixed_abs, tag = 'smem constant byte address 0x4 - core index']
  #allocation1 [shape = 'u32[144,128]{1,0:T(1,128)}', space=vmem, size = 0x12000, scoped, tag = 'internal scratch']
  %s0 = inlined_call_operand.vmem [shape: bf16[2,8,8,32], index: 0, kind: input, shape index: {}]
  %s1 = inlined_call_operand.vmem [shape: bf16[8,9,9,16], index: 1, kind: input, shape index: {}]
  %s2 = inlined_call_operand.vmem [shape: bf16[16,32], index: 2, kind: input, shape index: {}]
  %s3 = inlined_call_operand.vmem [shape: f32[1,32], index: 3, kind: input, shape index: {}]
  %s4 = inlined_call_operand.vmem [shape: f32[2,1,32], index: 4, kind: input, shape index: {}]
  %s5 = inlined_call_operand.hbm [shape: bf16[2,8,8,32], index: 5, kind: output, shape index: {}]
  %s6 = sld [smem:[#allocation0]]
  $region53: #{basic_block_pallas.5} parent=0
    _
  %s8 = ssub.s32 1, %s6
  %s9 = scalar_select 0, %s8, %s6
  $region1: #{basic_block_pallas.5} parent=0
    #allocation2 [shape = 'u8[32768]{0}', space=vmem, size = 0x8000, scoped, tag = 'output window, operand 0']
    #allocation3 [shape = 's32[2]{0}', space=sflag, size = 0x8, scoped, tag = 'scoped memory for basic_block_pallas.5']
    %10 = vsyncpa [#allocation3], 0
    %s11 = scalar_lea.sflag [#allocation3], 1
    %12 = vsyncpa %s11, 0
    loop: start=0, step=1, limit=4
    $region2: #{basic_block_pallas.5} parent=1 // loop_pre_header
      _
    $region3: #{basic_block_pallas.5} parent=1 // loop_header
      %s14 = sphi 0, %s18
      %p15 = scmp.ge.s32.totalorder %s14, 4
      %s24 = sphi 0, %s26
      %s27 = sphi 0, %s24
      %s28 = sphi 0, %s27
      %s44 = sphi 0, %s28
      %s54 = sphi 0, %s56
      %s57 = sphi 0, %s54
      %s58 = sphi 0, %s57
      %s74 = sphi 0, %s58
      %s78 = sphi 0, %s78
      %s80 = sphi 0, %s78
      %s81 = sphi 0, %s80
      %s95 = sphi 0, %s81
      %s99 = sphi 0, %s99
      %s101 = sphi 0, %s99
      %s102 = sphi 0, %s101
      %s116 = sphi 0, %s102
      %s122 = sphi 0, %s124
      %s125 = sphi 0, %s122
      %s126 = sphi 0, %s125
      %s142 = sphi 0, %s126
      %s148 = sphi 0, %s150
      %s151 = sphi 0, %s148
      %s152 = sphi 0, %s151
      %s168 = sphi 0, %s152
    $region4: #{basic_block_pallas.5} parent=1 // loop_header_branch
      %17 = sbr.rel (%p15) target = $region8
    $region5: #{basic_block_pallas.5} parent=1 // loop_body
      %s19 = ssub.s32 %s14, 1
      %s20 = ssub.s32 %s14, 2
      %s21 = sadd.s32 %s14, 1
      %s22 = ssub.s32 %s14, %s21
      %p23 = scmp.eq.s32.totalorder %s22, 0
      %s25 = sadd.s32 %s24, 1
      %s26 = scalar_select %p23, %s24, %s25
      %p29 = pneg %p23
      %p30 = scmp.eq.s32.totalorder %s14, 1
      %p31 = por %p29, %p30
      %p32 = scmp.ne.s32.totalorder %s24, %s27
      %p33 = scmp.eq.s32.totalorder %s14, 0
      %p34 = por %p32, %p33
      %p35 = scmp.ne.s32.totalorder %s24, %s27
      %p36 = scmp.eq.s32.totalorder %s19, 1
      %p37 = por %p35, %p36
      %p38 = scmp.ne.s32.totalorder %s27, %s28
      %p39 = scmp.eq.s32.totalorder %s19, 0
      %p40 = por %p38, %p39
      %p41 = scmp.ne.s32.totalorder %s27, %s28
      %p42 = scmp.eq.s32.totalorder %s20, 1
      %p43 = por %p41, %p42
      %p45 = scmp.ne.s32.totalorder %s28, %s44
      %p46 = scmp.eq.s32.totalorder %s20, 0
      %p47 = por %p45, %p46
      %s48 = smul.u32 %s14, 4
      %s49 = sadd.s32 %s48, 3
      %s50 = smul.u32 %s21, 4
      %s51 = sadd.s32 %s50, 3
      %s52 = ssub.s32 %s49, %s51
      %p53 = scmp.eq.s32.totalorder %s52, 0
      %s55 = sadd.s32 %s54, 1
      %s56 = scalar_select %p53, %s54, %s55
      %p59 = pneg %p53
      %p60 = scmp.eq.s32.totalorder %s14, 1
      %p61 = por %p59, %p60
      %p62 = scmp.ne.s32.totalorder %s54, %s57
      %p63 = scmp.eq.s32.totalorder %s14, 0
      %p64 = por %p62, %p63
      %p65 = scmp.ne.s32.totalorder %s54, %s57
      %p66 = scmp.eq.s32.totalorder %s19, 1
      %p67 = por %p65, %p66
      %p68 = scmp.ne.s32.totalorder %s57, %s58
      %p69 = scmp.eq.s32.totalorder %s19, 0
      %p70 = por %p68, %p69
      %p71 = scmp.ne.s32.totalorder %s57, %s58
      %p72 = scmp.eq.s32.totalorder %s20, 1
      %p73 = por %p71, %p72
      %p75 = scmp.ne.s32.totalorder %s58, %s74
      %p76 = scmp.eq.s32.totalorder %s20, 0
      %p77 = por %p75, %p76
      %s79 = sadd.s32 %s78, 1
      %p82 = scmp.eq.s32.totalorder %s14, 1
      %p83 = scmp.ne.s32.totalorder %s78, %s80
      %p84 = scmp.eq.s32.totalorder %s14, 0
      %p85 = por %p83, %p84
      %p86 = scmp.ne.s32.totalorder %s78, %s80
      %p87 = scmp.eq.s32.totalorder %s19, 1
      %p88 = por %p86, %p87
      %p89 = scmp.ne.s32.totalorder %s80, %s81
      %p90 = scmp.eq.s32.totalorder %s19, 0
      %p91 = por %p89, %p90
      %p92 = scmp.ne.s32.totalorder %s80, %s81
      %p93 = scmp.eq.s32.totalorder %s20, 1
      %p94 = por %p92, %p93
      %p96 = scmp.ne.s32.totalorder %s81, %s95
      %p97 = scmp.eq.s32.totalorder %s20, 0
      %p98 = por %p96, %p97
      %s100 = sadd.s32 %s99, 1
      %p103 = scmp.eq.s32.totalorder %s14, 1
      %p104 = scmp.ne.s32.totalorder %s99, %s101
      %p105 = scmp.eq.s32.totalorder %s14, 0
      %p106 = por %p104, %p105
      %p107 = scmp.ne.s32.totalorder %s99, %s101
      %p108 = scmp.eq.s32.totalorder %s19, 1
      %p109 = por %p107, %p108
      %p110 = scmp.ne.s32.totalorder %s101, %s102
      %p111 = scmp.eq.s32.totalorder %s19, 0
      %p112 = por %p110, %p111
      %p113 = scmp.ne.s32.totalorder %s101, %s102
      %p114 = scmp.eq.s32.totalorder %s20, 1
      %p115 = por %p113, %p114
      %p117 = scmp.ne.s32.totalorder %s102, %s116
      %p118 = scmp.eq.s32.totalorder %s20, 0
      %p119 = por %p117, %p118
      %s120 = ssub.s32 %s14, %s21
      %p121 = scmp.eq.s32.totalorder %s120, 0
      %s123 = sadd.s32 %s122, 1
      %s124 = scalar_select %p121, %s122, %s123
      %p127 = pneg %p121
      %p128 = scmp.eq.s32.totalorder %s14, 1
      %p129 = por %p127, %p128
      %p130 = scmp.ne.s32.totalorder %s122, %s125
      %p131 = scmp.eq.s32.totalorder %s14, 0
      %p132 = por %p130, %p131
      %p133 = scmp.ne.s32.totalorder %s122, %s125
      %p134 = scmp.eq.s32.totalorder %s19, 1
      %p135 = por %p133, %p134
      %p136 = scmp.ne.s32.totalorder %s125, %s126
      %p137 = scmp.eq.s32.totalorder %s19, 0
      %p138 = por %p136, %p137
      %p139 = scmp.ne.s32.totalorder %s125, %s126
      %p140 = scmp.eq.s32.totalorder %s20, 1
      %p141 = por %p139, %p140
      %p143 = scmp.ne.s32.totalorder %s126, %s142
      %p144 = scmp.eq.s32.totalorder %s20, 0
      %p145 = por %p143, %p144
      %s146 = ssub.s32 %s14, %s21
      %p147 = scmp.eq.s32.totalorder %s146, 0
      %s149 = sadd.s32 %s148, 1
      %s150 = scalar_select %p147, %s148, %s149
      %p153 = pneg %p147
      %p154 = scmp.eq.s32.totalorder %s14, 1
      %p155 = por %p153, %p154
      %p156 = scmp.ne.s32.totalorder %s148, %s151
      %p157 = scmp.eq.s32.totalorder %s14, 0
      %p158 = por %p156, %p157
      %p159 = scmp.ne.s32.totalorder %s148, %s151
      %p160 = scmp.eq.s32.totalorder %s19, 1
      %p161 = por %p159, %p160
      %p162 = scmp.ne.s32.totalorder %s151, %s152
      %p163 = scmp.eq.s32.totalorder %s19, 0
      %p164 = por %p162, %p163
      %p165 = scmp.ne.s32.totalorder %s151, %s152
      %p166 = scmp.eq.s32.totalorder %s20, 1
      %p167 = por %p165, %p166
      %p169 = scmp.ne.s32.totalorder %s152, %s168
      %p170 = scmp.eq.s32.totalorder %s20, 0
      %p171 = por %p169, %p170
      %p172 = scmp.le.s32.totalorder 1, %s14
      %p173 = scmp.lt.s32.totalorder %s14, 3
      %p174 = pnand %p172, %p173
      %p175 = pneg %p174
      // Predicated region
      $region9: #{basic_block_pallas.5} parent=5 // pred_check
        _
      $region10: #{basic_block_pallas.5} parent=5 // pred_check_branch
        %177 = sbr.rel (%p174) target = $region12
      $region11: #{basic_block_pallas.5} parent=5 // pred_region
        %s178 = ssub.s32 %s14, 1
        // Predicated region
        $region13: #{basic_block_pallas.5} parent=11 // pred_check
          %p179 = pneg %p91
        $region14: #{basic_block_pallas.5} parent=11 // pred_check_branch
          %181 = sbr.rel (%p179) target = $region16
        $region15: #{basic_block_pallas.5} parent=11 // pred_region
          _
        $region16: #{basic_block_pallas.5} parent=11 // pred_fallthru
          _
        // Predicated region
        $region17: #{basic_block_pallas.5} parent=11 // pred_check
          %p182 = pneg %p112
        $region18: #{basic_block_pallas.5} parent=11 // pred_check_branch
          %184 = sbr.rel (%p182) target = $region20
        $region19: #{basic_block_pallas.5} parent=11 // pred_region
          _
        $region20: #{basic_block_pallas.5} parent=11 // pred_fallthru
          _
      $region12: #{basic_block_pallas.5} parent=5 // pred_fallthru
        _
      %p185 = scmp.lt.s32.totalorder %s14, 2
      // Predicated region
      $region21: #{basic_block_pallas.5} parent=5 // pred_check
        %p186 = pneg %p185
      $region22: #{basic_block_pallas.5} parent=5 // pred_check_branch
        %188 = sbr.rel (%p186) target = $region24
      $region23: #{basic_block_pallas.5} parent=5 // pred_region
        // Predicated region
        $region25: #{basic_block_pallas.5} parent=23 // pred_check
          %p189 = pneg %p34
        $region26: #{basic_block_pallas.5} parent=23 // pred_check_branch
          %191 = sbr.rel (%p189) target = $region28
        $region27: #{basic_block_pallas.5} parent=23 // pred_region
          %p192 = scmp.lt.s32.totalorder %s14, 1
          %s193 = scalar_select %p192, %s14, 1
          %s194 = smul.addr %s193, 8
          %s195 = smul.addr %s194, 4
          %s196 = scalar_lea.vmem %s0, %s195
        $region28: #{basic_block_pallas.5} parent=23 // pred_fallthru
          _
        // Predicated region
        $region29: #{basic_block_pallas.5} parent=23 // pred_check
          %p197 = pneg %p64
        $region30: #{basic_block_pallas.5} parent=23 // pred_check_branch
          %199 = sbr.rel (%p197) target = $region32
        $region31: #{basic_block_pallas.5} parent=23 // pred_region
          %s200 = smul.u32 %s14, 4
          %s201 = sadd.s32 %s200, 3
          %p202 = scmp.lt.s32.totalorder %s201, 7
          %s203 = scalar_select %p202, %s201, 7
          %s204 = smul.addr %s203, 18
          %s205 = smul.addr %s204, 4
          %s206 = scalar_lea.vmem %s1, %s205
          %s207 = smul.u32 %s14, 4
          %s208 = sadd.s32 %s207, 3
        $region32: #{basic_block_pallas.5} parent=23 // pred_fallthru
          _
        // Predicated region
        $region33: #{basic_block_pallas.5} parent=23 // pred_check
          %p209 = pneg %p132
        $region34: #{basic_block_pallas.5} parent=23 // pred_check_branch
          %211 = sbr.rel (%p209) target = $region36
        $region35: #{basic_block_pallas.5} parent=23 // pred_region
          %p212 = scmp.lt.s32.totalorder %s14, 1
          %s213 = scalar_select %p212, %s14, 1
          %s214 = scalar_lea.vmem %s4, %s213
        $region36: #{basic_block_pallas.5} parent=23 // pred_fallthru
          _
      $region24: #{basic_block_pallas.5} parent=5 // pred_fallthru
        _
      %p215 = scmp.le.s32.totalorder 1, %s14
      %p216 = scmp.lt.s32.totalorder %s14, 3
      %p217 = pnand %p215, %p216
      %p218 = pneg %p217
      // Predicated region
      $region37: #{basic_block_pallas.5} parent=5 // pred_check
        _
      $region38: #{basic_block_pallas.5} parent=5 // pred_check_branch
        %220 = sbr.rel (%p217) target = $region40
      $region39: #{basic_block_pallas.5} parent=5 // pred_region
        %s221 = ssub.s32 %s14, 1
        %p222 = scmp.lt.s32.totalorder %s19, 1
        %s223 = scalar_select %p222, %s19, 1
        %s224 = smul.addr %s223, 8
        %s225 = smul.addr %s224, 4
        %s226 = scalar_lea.vmem %s0, %s225
        %p227 = pneg %p40
        %p228 = pneg %p37
        %s229 = smul.u32 %s19, 4
        %s230 = sadd.s32 %s229, 3
        %p231 = scmp.lt.s32.totalorder %s230, 7
        %s232 = scalar_select %p231, %s230, 7
        %s233 = smul.addr %s232, 18
        %s234 = smul.addr %s233, 4
        %s235 = scalar_lea.vmem %s1, %s234
        %p236 = pneg %p70
        %p237 = pneg %p67
        %p238 = pneg %p91
        %p239 = pneg %p88
        %p240 = pneg %p112
        %p241 = pneg %p109
        %p242 = scmp.lt.s32.totalorder %s19, 1
        %s243 = scalar_select %p242, %s19, 1
        %s244 = scalar_lea.vmem %s4, %s243
        %p245 = pneg %p138
        %p246 = pneg %p135
        %p247 = pneg %p164
        %p248 = pneg %p161
        %s249 = sand.u32 %s151, 1
        %s250 = scalar_lea.sflag [#allocation3], %s249
        %s251 = sand.u32 %s151, 1
        %s252 = smul.addr %s251, 32
        %s253 = scalar_lea.vmem [#allocation2], %s252
        %p254 = scmp.lt.s32.totalorder %s19, 1
        %s255 = scalar_select %p254, %s19, 1
        %s256 = smul.addr %s255, 8
        %s257 = smul.addr %s256, 4
        %s258 = scalar_lea.vmem %s0, %s257
        %s259 = smul.u32 %s19, 4
        %s260 = sadd.s32 %s259, 3
        %p261 = scmp.lt.s32.totalorder %s260, 7
        %s262 = scalar_select %p261, %s260, 7
        %s263 = smul.addr %s262, 18
        %s264 = smul.addr %s263, 4
        %s265 = scalar_lea.vmem %s1, %s264
        %s266 = smul.u32 %s19, 4
        %s267 = sadd.s32 %s266, 3
        %p268 = scmp.lt.s32.totalorder %s19, 1
        %s269 = scalar_select %p268, %s19, 1
        %s270 = scalar_lea.vmem %s4, %s269
        %v272 = vld [vmem:[%s258] sm:$0xf]
        %v273 = vld [vmem:[%s258 + $0x4] sm:$0xf]
        %v274 = vld [vmem:[%s258 + $0x8] sm:$0xf]
        %v275 = vld [vmem:[%s258 + $0xc] sm:$0xf]
        %v276 = vld [vmem:[%s258 + $0x10] sm:$0xf]
        %v277 = vld [vmem:[%s258 + $0x14] sm:$0xf]
        %v278 = vld [vmem:[%s258 + $0x18] sm:$0xf]
        %v279 = vld [vmem:[%s258 + $0x1c] sm:$0xf]
        %v280 = vunpack.c.l.bf16 %v272
        %v281 = vunpack.c.l.bf16 %v273
        %v282 = vunpack.c.l.bf16 %v274
        %v283 = vunpack.c.l.bf16 %v275
        %v284 = vunpack.c.l.bf16 %v276
        %v285 = vunpack.c.l.bf16 %v277
        %v286 = vunpack.c.l.bf16 %v278
        %v287 = vunpack.c.l.bf16 %v279
        %v288 = vld [vmem:[%s265] sm:$0xf]
        %v289 = vld [vmem:[%s265 + $0x8] sm:$0xf]
        %v290 = vld [vmem:[%s265 + $0x10] sm:$0xf]
        %v291 = vld [vmem:[%s265 + $0x18] sm:$0xf]
        %v292 = vld [vmem:[%s265 + $0x20] sm:$0xf]
        %v293 = vld [vmem:[%s265 + $0x28] sm:$0xf]
        %v294 = vld [vmem:[%s265 + $0x30] sm:$0xf]
        %v295 = vld [vmem:[%s265 + $0x38] sm:$0xf]
        %v296 = vld [vmem:[%s2] sm:$0xf]
        %v297 = vld [vmem:[%s2 + $0x4] sm:$0xf]
        %v298 = vld [vmem:[%s3] sm:$0x1]
        %v300 = vlaneseq
        %v301 = vshrl.u32 %v300, 7
        %v302 = vsub.s32 0, %v301
        %v303 = vrot.slane %v298, %v302
        %v313 = vunpack.c.l.b16 %v288
        %v314 = vunpack.c.l.b16 %v289
        %v315 = vunpack.c.l.b16 %v290
        %v316 = vunpack.c.l.b16 %v291
        %v317 = vunpack.c.l.b16 %v292
        %v318 = vunpack.c.l.b16 %v293
        %v319 = vunpack.c.l.b16 %v294
        %v320 = vunpack.c.l.b16 %v295
        %v321 = vpack.c.b16 %v314, %v313
        %v322 = vpack.c.b16 %v316, %v315
        %v323 = vpack.c.b16 %v318, %v317
        %v324 = vpack.c.b16 %v320, %v319
        %v327 = vunpack.c.l.b16 %v296
        %v328 = vunpack.c.l.b16 %v297
        %v329 = vpack.c.b16 %v328, %v327
        %vm331 = vcmask 130048
        %v333 = vsel %vm331, %v321, 0
        %v336 = vsel %vm331, %v322, 0
        %v339 = vsel %vm331, %v323, 0
        %v342 = vsel %vm331, %v324, 0
        %344 = vmatprep.subr.bf16.mxu0 0
        %345 = vmatpush1.bf16.msra.mxu0 %v329
        %346 = vmatprep.subr.bf16.mxu0 0
        %347 = vmatpush1.bf16.msra.mxu0 0
        %348 = vmatprep.subr.bf16.mxu0 0
        %349 = vmatpush1.bf16.msra.mxu0 0
        %350 = vmatprep.subr.bf16.mxu0 0
        %351 = vmatpush1.bf16.msra.mxu0 0
        %352 = vmatprep.subr.bf16.mxu0 0
        %353 = vmatpush1.bf16.msra.mxu0 0
        %354 = vmatprep.subr.bf16.mxu0 0
        %355 = vmatpush1.bf16.msra.mxu0 0
        %356 = vmatprep.subr.bf16.mxu0 0
        %357 = vmatpush1.bf16.msra.mxu0 0
        %358 = vmatprep.subr.bf16.mxu0 0
        %359 = vmatpush1.bf16.msra.mxu0 0
        %360 = vmatprep.subr.bf16.mxu0 0
        %361 = vmatpush1.bf16.msra.mxu0 0
        %362 = vmatprep.subr.bf16.mxu0 0
        %363 = vmatpush1.bf16.msra.mxu0 0
        %364 = vmatprep.subr.bf16.mxu0 0
        %365 = vmatpush1.bf16.msra.mxu0 0
        %366 = vmatprep.subr.bf16.mxu0 0
        %367 = vmatpush1.bf16.msra.mxu0 0
        %368 = vmatprep.subr.bf16.mxu0 0
        %369 = vmatpush1.bf16.msra.mxu0 0
        %370 = vmatprep.subr.bf16.mxu0 0
        %371 = vmatpush1.bf16.msra.mxu0 0
        %372 = vmatprep.subr.bf16.mxu0 0
        %373 = vmatpush1.bf16.msra.mxu0 0
        %374 = vmatprep.subr.bf16.mxu0 0
        %375 = vmatpush1.bf16.msra.mxu0 0
        %376 = vmatprep.mubr.bf16.mxu0 0
        %377 = vmatmul.mubr.bf16.gmra.mrb[0].mxu0 %v333
        %v378 = vpop.f32.mrb[0].mxu0
        %v379 = vadd.f32 %v303, %v378
        %v380 = vpop.f32.mrb[0].mxu0
        %v381 = vpop.f32.mrb[0].mxu0
        %v382 = vadd.f32 %v303, %v381
        %v383 = vpop.f32.mrb[0].mxu0
        %384 = vmatprep.mubr.bf16.mxu0 0
        %385 = vmatmul.mubr.bf16.gmra.mrb[0].mxu0 %v336
        %v386 = vpop.f32.mrb[0].mxu0
        %v387 = vadd.f32 %v303, %v386
        %v388 = vpop.f32.mrb[0].mxu0
        %v389 = vpop.f32.mrb[0].mxu0
        %v390 = vadd.f32 %v303, %v389
        %v391 = vpop.f32.mrb[0].mxu0
        %392 = vmatprep.mubr.bf16.mxu0 0
        %393 = vmatmul.mubr.bf16.gmra.mrb[0].mxu0 %v339
        %v394 = vpop.f32.mrb[0].mxu0
        %v395 = vadd.f32 %v303, %v394
        %v396 = vpop.f32.mrb[0].mxu0
        %v397 = vpop.f32.mrb[0].mxu0
        %v398 = vadd.f32 %v303, %v397
        %v399 = vpop.f32.mrb[0].mxu0
        %400 = vmatprep.mubr.bf16.mxu0 0
        %401 = vmatmul.mubr.bf16.gmra.mrb[0].mxu0 %v342
        %v402 = vpop.f32.mrb[0].mxu0
        %v403 = vadd.f32 %v303, %v402
        %v404 = vpop.f32.mrb[0].mxu0
        %v405 = vpop.f32.mrb[0].mxu0
        %v406 = vadd.f32 %v303, %v405
        %v407 = vpop.f32.mrb[0].mxu0
        %408 = vdwg.mxu0
        %v409 = vld [vmem:[%s270] sm:$0x1]
        %v411 = vlaneseq
        %v412 = vshrl.u32 %v411, 7
        %v413 = vsub.s32 0, %v412
        %v414 = vrot.slane %v409, %v413
        %v416 = vmul.f32 %v280, %v414
        %v417 = vmul.f32 %v281, %v414
        %v418 = vmul.f32 %v282, %v414
        %v419 = vmul.f32 %v283, %v414
        %v420 = vmul.f32 %v284, %v414
        %v421 = vmul.f32 %v285, %v414
        %v422 = vmul.f32 %v286, %v414
        %v423 = vmul.f32 %v287, %v414
        %v424 = vadd.f32 %v416, %v379
        %v425 = vadd.f32 %v417, %v382
        %v426 = vadd.f32 %v418, %v387
        %v427 = vadd.f32 %v419, %v390
        %v428 = vadd.f32 %v420, %v395
        %v429 = vadd.f32 %v421, %v398
        %v430 = vadd.f32 %v422, %v403
        %v431 = vadd.f32 %v423, %v406
        %v432 = vmax.f32 %v424, 0.0
        %v433 = vmax.f32 %v425, 0.0
        %v434 = vmax.f32 %v426, 0.0
        %v435 = vmax.f32 %v427, 0.0
        %v436 = vmax.f32 %v428, 0.0
        %v437 = vmax.f32 %v429, 0.0
        %v438 = vmax.f32 %v430, 0.0
        %v439 = vmax.f32 %v431, 0.0
        %v440 = vpack.c.bf16 %v432, %v432
        %v441 = vpack.c.bf16 %v433, %v433
        %v442 = vpack.c.bf16 %v434, %v434
        %v443 = vpack.c.bf16 %v435, %v435
        %v444 = vpack.c.bf16 %v436, %v436
        %v445 = vpack.c.bf16 %v437, %v437
        %v446 = vpack.c.bf16 %v438, %v438
        %v447 = vpack.c.bf16 %v439, %v439
        %vm448 = vcmask 257024
        %449 = vst.msk [vmem:[%s253] sm:$0xf] %vm448, %v440
        %450 = vst.msk [vmem:[%s253 + $0x4] sm:$0xf] %vm448, %v441
        %451 = vst.msk [vmem:[%s253 + $0x8] sm:$0xf] %vm448, %v442
        %452 = vst.msk [vmem:[%s253 + $0xc] sm:$0xf] %vm448, %v443
        %453 = vst.msk [vmem:[%s253 + $0x10] sm:$0xf] %vm448, %v444
        %454 = vst.msk [vmem:[%s253 + $0x14] sm:$0xf] %vm448, %v445
        %455 = vst.msk [vmem:[%s253 + $0x18] sm:$0xf] %vm448, %v446
        %456 = vst.msk [vmem:[%s253 + $0x1c] sm:$0xf] %vm448, %v447
        %s457 = sand.u32 %s151, 1
        %s458 = scalar_lea.sflag [#allocation3], %s457
        %s459 = sand.u32 %s151, 1
        %s460 = smul.addr %s459, 32
        %s461 = scalar_lea.vmem [#allocation2], %s460
        // Predicated region
        $region41: #{basic_block_pallas.5} parent=39 // pred_check
          %p462 = pneg %p161
        $region42: #{basic_block_pallas.5} parent=39 // pred_check_branch
          %464 = sbr.rel (%p462) target = $region44
        $region43: #{basic_block_pallas.5} parent=39 // pred_region
          %s466 = ssub.s32 512, 512
          %467 = vsyncadd %s458, %s466
          %s468 = smul.addr %s19, 8
          %s469 = smul.addr %s468, 64
          %s470 = scalar_lea.hbm %s5, %s469
          %s471 = sshll.u32 %s461, 4
          %s472 = int_to_ptr.vmem [resolvable:$true] %s471
          %477 = dma.vmem_to_hbm [thread:$0]  %s472, 512, %s470, %s458, 64, 64, 4
        $region44: #{basic_block_pallas.5} parent=39 // pred_fallthru
          _
      $region40: #{basic_block_pallas.5} parent=5 // pred_fallthru
        _
      %p478 = scmp.le.s32.totalorder 2, %s14
      // Predicated region
      $region45: #{basic_block_pallas.5} parent=5 // pred_check
        %p479 = pneg %p478
      $region46: #{basic_block_pallas.5} parent=5 // pred_check_branch
        %481 = sbr.rel (%p479) target = $region48
      $region47: #{basic_block_pallas.5} parent=5 // pred_region
        %s482 = ssub.s32 %s14, 2
        // Predicated region
        $region49: #{basic_block_pallas.5} parent=47 // pred_check
          %p483 = pneg %p167
        $region50: #{basic_block_pallas.5} parent=47 // pred_check_branch
          %485 = sbr.rel (%p483) target = $region52
        $region51: #{basic_block_pallas.5} parent=47 // pred_region
          %s486 = sand.u32 %s152, 1
          %s487 = scalar_lea.sflag [#allocation3], %s486
          %s488 = sand.u32 %s152, 1
          %s489 = smul.addr %s488, 32
          %s490 = scalar_lea.vmem [#allocation2], %s489
          %491 = dma.done %s487, 512
        $region52: #{basic_block_pallas.5} parent=47 // pred_fallthru
          _
      $region48: #{basic_block_pallas.5} parent=5 // pred_fallthru
        _
    $region6: #{basic_block_pallas.5} parent=1 // loop_footer
      %s18 = sadd.s32 1, %s14
    $region7: #{basic_block_pallas.5} parent=1 // loop_footer_branch
      %13 = sbr.rel target = $region3
    $region8: #{basic_block_pallas.5} parent=1 // loop_exit
      _
    %492 = vsyncpa [#allocation3], 1
    %s493 = scalar_lea.sflag [#allocation3], 1
    %494 = vsyncpa %s493, 1

// kernel: basic_block_pallas.4
$region0: #{basic_block_pallas.4}
  #allocation0 [shape = 'u32[]', space=smem, size = 0x4, offset = 0x4, fixed_abs, tag = 'smem constant byte address 0x4 - core index']
  #allocation1 [shape = 'u32[144,128]{1,0:T(1,128)}', space=vmem, size = 0x12000, scoped, tag = 'internal scratch']
  %s0 = inlined_call_operand.vmem [shape: bf16[2,10,10,32], index: 0, kind: input, shape index: {}]
  %s1 = inlined_call_operand.vmem [shape: bf16[9,32,32], index: 1, kind: input, shape index: {}]
  %s2 = inlined_call_operand.vmem [shape: f32[1,32], index: 2, kind: input, shape index: {}]
  %s3 = inlined_call_operand.vmem [shape: bf16[2,8,8,32], index: 3, kind: output, shape index: {0}]
  %s4 = inlined_call_operand.vmem [shape: f32[2,1,32], index: 4, kind: output, shape index: {1}]
  %5 = xla_tuple %s3, %s4
  %s6 = sld [smem:[#allocation0]]
  $region53: #{basic_block_pallas.4} parent=0
    _
  %s8 = ssub.s32 1, %s6
  %s9 = scalar_select 0, %s8, %s6
  loop: start=0, step=1, limit=4
  $region2: #{basic_block_pallas.4} parent=0 // loop_pre_header
    _
  $region3: #{basic_block_pallas.4} parent=0 // loop_header
    %s11 = sphi 0, %s15
    %p12 = scmp.ge.s32.totalorder %s11, 4
    %s21 = sphi 0, %s23
    %s24 = sphi 0, %s21
    %s25 = sphi 0, %s24
    %s41 = sphi 0, %s25
    %s45 = sphi 0, %s45
    %s47 = sphi 0, %s45
    %s48 = sphi 0, %s47
    %s62 = sphi 0, %s48
    %s66 = sphi 0, %s66
    %s68 = sphi 0, %s66
    %s69 = sphi 0, %s68
    %s83 = sphi 0, %s69
    %s89 = sphi 0, %s91
    %s92 = sphi 0, %s89
    %s93 = sphi 0, %s92
    %s109 = sphi 0, %s93
    %s115 = sphi 0, %s117
    %s118 = sphi 0, %s115
    %s119 = sphi 0, %s118
    %s135 = sphi 0, %s119
  $region4: #{basic_block_pallas.4} parent=0 // loop_header_branch
    %14 = sbr.rel (%p12) target = $region8
  $region5: #{basic_block_pallas.4} parent=0 // loop_body
    %s16 = ssub.s32 %s11, 1
    %s17 = ssub.s32 %s11, 2
    %s18 = sadd.s32 %s11, 1
    %s19 = ssub.s32 %s11, %s18
    %p20 = scmp.eq.s32.totalorder %s19, 0
    %s22 = sadd.s32 %s21, 1
    %s23 = scalar_select %p20, %s21, %s22
    %p26 = pneg %p20
    %p27 = scmp.eq.s32.totalorder %s11, 1
    %p28 = por %p26, %p27
    %p29 = scmp.ne.s32.totalorder %s21, %s24
    %p30 = scmp.eq.s32.totalorder %s11, 0
    %p31 = por %p29, %p30
    %p32 = scmp.ne.s32.totalorder %s21, %s24
    %p33 = scmp.eq.s32.totalorder %s16, 1
    %p34 = por %p32, %p33
    %p35 = scmp.ne.s32.totalorder %s24, %s25
    %p36 = scmp.eq.s32.totalorder %s16, 0
    %p37 = por %p35, %p36
    %p38 = scmp.ne.s32.totalorder %s24, %s25
    %p39 = scmp.eq.s32.totalorder %s17, 1
    %p40 = por %p38, %p39
    %p42 = scmp.ne.s32.totalorder %s25, %s41
    %p43 = scmp.eq.s32.totalorder %s17, 0
    %p44 = por %p42, %p43
    %s46 = sadd.s32 %s45, 1
    %p49 = scmp.eq.s32.totalorder %s11, 1
    %p50 = scmp.ne.s32.totalorder %s45, %s47
    %p51 = scmp.eq.s32.totalorder %s11, 0
    %p52 = por %p50, %p51
    %p53 = scmp.ne.s32.totalorder %s45, %s47
    %p54 = scmp.eq.s32.totalorder %s16, 1
    %p55 = por %p53, %p54
    %p56 = scmp.ne.s32.totalorder %s47, %s48
    %p57 = scmp.eq.s32.totalorder %s16, 0
    %p58 = por %p56, %p57
    %p59 = scmp.ne.s32.totalorder %s47, %s48
    %p60 = scmp.eq.s32.totalorder %s17, 1
    %p61 = por %p59, %p60
    %p63 = scmp.ne.s32.totalorder %s48, %s62
    %p64 = scmp.eq.s32.totalorder %s17, 0
    %p65 = por %p63, %p64
    %s67 = sadd.s32 %s66, 1
    %p70 = scmp.eq.s32.totalorder %s11, 1
    %p71 = scmp.ne.s32.totalorder %s66, %s68
    %p72 = scmp.eq.s32.totalorder %s11, 0
    %p73 = por %p71, %p72
    %p74 = scmp.ne.s32.totalorder %s66, %s68
    %p75 = scmp.eq.s32.totalorder %s16, 1
    %p76 = por %p74, %p75
    %p77 = scmp.ne.s32.totalorder %s68, %s69
    %p78 = scmp.eq.s32.totalorder %s16, 0
    %p79 = por %p77, %p78
    %p80 = scmp.ne.s32.totalorder %s68, %s69
    %p81 = scmp.eq.s32.totalorder %s17, 1
    %p82 = por %p80, %p81
    %p84 = scmp.ne.s32.totalorder %s69, %s83
    %p85 = scmp.eq.s32.totalorder %s17, 0
    %p86 = por %p84, %p85
    %s87 = ssub.s32 %s11, %s18
    %p88 = scmp.eq.s32.totalorder %s87, 0
    %s90 = sadd.s32 %s89, 1
    %s91 = scalar_select %p88, %s89, %s90
    %p94 = pneg %p88
    %p95 = scmp.eq.s32.totalorder %s11, 1
    %p96 = por %p94, %p95
    %p97 = scmp.ne.s32.totalorder %s89, %s92
    %p98 = scmp.eq.s32.totalorder %s11, 0
    %p99 = por %p97, %p98
    %p100 = scmp.ne.s32.totalorder %s89, %s92
    %p101 = scmp.eq.s32.totalorder %s16, 1
    %p102 = por %p100, %p101
    %p103 = scmp.ne.s32.totalorder %s92, %s93
    %p104 = scmp.eq.s32.totalorder %s16, 0
    %p105 = por %p103, %p104
    %p106 = scmp.ne.s32.totalorder %s92, %s93
    %p107 = scmp.eq.s32.totalorder %s17, 1
    %p108 = por %p106, %p107
    %p110 = scmp.ne.s32.totalorder %s93, %s109
    %p111 = scmp.eq.s32.totalorder %s17, 0
    %p112 = por %p110, %p111
    %s113 = ssub.s32 %s11, %s18
    %p114 = scmp.eq.s32.totalorder %s113, 0
    %s116 = sadd.s32 %s115, 1
    %s117 = scalar_select %p114, %s115, %s116
    %p120 = pneg %p114
    %p121 = scmp.eq.s32.totalorder %s11, 1
    %p122 = por %p120, %p121
    %p123 = scmp.ne.s32.totalorder %s115, %s118
    %p124 = scmp.eq.s32.totalorder %s11, 0
    %p125 = por %p123, %p124
    %p126 = scmp.ne.s32.totalorder %s115, %s118
    %p127 = scmp.eq.s32.totalorder %s16, 1
    %p128 = por %p126, %p127
    %p129 = scmp.ne.s32.totalorder %s118, %s119
    %p130 = scmp.eq.s32.totalorder %s16, 0
    %p131 = por %p129, %p130
    %p132 = scmp.ne.s32.totalorder %s118, %s119
    %p133 = scmp.eq.s32.totalorder %s17, 1
    %p134 = por %p132, %p133
    %p136 = scmp.ne.s32.totalorder %s119, %s135
    %p137 = scmp.eq.s32.totalorder %s17, 0
    %p138 = por %p136, %p137
    %p139 = scmp.le.s32.totalorder 1, %s11
    %p140 = scmp.lt.s32.totalorder %s11, 3
    %p141 = pnand %p139, %p140
    %p142 = pneg %p141
    // Predicated region
    $region9: #{basic_block_pallas.4} parent=5 // pred_check
      _
    $region10: #{basic_block_pallas.4} parent=5 // pred_check_branch
      %144 = sbr.rel (%p141) target = $region12
    $region11: #{basic_block_pallas.4} parent=5 // pred_region
      %s145 = ssub.s32 %s11, 1
      // Predicated region
      $region13: #{basic_block_pallas.4} parent=11 // pred_check
        %p146 = pneg %p58
      $region14: #{basic_block_pallas.4} parent=11 // pred_check_branch
        %148 = sbr.rel (%p146) target = $region16
      $region15: #{basic_block_pallas.4} parent=11 // pred_region
        _
      $region16: #{basic_block_pallas.4} parent=11 // pred_fallthru
        _
      // Predicated region
      $region17: #{basic_block_pallas.4} parent=11 // pred_check
        %p149 = pneg %p79
      $region18: #{basic_block_pallas.4} parent=11 // pred_check_branch
        %151 = sbr.rel (%p149) target = $region20
      $region19: #{basic_block_pallas.4} parent=11 // pred_region
        _
      $region20: #{basic_block_pallas.4} parent=11 // pred_fallthru
        _
    $region12: #{basic_block_pallas.4} parent=5 // pred_fallthru
      _
    %p152 = scmp.lt.s32.totalorder %s11, 2
    // Predicated region
    $region21: #{basic_block_pallas.4} parent=5 // pred_check
      %p153 = pneg %p152
    $region22: #{basic_block_pallas.4} parent=5 // pred_check_branch
      %155 = sbr.rel (%p153) target = $region24
    $region23: #{basic_block_pallas.4} parent=5 // pred_region
      // Predicated region
      $region25: #{basic_block_pallas.4} parent=23 // pred_check
        %p156 = pneg %p31
      $region26: #{basic_block_pallas.4} parent=23 // pred_check_branch
        %158 = sbr.rel (%p156) target = $region28
      $region27: #{basic_block_pallas.4} parent=23 // pred_region
        %p159 = scmp.lt.s32.totalorder %s11, 1
        %s160 = scalar_select %p159, %s11, 1
        %s161 = smul.addr %s160, 20
        %s162 = smul.addr %s161, 4
        %s163 = scalar_lea.vmem %s0, %s162
      $region28: #{basic_block_pallas.4} parent=23 // pred_fallthru
        _
    $region24: #{basic_block_pallas.4} parent=5 // pred_fallthru
      _
    %p164 = scmp.le.s32.totalorder 1, %s11
    %p165 = scmp.lt.s32.totalorder %s11, 3
    %p166 = pnand %p164, %p165
    %p167 = pneg %p166
    // Predicated region
    $region29: #{basic_block_pallas.4} parent=5 // pred_check
      _
    $region30: #{basic_block_pallas.4} parent=5 // pred_check_branch
      %169 = sbr.rel (%p166) target = $region32
    $region31: #{basic_block_pallas.4} parent=5 // pred_region
      %s170 = ssub.s32 %s11, 1
      %p171 = scmp.lt.s32.totalorder %s16, 1
      %s172 = scalar_select %p171, %s16, 1
      %s173 = smul.addr %s172, 20
      %s174 = smul.addr %s173, 4
      %s175 = scalar_lea.vmem %s0, %s174
      %p176 = pneg %p37
      %p177 = pneg %p34
      %p178 = pneg %p58
      %p179 = pneg %p55
      %p180 = pneg %p79
      %p181 = pneg %p76
      %p182 = pneg %p105
      %p183 = pneg %p102
      %p184 = scmp.lt.s32.totalorder %s16, 1
      %s185 = scalar_select %p184, %s16, 1
      %s186 = smul.addr %s185, 8
      %s187 = smul.addr %s186, 4
      %s188 = scalar_lea.vmem %s3, %s187
      %p189 = pneg %p131
      %p190 = pneg %p128
      %p191 = scmp.lt.s32.totalorder %s16, 1
      %s192 = scalar_select %p191, %s16, 1
      %s193 = scalar_lea.vmem %s4, %s192
      %p194 = scmp.lt.s32.totalorder %s16, 1
      %s195 = scalar_select %p194, %s16, 1
      %s196 = smul.addr %s195, 20
      %s197 = smul.addr %s196, 4
      %s198 = scalar_lea.vmem %s0, %s197
      %p199 = scmp.lt.s32.totalorder %s16, 1
      %s200 = scalar_select %p199, %s16, 1
      %s201 = smul.addr %s200, 8
      %s202 = smul.addr %s201, 4
      %s203 = scalar_lea.vmem %s3, %s202
      %p204 = scmp.lt.s32.totalorder %s16, 1
      %s205 = scalar_select %p204, %s16, 1
      %s206 = scalar_lea.vmem %s4, %s205
      %v208 = vld [vmem:[%s198] sm:$0xf]
      %v209 = vld [vmem:[%s198 + $0x8] sm:$0xf]
      %v210 = vld [vmem:[%s198 + $0x10] sm:$0xf]
      %v211 = vld [vmem:[%s198 + $0x18] sm:$0xf]
      %v212 = vld [vmem:[%s198 + $0x20] sm:$0xf]
      %v213 = vld [vmem:[%s198 + $0x28] sm:$0xf]
      %v214 = vld [vmem:[%s198 + $0x30] sm:$0xf]
      %v215 = vld [vmem:[%s198 + $0x38] sm:$0xf]
      %v216 = vld [vmem:[%s1] sm:$0xf]
      %v217 = vld [vmem:[%s1 + $0x4] sm:$0xf]
      %v218 = vld [vmem:[%s1 + $0x8] sm:$0xf]
      %v219 = vld [vmem:[%s1 + $0xc] sm:$0xf]
      %v220 = vld [vmem:[%s198 + $0x4] sm:$0x1]
      %v221 = vld [vmem:[%s198 + $0xc] sm:$0x1]
      %v222 = vld [vmem:[%s198 + $0x14] sm:$0x1]
      %v223 = vld [vmem:[%s198 + $0x1c] sm:$0x1]
      %v224 = vld [vmem:[%s198 + $0x24] sm:$0x1]
      %v225 = vld [vmem:[%s198 + $0x2c] sm:$0x1]
      %v226 = vld [vmem:[%s198 + $0x34] sm:$0x1]
      %v227 = vld [vmem:[%s198 + $0x3c] sm:$0x1]
      %vm228 = vsmask.f32 3328
      %vm229 = vsmask.f32 7440
      %vm230 = vmor %vm228, %vm229
      %v232 = vshrl.u32 %v208, 16
      %v234 = vrot.slane %v232, 4
      %v235 = vshll.u32 %v208, 16
      %v237 = vrot.slane %v235, 5
      %v238 = vor.u32 %v234, %v237
      %v239 = vrot.slane %v238, 4
      %v241 = vshll.u32 %v220, 16
      %v243 = vrot.slane %v241, 5
      %v244 = vsel %vm230, %v239, %v243
      %v246 = vshrl.u32 %v209, 16
      %v248 = vrot.slane %v246, 4
      %v249 = vshll.u32 %v209, 16
      %v251 = vrot.slane %v249, 5
      %v252 = vor.u32 %v248, %v251
      %v253 = vrot.slane %v252, 4
      %v255 = vshll.u32 %v221, 16
      %v257 = vrot.slane %v255, 5
      %v258 = vsel %vm230, %v253, %v257
      %v260 = vshrl.u32 %v210, 16
      %v262 = vrot.slane %v260, 4
      %v263 = vshll.u32 %v210, 16
      %v265 = vrot.slane %v263, 5
      %v266 = vor.u32 %v262, %v265
      %v267 = vrot.slane %v266, 4
      %v269 = vshll.u32 %v222, 16
      %v271 = vrot.slane %v269, 5
      %v272 = vsel %vm230, %v267, %v271
      %v274 = vshrl.u32 %v211, 16
      %v276 = vrot.slane %v274, 4
      %v277 = vshll.u32 %v211, 16
      %v279 = vrot.slane %v277, 5
      %v280 = vor.u32 %v276, %v279
      %v281 = vrot.slane %v280, 4
      %v283 = vshll.u32 %v223, 16
      %v285 = vrot.slane %v283, 5
      %v286 = vsel %vm230, %v281, %v285
      %v288 = vshrl.u32 %v212, 16
      %v290 = vrot.slane %v288, 4
      %v291 = vshll.u32 %v212, 16
      %v293 = vrot.slane %v291, 5
      %v294 = vor.u32 %v290, %v293
      %v295 = vrot.slane %v294, 4
      %v297 = vshll.u32 %v224, 16
      %v299 = vrot.slane %v297, 5
      %v300 = vsel %vm230, %v295, %v299
      %v302 = vshrl.u32 %v213, 16
      %v304 = vrot.slane %v302, 4
      %v305 = vshll.u32 %v213, 16
      %v307 = vrot.slane %v305, 5
      %v308 = vor.u32 %v304, %v307
      %v309 = vrot.slane %v308, 4
      %v311 = vshll.u32 %v225, 16
      %v313 = vrot.slane %v311, 5
      %v314 = vsel %vm230, %v309, %v313
      %v316 = vshrl.u32 %v214, 16
      %v318 = vrot.slane %v316, 4
      %v319 = vshll.u32 %v214, 16
      %v321 = vrot.slane %v319, 5
      %v322 = vor.u32 %v318, %v321
      %v323 = vrot.slane %v322, 4
      %v325 = vshll.u32 %v226, 16
      %v327 = vrot.slane %v325, 5
      %v328 = vsel %vm230, %v323, %v327
      %v330 = vshrl.u32 %v215, 16
      %v332 = vrot.slane %v330, 4
      %v333 = vshll.u32 %v215, 16
      %v335 = vrot.slane %v333, 5
      %v336 = vor.u32 %v332, %v335
      %v337 = vrot.slane %v336, 4
      %v339 = vshll.u32 %v227, 16
      %v341 = vrot.slane %v339, 5
      %v342 = vsel %vm230, %v337, %v341
      %s343 = scalar_lea.vmem %s1, 16
      %v344 = vld [vmem:[%s343] sm:$0xf]
      %v345 = vld [vmem:[%s343 + $0x4] sm:$0xf]
      %v346 = vld [vmem:[%s343 + $0x8] sm:$0xf]
      %v347 = vld [vmem:[%s343 + $0xc] sm:$0xf]
      %v348 = vunpack.c.l.b16 %v244
      %v349 = vunpack.c.l.b16 %v258
      %v350 = vunpack.c.l.b16 %v272
      %v351 = vunpack.c.l.b16 %v286
      %v352 = vunpack.c.l.b16 %v300
      %v353 = vunpack.c.l.b16 %v314
      %v354 = vunpack.c.l.b16 %v328
      %v355 = vunpack.c.l.b16 %v342
      %v356 = vpack.c.b16 %v349, %v348
      %v357 = vpack.c.b16 %v351, %v350
      %v358 = vpack.c.b16 %v353, %v352
      %v359 = vpack.c.b16 %v355, %v354
      %v364 = vunpack.c.l.b16 %v344
      %v365 = vunpack.c.l.b16 %v345
      %v366 = vunpack.c.l.b16 %v346
      %v367 = vunpack.c.l.b16 %v347
      %v368 = vpack.c.b16 %v365, %v364
      %v369 = vpack.c.b16 %v367, %v366
      %vm372 = vcmask 261120
      %v374 = vsel %vm372, %v356, 0
      %v377 = vsel %vm372, %v357, 0
      %v380 = vsel %vm372, %v358, 0
      %v383 = vsel %vm372, %v359, 0
      %385 = vmatprep.subr.bf16.mxu0 0
      %386 = vmatpush1.bf16.msra.mxu0 %v368
      %387 = vmatprep.subr.bf16.mxu0 0
      %388 = vmatpush1.bf16.msra.mxu0 %v369
      %389 = vmatprep.subr.bf16.mxu0 0
      %390 = vmatpush1.bf16.msra.mxu0 0
      %391 = vmatprep.subr.bf16.mxu0 0
      %392 = vmatpush1.bf16.msra.mxu0 0
      %393 = vmatprep.subr.bf16.mxu0 0
      %394 = vmatpush1.bf16.msra.mxu0 0
      %395 = vmatprep.subr.bf16.mxu0 0
      %396 = vmatpush1.bf16.msra.mxu0 0
      %397 = vmatprep.subr.bf16.mxu0 0
      %398 = vmatpush1.bf16.msra.mxu0 0
      %399 = vmatprep.subr.bf16.mxu0 0
      %400 = vmatpush1.bf16.msra.mxu0 0
      %401 = vmatprep.subr.bf16.mxu0 0
      %402 = vmatpush1.bf16.msra.mxu0 0
      %403 = vmatprep.subr.bf16.mxu0 0
      %404 = vmatpush1.bf16.msra.mxu0 0
      %405 = vmatprep.subr.bf16.mxu0 0
      %406 = vmatpush1.bf16.msra.mxu0 0
      %407 = vmatprep.subr.bf16.mxu0 0
      %408 = vmatpush1.bf16.msra.mxu0 0
      %409 = vmatprep.subr.bf16.mxu0 0
      %410 = vmatpush1.bf16.msra.mxu0 0
      %411 = vmatprep.subr.bf16.mxu0 0
      %412 = vmatpush1.bf16.msra.mxu0 0
      %413 = vmatprep.subr.bf16.mxu0 0
      %414 = vmatpush1.bf16.msra.mxu0 0
      %415 = vmatprep.subr.bf16.mxu0 0
      %416 = vmatpush1.bf16.msra.mxu0 0
      %417 = vmatprep.mubr.bf16.mxu0 0
      %418 = vmatmul.mubr.bf16.gmra.mrb[0].mxu0 %v374
      %v419 = vpop.f32.mrb[0].mxu0
      %v420 = vadd.f32 0.0, %v419
      %v421 = vpop.f32.mrb[0].mxu0
      %v422 = vpop.f32.mrb[0].mxu0
      %v423 = vadd.f32 0.0, %v422
      %v424 = vpop.f32.mrb[0].mxu0
      %425 = vmatprep.mubr.bf16.mxu0 0
      %426 = vmatmul.mubr.bf16.gmra.mrb[0].mxu0 %v377
      %v427 = vpop.f32.mrb[0].mxu0
      %v428 = vadd.f32 0.0, %v427
      %v429 = vpop.f32.mrb[0].mxu0
      %v430 = vpop.f32.mrb[0].mxu0
      %v431 = vadd.f32 0.0, %v430
      %v432 = vpop.f32.mrb[0].mxu0
      %433 = vmatprep.mubr.bf16.mxu0 0
      %434 = vmatmul.mubr.bf16.gmra.mrb[0].mxu0 %v380
      %v435 = vpop.f32.mrb[0].mxu0
      %v436 = vadd.f32 0.0, %v435
      %v437 = vpop.f32.mrb[0].mxu0
      %v438 = vpop.f32.mrb[0].mxu0
      %v439 = vadd.f32 0.0, %v438
      %v440 = vpop.f32.mrb[0].mxu0
      %441 = vmatprep.mubr.bf16.mxu0 0
      %442 = vmatmul.mubr.bf16.gmra.mrb[0].mxu0 %v383
      %v443 = vpop.f32.mrb[0].mxu0
      %v444 = vadd.f32 0.0, %v443
      %v445 = vpop.f32.mrb[0].mxu0
      %v446 = vpop.f32.mrb[0].mxu0
      %v447 = vadd.f32 0.0, %v446
      %v448 = vpop.f32.mrb[0].mxu0
      %449 = vdwg.mxu0
      %v458 = vunpack.c.l.b16 %v208
      %v459 = vunpack.c.l.b16 %v209
      %v460 = vunpack.c.l.b16 %v210
      %v461 = vunpack.c.l.b16 %v211
      %v462 = vunpack.c.l.b16 %v212
      %v463 = vunpack.c.l.b16 %v213
      %v464 = vunpack.c.l.b16 %v214
      %v465 = vunpack.c.l.b16 %v215
      %v466 = vpack.c.b16 %v459, %v458
      %v467 = vpack.c.b16 %v461, %v460
      %v468 = vpack.c.b16 %v463, %v462
      %v469 = vpack.c.b16 %v465, %v464
      %v474 = vunpack.c.l.b16 %v216
      %v475 = vunpack.c.l.b16 %v217
      %v476 = vunpack.c.l.b16 %v218
      %v477 = vunpack.c.l.b16 %v219
      %v478 = vpack.c.b16 %v475, %v474
      %v479 = vpack.c.b16 %v477, %v476
      %v483 = vsel %vm372, %v466, 0
      %v486 = vsel %vm372, %v467, 0
      %v489 = vsel %vm372, %v468, 0
      %v492 = vsel %vm372, %v469, 0
      %494 = vmatprep.subr.bf16.mxu0 0
      %495 = vmatpush1.bf16.msra.mxu0 %v478
      %496 = vmatprep.subr.bf16.mxu0 0
      %497 = vmatpush1.bf16.msra.mxu0 %v479
      %498 = vmatprep.subr.bf16.mxu0 0
      %499 = vmatpush1.bf16.msra.mxu0 0
      %500 = vmatprep.subr.bf16.mxu0 0
      %501 = vmatpush1.bf16.msra.mxu0 0
      %502 = vmatprep.subr.bf16.mxu0 0
      %503 = vmatpush1.bf16.msra.mxu0 0
      %504 = vmatprep.subr.bf16.mxu0 0
      %505 = vmatpush1.bf16.msra.mxu0 0
      %506 = vmatprep.subr.bf16.mxu0 0
      %507 = vmatpush1.bf16.msra.mxu0 0
      %508 = vmatprep.subr.bf16.mxu0 0
      %509 = vmatpush1.bf16.msra.mxu0 0
      %510 = vmatprep.subr.bf16.mxu0 0
      %511 = vmatpush1.bf16.msra.mxu0 0
      %512 = vmatprep.subr.bf16.mxu0 0
      %513 = vmatpush1.bf16.msra.mxu0 0
      %514 = vmatprep.subr.bf16.mxu0 0
      %515 = vmatpush1.bf16.msra.mxu0 0
      %516 = vmatprep.subr.bf16.mxu0 0
      %517 = vmatpush1.bf16.msra.mxu0 0
      %518 = vmatprep.subr.bf16.mxu0 0
      %519 = vmatpush1.bf16.msra.mxu0 0
      %520 = vmatprep.subr.bf16.mxu0 0
      %521 = vmatpush1.bf16.msra.mxu0 0
      %522 = vmatprep.subr.bf16.mxu0 0
      %523 = vmatpush1.bf16.msra.mxu0 0
      %524 = vmatprep.subr.bf16.mxu0 0
      %525 = vmatpush1.bf16.msra.mxu0 0
      %526 = vmatprep.mubr.bf16.mxu0 0
      %527 = vmatmul.mubr.bf16.gmra.mrb[0].mxu0 %v483
      %v528 = vpop.f32.mrb[0].mxu0
      %v529 = vadd.f32 %v420, %v528
      %v530 = vpop.f32.mrb[0].mxu0
      %v531 = vpop.f32.mrb[0].mxu0
      %v532 = vadd.f32 %v423, %v531
      %v533 = vpop.f32.mrb[0].mxu0
      %534 = vmatprep.mubr.bf16.mxu0 0
      %535 = vmatmul.mubr.bf16.gmra.mrb[0].mxu0 %v486
      %v536 = vpop.f32.mrb[0].mxu0
      %v537 = vadd.f32 %v428, %v536
      %v538 = vpop.f32.mrb[0].mxu0
      %v539 = vpop.f32.mrb[0].mxu0
      %v540 = vadd.f32 %v431, %v539
      %v541 = vpop.f32.mrb[0].mxu0
      %542 = vmatprep.mubr.bf16.mxu0 0
      %543 = vmatmul.mubr.bf16.gmra.mrb[0].mxu0 %v489
      %v544 = vpop.f32.mrb[0].mxu0
      %v545 = vadd.f32 %v436, %v544
      %v546 = vpop.f32.mrb[0].mxu0
      %v547 = vpop.f32.mrb[0].mxu0
      %v548 = vadd.f32 %v439, %v547
      %v549 = vpop.f32.mrb[0].mxu0
      %550 = vmatprep.mubr.bf16.mxu0 0
      %551 = vmatmul.mubr.bf16.gmra.mrb[0].mxu0 %v492
      %v552 = vpop.f32.mrb[0].mxu0
      %v553 = vadd.f32 %v444, %v552
      %v554 = vpop.f32.mrb[0].mxu0
      %v555 = vpop.f32.mrb[0].mxu0
      %v556 = vadd.f32 %v447, %v555
      %v557 = vpop.f32.mrb[0].mxu0
      %558 = vdwg.mxu0
      %v559 = vld [vmem:[%s198] sm:$0xe]
      %v560 = vld [vmem:[%s198 + $0x8] sm:$0xe]
      %v561 = vld [vmem:[%s198 + $0x10] sm:$0xe]
      %v562 = vld [vmem:[%s198 + $0x18] sm:$0xe]
      %v563 = vld [vmem:[%s198 + $0x20] sm:$0xe]
      %v564 = vld [vmem:[%s198 + $0x28] sm:$0xe]
      %v565 = vld [vmem:[%s198 + $0x30] sm:$0xe]
      %v566 = vld [vmem:[%s198 + $0x38] sm:$0xe]
      %vm583 = vcmask 1042432
      %vm584 = vcmask 1046532
      %vm585 = vmor %vm583, %vm584
      %v586 = vrot.slane %v559, 5
      %v587 = vrot.slane %v586, 4
      %v588 = vrot.slane %v220, 5
      %v589 = vsel %vm585, %v587, %v588
      %v590 = vrot.slane %v560, 5
      %v591 = vrot.slane %v590, 4
      %v592 = vrot.slane %v221, 5
      %v593 = vsel %vm585, %v591, %v592
      %v594 = vrot.slane %v561, 5
      %v595 = vrot.slane %v594, 4
      %v596 = vrot.slane %v222, 5
      %v597 = vsel %vm585, %v595, %v596
      %v598 = vrot.slane %v562, 5
      %v599 = vrot.slane %v598, 4
      %v600 = vrot.slane %v223, 5
      %v601 = vsel %vm585, %v599, %v600
      %v602 = vrot.slane %v563, 5
      %v603 = vrot.slane %v602, 4
      %v604 = vrot.slane %v224, 5
      %v605 = vsel %vm585, %v603, %v604
      %v606 = vrot.slane %v564, 5
      %v607 = vrot.slane %v606, 4
      %v608 = vrot.slane %v225, 5
      %v609 = vsel %vm585, %v607, %v608
      %v610 = vrot.slane %v565, 5
      %v611 = vrot.slane %v610, 4
      %v612 = vrot.slane %v226, 5
      %v613 = vsel %vm585, %v611, %v612
      %v614 = vrot.slane %v566, 5
      %v615 = vrot.slane %v614, 4
      %v616 = vrot.slane %v227, 5
      %v617 = vsel %vm585, %v615, %v616
      %s618 = scalar_lea.vmem %s1, 32
      %v619 = vld [vmem:[%s618] sm:$0xf]
      %v620 = vld [vmem:[%s618 + $0x4] sm:$0xf]
      %v621 = vld [vmem:[%s618 + $0x8] sm:$0xf]
      %v622 = vld [vmem:[%s618 + $0xc] sm:$0xf]
      %v623 = vunpack.c.l.b16 %v589
      %v624 = vunpack.c.l.b16 %v593
      %v625 = vunpack.c.l.b16 %v597
      %v626 = vunpack.c.l.b16 %v601
      %v627 = vunpack.c.l.b16 %v605
      %v628 = vunpack.c.l.b16 %v609
      %v629 = vunpack.c.l.b16 %v613
      %v630 = vunpack.c.l.b16 %v617
      %v631 = vpack.c.b16 %v624, %v623
      %v632 = vpack.c.b16 %v626, %v625
      %v633 = vpack.c.b16 %v628, %v627
      %v634 = vpack.c.b16 %v630, %v629
      %v639 = vunpack.c.l.b16 %v619
      %v640 = vunpack.c.l.b16 %v620
      %v641 = vunpack.c.l.b16 %v621
      %v642 = vunpack.c.l.b16 %v622
      %v643 = vpack.c.b16 %v640, %v639
      %v644 = vpack.c.b16 %v642, %v641
      %v648 = vsel %vm372, %v631, 0
      %v651 = vsel %vm372, %v632, 0
      %v654 = vsel %vm372, %v633, 0
      %v657 = vsel %vm372, %v634, 0
      %659 = vmatprep.subr.bf16.mxu0 0
      %660 = vmatpush1.bf16.msra.mxu0 %v643
      %661 = vmatprep.subr.bf16.mxu0 0
      %662 = vmatpush1.bf16.msra.mxu0 %v644
      %663 = vmatprep.subr.bf16.mxu0 0
      %664 = vmatpush1.bf16.msra.mxu0 0
      %665 = vmatprep.subr.bf16.mxu0 0
      %666 = vmatpush1.bf16.msra.mxu0 0
      %667 = vmatprep.subr.bf16.mxu0 0
      %668 = vmatpush1.bf16.msra.mxu0 0
      %669 = vmatprep.subr.bf16.mxu0 0
      %670 = vmatpush1.bf16.msra.mxu0 0
      %671 = vmatprep.subr.bf16.mxu0 0
      %672 = vmatpush1.bf16.msra.mxu0 0
      %673 = vmatprep.subr.bf16.mxu0 0
      %674 = vmatpush1.bf16.msra.mxu0 0
      %675 = vmatprep.subr.bf16.mxu0 0
      %676 = vmatpush1.bf16.msra.mxu0 0
      %677 = vmatprep.subr.bf16.mxu0 0
      %678 = vmatpush1.bf16.msra.mxu0 0
      %679 = vmatprep.subr.bf16.mxu0 0
      %680 = vmatpush1.bf16.msra.mxu0 0
      %681 = vmatprep.subr.bf16.mxu0 0
      %682 = vmatpush1.bf16.msra.mxu0 0
      %683 = vmatprep.subr.bf16.mxu0 0
      %684 = vmatpush1.bf16.msra.mxu0 0
      %685 = vmatprep.subr.bf16.mxu0 0
      %686 = vmatpush1.bf16.msra.mxu0 0
      %687 = vmatprep.subr.bf16.mxu0 0
      %688 = vmatpush1.bf16.msra.mxu0 0
      %689 = vmatprep.subr.bf16.mxu0 0
      %690 = vmatpush1.bf16.msra.mxu0 0
      %691 = vmatprep.mubr.bf16.mxu0 0
      %692 = vmatmul.mubr.bf16.gmra.mrb[0].mxu0 %v648
      %v693 = vpop.f32.mrb[0].mxu0
      %v694 = vadd.f32 0.0, %v693
      %v695 = vpop.f32.mrb[0].mxu0
      %v696 = vpop.f32.mrb[0].mxu0
      %v697 = vadd.f32 0.0, %v696
      %v698 = vpop.f32.mrb[0].mxu0
      %699 = vmatprep.mubr.bf16.mxu0 0
      %700 = vmatmul.mubr.bf16.gmra.mrb[0].mxu0 %v651
      %v701 = vpop.f32.mrb[0].mxu0
      %v702 = vadd.f32 0.0, %v701
      %v703 = vpop.f32.mrb[0].mxu0
      %v704 = vpop.f32.mrb[0].mxu0
      %v705 = vadd.f32 0.0, %v704
      %v706 = vpop.f32.mrb[0].mxu0
      %707 = vmatprep.mubr.bf16.mxu0 0
      %708 = vmatmul.mubr.bf16.gmra.mrb[0].mxu0 %v654
      %v709 = vpop.f32.mrb[0].mxu0
      %v710 = vadd.f32 0.0, %v709
      %v711 = vpop.f32.mrb[0].mxu0
      %v712 = vpop.f32.mrb[0].mxu0
      %v713 = vadd.f32 0.0, %v712
      %v714 = vpop.f32.mrb[0].mxu0
      %715 = vmatprep.mubr.bf16.mxu0 0
      %716 = vmatmul.mubr.bf16.gmra.mrb[0].mxu0 %v657
      %v717 = vpop.f32.mrb[0].mxu0
      %v718 = vadd.f32 0.0, %v717
      %v719 = vpop.f32.mrb[0].mxu0
      %v720 = vpop.f32.mrb[0].mxu0
      %v721 = vadd.f32 0.0, %v720
      %v722 = vpop.f32.mrb[0].mxu0
      %723 = vdwg.mxu0
      %v724 = vadd.f32 %v529, %v694
      %v725 = vadd.f32 %v532, %v697
      %v726 = vadd.f32 %v537, %v702
      %v727 = vadd.f32 %v540, %v705
      %v728 = vadd.f32 %v545, %v710
      %v729 = vadd.f32 %v548, %v713
      %v730 = vadd.f32 %v553, %v718
      %v731 = vadd.f32 %v556, %v721
      %s732 = scalar_lea.vmem %s198, 8
      %v733 = vld [vmem:[%s732] sm:$0xf]
      %v734 = vld [vmem:[%s732 + $0x8] sm:$0xf]
      %v735 = vld [vmem:[%s732 + $0x10] sm:$0xf]
      %v736 = vld [vmem:[%s732 + $0x18] sm:$0xf]
      %v737 = vld [vmem:[%s732 + $0x20] sm:$0xf]
      %v738 = vld [vmem:[%s732 + $0x28] sm:$0xf]
      %v739 = vld [vmem:[%s732 + $0x30] sm:$0xf]
      %v740 = vld [vmem:[%s732 + $0x38] sm:$0xf]
      %s741 = scalar_lea.vmem %s1, 48
      %v742 = vld [vmem:[%s741] sm:$0xf]
      %v743 = vld [vmem:[%s741 + $0x4] sm:$0xf]
      %v744 = vld [vmem:[%s741 + $0x8] sm:$0xf]
      %v745 = vld [vmem:[%s741 + $0xc] sm:$0xf]
      %v754 = vunpack.c.l.b16 %v733
      %v755 = vunpack.c.l.b16 %v734
      %v756 = vunpack.c.l.b16 %v735
      %v757 = vunpack.c.l.b16 %v736
      %v758 = vunpack.c.l.b16 %v737
      %v759 = vunpack.c.l.b16 %v738
      %v760 = vunpack.c.l.b16 %v739
      %v761 = vunpack.c.l.b16 %v740
      %v762 = vpack.c.b16 %v755, %v754
      %v763 = vpack.c.b16 %v757, %v756
      %v764 = vpack.c.b16 %v759, %v758
      %v765 = vpack.c.b16 %v761, %v760
      %v770 = vunpack.c.l.b16 %v742
      %v771 = vunpack.c.l.b16 %v743
      %v772 = vunpack.c.l.b16 %v744
      %v773 = vunpack.c.l.b16 %v745
      %v774 = vpack.c.b16 %v771, %v770
      %v775 = vpack.c.b16 %v773, %v772
      %v779 = vsel %vm372, %v762, 0
      %v782 = vsel %vm372, %v763, 0
      %v785 = vsel %vm372, %v764, 0
      %v788 = vsel %vm372, %v765, 0
      %790 = vmatprep.subr.bf16.mxu0 0
      %791 = vmatpush1.bf16.msra.mxu0 %v774
      %792 = vmatprep.subr.bf16.mxu0 0
      %793 = vmatpush1.bf16.msra.mxu0 %v775
      %794 = vmatprep.subr.bf16.mxu0 0
      %795 = vmatpush1.bf16.msra.mxu0 0
      %796 = vmatprep.subr.bf16.mxu0 0
      %797 = vmatpush1.bf16.msra.mxu0 0
      %798 = vmatprep.subr.bf16.mxu0 0
      %799 = vmatpush1.bf16.msra.mxu0 0
      %800 = vmatprep.subr.bf16.mxu0 0
      %801 = vmatpush1.bf16.msra.mxu0 0
      %802 = vmatprep.subr.bf16.mxu0 0
      %803 = vmatpush1.bf16.msra.mxu0 0
      %804 = vmatprep.subr.bf16.mxu0 0
      %805 = vmatpush1.bf16.msra.mxu0 0
      %806 = vmatprep.subr.bf16.mxu0 0
      %807 = vmatpush1.bf16.msra.mxu0 0
      %808 = vmatprep.subr.bf16.mxu0 0
      %809 = vmatpush1.bf16.msra.mxu0 0
      %810 = vmatprep.subr.bf16.mxu0 0
      %811 = vmatpush1.bf16.msra.mxu0 0
      %812 = vmatprep.subr.bf16.mxu0 0
      %813 = vmatpush1.bf16.msra.mxu0 0
      %814 = vmatprep.subr.bf16.mxu0 0
      %815 = vmatpush1.bf16.msra.mxu0 0
      %816 = vmatprep.subr.bf16.mxu0 0
      %817 = vmatpush1.bf16.msra.mxu0 0
      %818 = vmatprep.subr.bf16.mxu0 0
      %819 = vmatpush1.bf16.msra.mxu0 0
      %820 = vmatprep.subr.bf16.mxu0 0
      %821 = vmatpush1.bf16.msra.mxu0 0
      %822 = vmatprep.mubr.bf16.mxu0 0
      %823 = vmatmul.mubr.bf16.gmra.mrb[0].mxu0 %v779
      %v824 = vpop.f32.mrb[0].mxu0
      %v825 = vadd.f32 0.0, %v824
      %v826 = vpop.f32.mrb[0].mxu0
      %v827 = vpop.f32.mrb[0].mxu0
      %v828 = vadd.f32 0.0, %v827
      %v829 = vpop.f32.mrb[0].mxu0
      %830 = vmatprep.mubr.bf16.mxu0 0
      %831 = vmatmul.mubr.bf16.gmra.mrb[0].mxu0 %v782
      %v832 = vpop.f32.mrb[0].mxu0
      %v833 = vadd.f32 0.0, %v832
      %v834 = vpop.f32.mrb[0].mxu0
      %v835 = vpop.f32.mrb[0].mxu0
      %v836 = vadd.f32 0.0, %v835
      %v837 = vpop.f32.mrb[0].mxu0
      %838 = vmatprep.mubr.bf16.mxu0 0
      %839 = vmatmul.mubr.bf16.gmra.mrb[0].mxu0 %v785
      %v840 = vpop.f32.mrb[0].mxu0
      %v841 = vadd.f32 0.0, %v840
      %v842 = vpop.f32.mrb[0].mxu0
      %v843 = vpop.f32.mrb[0].mxu0
      %v844 = vadd.f32 0.0, %v843
      %v845 = vpop.f32.mrb[0].mxu0
      %846 = vmatprep.mubr.bf16.mxu0 0
      %847 = vmatmul.mubr.bf16.gmra.mrb[0].mxu0 %v788
      %v848 = vpop.f32.mrb[0].mxu0
      %v849 = vadd.f32 0.0, %v848
      %v850 = vpop.f32.mrb[0].mxu0
      %v851 = vpop.f32.mrb[0].mxu0
      %v852 = vadd.f32 0.0, %v851
      %v853 = vpop.f32.mrb[0].mxu0
      %854 = vdwg.mxu0
      %v855 = vadd.f32 %v724, %v825
      %v856 = vadd.f32 %v725, %v828
      %v857 = vadd.f32 %v726, %v833
      %v858 = vadd.f32 %v727, %v836
      %v859 = vadd.f32 %v728, %v841
      %v860 = vadd.f32 %v729, %v844
      %v861 = vadd.f32 %v730, %v849
      %v862 = vadd.f32 %v731, %v852
      %v863 = vld [vmem:[%s732] sm:$0xf]
      %v864 = vld [vmem:[%s732 + $0x4] sm:$0x1]
      %v865 = vld [vmem:[%s732 + $0x8] sm:$0xf]
      %v866 = vld [vmem:[%s732 + $0xc] sm:$0x1]
      %v867 = vld [vmem:[%s732 + $0x10] sm:$0xf]
      %v868 = vld [vmem:[%s732 + $0x14] sm:$0x1]
      %v869 = vld [vmem:[%s732 + $0x18] sm:$0xf]
      %v870 = vld [vmem:[%s732 + $0x1c] sm:$0x1]
      %v871 = vld [vmem:[%s732 + $0x20] sm:$0xf]
      %v872 = vld [vmem:[%s732 + $0x24] sm:$0x1]
      %v873 = vld [vmem:[%s732 + $0x28] sm:$0xf]
      %v874 = vld [vmem:[%s732 + $0x2c] sm:$0x1]
      %v875 = vld [vmem:[%s732 + $0x30] sm:$0xf]
      %v876 = vld [vmem:[%s732 + $0x34] sm:$0x1]
      %v877 = vld [vmem:[%s732 + $0x38] sm:$0xf]
      %v878 = vld [vmem:[%s732 + $0x3c] sm:$0x1]
      %v880 = vshrl.u32 %v863, 16
      %v882 = vrot.slane %v880, 4
      %v883 = vshll.u32 %v863, 16
      %v885 = vrot.slane %v883, 5
      %v886 = vor.u32 %v882, %v885
      %v887 = vrot.slane %v886, 4
      %v889 = vshll.u32 %v864, 16
      %v891 = vrot.slane %v889, 5
      %v892 = vsel %vm230, %v887, %v891
      %v894 = vshrl.u32 %v865, 16
      %v896 = vrot.slane %v894, 4
      %v897 = vshll.u32 %v865, 16
      %v899 = vrot.slane %v897, 5
      %v900 = vor.u32 %v896, %v899
      %v901 = vrot.slane %v900, 4
      %v903 = vshll.u32 %v866, 16
      %v905 = vrot.slane %v903, 5
      %v906 = vsel %vm230, %v901, %v905
      %v908 = vshrl.u32 %v867, 16
      %v910 = vrot.slane %v908, 4
      %v911 = vshll.u32 %v867, 16
      %v913 = vrot.slane %v911, 5
      %v914 = vor.u32 %v910, %v913
      %v915 = vrot.slane %v914, 4
      %v917 = vshll.u32 %v868, 16
      %v919 = vrot.slane %v917, 5
      %v920 = vsel %vm230, %v915, %v919
      %v922 = vshrl.u32 %v869, 16
      %v924 = vrot.slane %v922, 4
      %v925 = vshll.u32 %v869, 16
      %v927 = vrot.slane %v925, 5
      %v928 = vor.u32 %v924, %v927
      %v929 = vrot.slane %v928, 4
      %v931 = vshll.u32 %v870, 16
      %v933 = vrot.slane %v931, 5
      %v934 = vsel %vm230, %v929, %v933
      %v936 = vshrl.u32 %v871, 16
      %v938 = vrot.slane %v936, 4
      %v939 = vshll.u32 %v871, 16
      %v941 = vrot.slane %v939, 5
      %v942 = vor.u32 %v938, %v941
      %v943 = vrot.slane %v942, 4
      %v945 = vshll.u32 %v872, 16
      %v947 = vrot.slane %v945, 5
      %v948 = vsel %vm230, %v943, %v947
      %v950 = vshrl.u32 %v873, 16
      %v952 = vrot.slane %v950, 4
      %v953 = vshll.u32 %v873, 16
      %v955 = vrot.slane %v953, 5
      %v956 = vor.u32 %v952, %v955
      %v957 = vrot.slane %v956, 4
      %v959 = vshll.u32 %v874, 16
      %v961 = vrot.slane %v959, 5
      %v962 = vsel %vm230, %v957, %v961
      %v964 = vshrl.u32 %v875, 16
      %v966 = vrot.slane %v964, 4
      %v967 = vshll.u32 %v875, 16
      %v969 = vrot.slane %v967, 5
      %v970 = vor.u32 %v966, %v969
      %v971 = vrot.slane %v970, 4
      %v973 = vshll.u32 %v876, 16
      %v975 = vrot.slane %v973, 5
      %v976 = vsel %vm230, %v971, %v975
      %v978 = vshrl.u32 %v877, 16
      %v980 = vrot.slane %v978, 4
      %v981 = vshll.u32 %v877, 16
      %v983 = vrot.slane %v981, 5
      %v984 = vor.u32 %v980, %v983
      %v985 = vrot.slane %v984, 4
      %v987 = vshll.u32 %v878, 16
      %v989 = vrot.slane %v987, 5
      %v990 = vsel %vm230, %v985, %v989
      %s991 = scalar_lea.vmem %s1, 64
      %v992 = vld [vmem:[%s991] sm:$0xf]
      %v993 = vld [vmem:[%s991 + $0x4] sm:$0xf]
      %v994 = vld [vmem:[%s991 + $0x8] sm:$0xf]
      %v995 = vld [vmem:[%s991 + $0xc] sm:$0xf]
      %v996 = vunpack.c.l.b16 %v892
      %v997 = vunpack.c.l.b16 %v906
      %v998 = vunpack.c.l.b16 %v920
      %v999 = vunpack.c.l.b16 %v934
      %v1000 = vunpack.c.l.b16 %v948
      %v1001 = vunpack.c.l.b16 %v962
      %v1002 = vunpack.c.l.b16 %v976
      %v1003 = vunpack.c.l.b16 %v990
      %v1004 = vpack.c.b16 %v997, %v996
      %v1005 = vpack.c.b16 %v999, %v998
      %v1006 = vpack.c.b16 %v1001, %v1000
      %v1007 = vpack.c.b16 %v1003, %v1002
      %v1012 = vunpack.c.l.b16 %v992
      %v1013 = vunpack.c.l.b16 %v993
      %v1014 = vunpack.c.l.b16 %v994
      %v1015 = vunpack.c.l.b16 %v995
      %v1016 = vpack.c.b16 %v1013, %v1012
      %v1017 = vpack.c.b16 %v1015, %v1014
      %v1021 = vsel %vm372, %v1004, 0
      %v1024 = vsel %vm372, %v1005, 0
      %v1027 = vsel %vm372, %v1006, 0
      %v1030 = vsel %vm372, %v1007, 0
      %1032 = vmatprep.subr.bf16.mxu0 0
      %1033 = vmatpush1.bf16.msra.mxu0 %v1016
      %1034 = vmatprep.subr.bf16.mxu0 0
      %1035 = vmatpush1.bf16.msra.mxu0 %v1017
      %1036 = vmatprep.subr.bf16.mxu0 0
      %1037 = vmatpush1.bf16.msra.mxu0 0
      %1038 = vmatprep.subr.bf16.mxu0 0
      %1039 = vmatpush1.bf16.msra.mxu0 0
      %1040 = vmatprep.subr.bf16.mxu0 0
      %1041 = vmatpush1.bf16.msra.mxu0 0
      %1042 = vmatprep.subr.bf16.mxu0 0
      %1043 = vmatpush1.bf16.msra.mxu0 0
      %1044 = vmatprep.subr.bf16.mxu0 0
      %1045 = vmatpush1.bf16.msra.mxu0 0
      %1046 = vmatprep.subr.bf16.mxu0 0
      %1047 = vmatpush1.bf16.msra.mxu0 0
      %1048 = vmatprep.subr.bf16.mxu0 0
      %1049 = vmatpush1.bf16.msra.mxu0 0
      %1050 = vmatprep.subr.bf16.mxu0 0
      %1051 = vmatpush1.bf16.msra.mxu0 0
      %1052 = vmatprep.subr.bf16.mxu0 0
      %1053 = vmatpush1.bf16.msra.mxu0 0
      %1054 = vmatprep.subr.bf16.mxu0 0
      %1055 = vmatpush1.bf16.msra.mxu0 0
      %1056 = vmatprep.subr.bf16.mxu0 0
      %1057 = vmatpush1.bf16.msra.mxu0 0
      %1058 = vmatprep.subr.bf16.mxu0 0
      %1059 = vmatpush1.bf16.msra.mxu0 0
      %1060 = vmatprep.subr.bf16.mxu0 0
      %1061 = vmatpush1.bf16.msra.mxu0 0
      %1062 = vmatprep.subr.bf16.mxu0 0
      %1063 = vmatpush1.bf16.msra.mxu0 0
      %1064 = vmatprep.mubr.bf16.mxu0 0
      %1065 = vmatmul.mubr.bf16.gmra.mrb[0].mxu0 %v1021
      %v1066 = vpop.f32.mrb[0].mxu0
      %v1067 = vadd.f32 0.0, %v1066
      %v1068 = vpop.f32.mrb[0].mxu0
      %v1069 = vpop.f32.mrb[0].mxu0
      %v1070 = vadd.f32 0.0, %v1069
      %v1071 = vpop.f32.mrb[0].mxu0
      %1072 = vmatprep.mubr.bf16.mxu0 0
      %1073 = vmatmul.mubr.bf16.gmra.mrb[0].mxu0 %v1024
      %v1074 = vpop.f32.mrb[0].mxu0
      %v1075 = vadd.f32 0.0, %v1074
      %v1076 = vpop.f32.mrb[0].mxu0
      %v1077 = vpop.f32.mrb[0].mxu0
      %v1078 = vadd.f32 0.0, %v1077
      %v1079 = vpop.f32.mrb[0].mxu0
      %1080 = vmatprep.mubr.bf16.mxu0 0
      %1081 = vmatmul.mubr.bf16.gmra.mrb[0].mxu0 %v1027
      %v1082 = vpop.f32.mrb[0].mxu0
      %v1083 = vadd.f32 0.0, %v1082
      %v1084 = vpop.f32.mrb[0].mxu0
      %v1085 = vpop.f32.mrb[0].mxu0
      %v1086 = vadd.f32 0.0, %v1085
      %v1087 = vpop.f32.mrb[0].mxu0
      %1088 = vmatprep.mubr.bf16.mxu0 0
      %1089 = vmatmul.mubr.bf16.gmra.mrb[0].mxu0 %v1030
      %v1090 = vpop.f32.mrb[0].mxu0
      %v1091 = vadd.f32 0.0, %v1090
      %v1092 = vpop.f32.mrb[0].mxu0
      %v1093 = vpop.f32.mrb[0].mxu0
      %v1094 = vadd.f32 0.0, %v1093
      %v1095 = vpop.f32.mrb[0].mxu0
      %1096 = vdwg.mxu0
      %v1097 = vadd.f32 %v855, %v1067
      %v1098 = vadd.f32 %v856, %v1070
      %v1099 = vadd.f32 %v857, %v1075
      %v1100 = vadd.f32 %v858, %v1078
      %v1101 = vadd.f32 %v859, %v1083
      %v1102 = vadd.f32 %v860, %v1086
      %v1103 = vadd.f32 %v861, %v1091
      %v1104 = vadd.f32 %v862, %v1094
      %v1105 = vld [vmem:[%s732] sm:$0xe]
      %v1106 = vld [vmem:[%s732 + $0x8] sm:$0xe]
      %v1107 = vld [vmem:[%s732 + $0x10] sm:$0xe]
      %v1108 = vld [vmem:[%s732 + $0x18] sm:$0xe]
      %v1109 = vld [vmem:[%s732 + $0x20] sm:$0xe]
      %v1110 = vld [vmem:[%s732 + $0x28] sm:$0xe]
      %v1111 = vld [vmem:[%s732 + $0x30] sm:$0xe]
      %v1112 = vld [vmem:[%s732 + $0x38] sm:$0xe]
      %v1129 = vrot.slane %v1105, 5
      %v1130 = vrot.slane %v1129, 4
      %v1131 = vrot.slane %v864, 5
      %v1132 = vsel %vm585, %v1130, %v1131
      %v1133 = vrot.slane %v1106, 5
      %v1134 = vrot.slane %v1133, 4
      %v1135 = vrot.slane %v866, 5
      %v1136 = vsel %vm585, %v1134, %v1135
      %v1137 = vrot.slane %v1107, 5
      %v1138 = vrot.slane %v1137, 4
      %v1139 = vrot.slane %v868, 5
      %v1140 = vsel %vm585, %v1138, %v1139
      %v1141 = vrot.slane %v1108, 5
      %v1142 = vrot.slane %v1141, 4
      %v1143 = vrot.slane %v870, 5
      %v1144 = vsel %vm585, %v1142, %v1143
      %v1145 = vrot.slane %v1109, 5
      %v1146 = vrot.slane %v1145, 4
      %v1147 = vrot.slane %v872, 5
      %v1148 = vsel %vm585, %v1146, %v1147
      %v1149 = vrot.slane %v1110, 5
      %v1150 = vrot.slane %v1149, 4
      %v1151 = vrot.slane %v874, 5
      %v1152 = vsel %vm585, %v1150, %v1151
      %v1153 = vrot.slane %v1111, 5
      %v1154 = vrot.slane %v1153, 4
      %v1155 = vrot.slane %v876, 5
      %v1156 = vsel %vm585, %v1154, %v1155
      %v1157 = vrot.slane %v1112, 5
      %v1158 = vrot.slane %v1157, 4
      %v1159 = vrot.slane %v878, 5
      %v1160 = vsel %vm585, %v1158, %v1159
      %s1161 = scalar_lea.vmem %s1, 80
      %v1162 = vld [vmem:[%s1161] sm:$0xf]
      %v1163 = vld [vmem:[%s1161 + $0x4] sm:$0xf]
      %v1164 = vld [vmem:[%s1161 + $0x8] sm:$0xf]
      %v1165 = vld [vmem:[%s1161 + $0xc] sm:$0xf]
      %v1166 = vunpack.c.l.b16 %v1132
      %v1167 = vunpack.c.l.b16 %v1136
      %v1168 = vunpack.c.l.b16 %v1140
      %v1169 = vunpack.c.l.b16 %v1144
      %v1170 = vunpack.c.l.b16 %v1148
      %v1171 = vunpack.c.l.b16 %v1152
      %v1172 = vunpack.c.l.b16 %v1156
      %v1173 = vunpack.c.l.b16 %v1160
      %v1174 = vpack.c.b16 %v1167, %v1166
      %v1175 = vpack.c.b16 %v1169, %v1168
      %v1176 = vpack.c.b16 %v1171, %v1170
      %v1177 = vpack.c.b16 %v1173, %v1172
      %v1182 = vunpack.c.l.b16 %v1162
      %v1183 = vunpack.c.l.b16 %v1163
      %v1184 = vunpack.c.l.b16 %v1164
      %v1185 = vunpack.c.l.b16 %v1165
      %v1186 = vpack.c.b16 %v1183, %v1182
      %v1187 = vpack.c.b16 %v1185, %v1184
      %v1191 = vsel %vm372, %v1174, 0
      %v1194 = vsel %vm372, %v1175, 0
      %v1197 = vsel %vm372, %v1176, 0
      %v1200 = vsel %vm372, %v1177, 0
      %1202 = vmatprep.subr.bf16.mxu0 0
      %1203 = vmatpush1.bf16.msra.mxu0 %v1186
      %1204 = vmatprep.subr.bf16.mxu0 0
      %1205 = vmatpush1.bf16.msra.mxu0 %v1187
      %1206 = vmatprep.subr.bf16.mxu0 0
      %1207 = vmatpush1.bf16.msra.mxu0 0
      %1208 = vmatprep.subr.bf16.mxu0 0
      %1209 = vmatpush1.bf16.msra.mxu0 0
      %1210 = vmatprep.subr.bf16.mxu0 0
      %1211 = vmatpush1.bf16.msra.mxu0 0
      %1212 = vmatprep.subr.bf16.mxu0 0
      %1213 = vmatpush1.bf16.msra.mxu0 0
      %1214 = vmatprep.subr.bf16.mxu0 0
      %1215 = vmatpush1.bf16.msra.mxu0 0
      %1216 = vmatprep.subr.bf16.mxu0 0
      %1217 = vmatpush1.bf16.msra.mxu0 0
      %1218 = vmatprep.subr.bf16.mxu0 0
      %1219 = vmatpush1.bf16.msra.mxu0 0
      %1220 = vmatprep.subr.bf16.mxu0 0
      %1221 = vmatpush1.bf16.msra.mxu0 0
      %1222 = vmatprep.subr.bf16.mxu0 0
      %1223 = vmatpush1.bf16.msra.mxu0 0
      %1224 = vmatprep.subr.bf16.mxu0 0
      %1225 = vmatpush1.bf16.msra.mxu0 0
      %1226 = vmatprep.subr.bf16.mxu0 0
      %1227 = vmatpush1.bf16.msra.mxu0 0
      %1228 = vmatprep.subr.bf16.mxu0 0
      %1229 = vmatpush1.bf16.msra.mxu0 0
      %1230 = vmatprep.subr.bf16.mxu0 0
      %1231 = vmatpush1.bf16.msra.mxu0 0
      %1232 = vmatprep.subr.bf16.mxu0 0
      %1233 = vmatpush1.bf16.msra.mxu0 0
      %1234 = vmatprep.mubr.bf16.mxu0 0
      %1235 = vmatmul.mubr.bf16.gmra.mrb[0].mxu0 %v1191
      %v1236 = vpop.f32.mrb[0].mxu0
      %v1237 = vadd.f32 0.0, %v1236
      %v1238 = vpop.f32.mrb[0].mxu0
      %v1239 = vpop.f32.mrb[0].mxu0
      %v1240 = vadd.f32 0.0, %v1239
      %v1241 = vpop.f32.mrb[0].mxu0
      %1242 = vmatprep.mubr.bf16.mxu0 0
      %1243 = vmatmul.mubr.bf16.gmra.mrb[0].mxu0 %v1194
      %v1244 = vpop.f32.mrb[0].mxu0
      %v1245 = vadd.f32 0.0, %v1244
      %v1246 = vpop.f32.mrb[0].mxu0
      %v1247 = vpop.f32.mrb[0].mxu0
      %v1248 = vadd.f32 0.0, %v1247
      %v1249 = vpop.f32.mrb[0].mxu0
      %1250 = vmatprep.mubr.bf16.mxu0 0
      %1251 = vmatmul.mubr.bf16.gmra.mrb[0].mxu0 %v1197
      %v1252 = vpop.f32.mrb[0].mxu0
      %v1253 = vadd.f32 0.0, %v1252
      %v1254 = vpop.f32.mrb[0].mxu0
      %v1255 = vpop.f32.mrb[0].mxu0
      %v1256 = vadd.f32 0.0, %v1255
      %v1257 = vpop.f32.mrb[0].mxu0
      %1258 = vmatprep.mubr.bf16.mxu0 0
      %1259 = vmatmul.mubr.bf16.gmra.mrb[0].mxu0 %v1200
      %v1260 = vpop.f32.mrb[0].mxu0
      %v1261 = vadd.f32 0.0, %v1260
      %v1262 = vpop.f32.mrb[0].mxu0
      %v1263 = vpop.f32.mrb[0].mxu0
      %v1264 = vadd.f32 0.0, %v1263
      %v1265 = vpop.f32.mrb[0].mxu0
      %1266 = vdwg.mxu0
      %v1267 = vadd.f32 %v1097, %v1237
      %v1268 = vadd.f32 %v1098, %v1240
      %v1269 = vadd.f32 %v1099, %v1245
      %v1270 = vadd.f32 %v1100, %v1248
      %v1271 = vadd.f32 %v1101, %v1253
      %v1272 = vadd.f32 %v1102, %v1256
      %v1273 = vadd.f32 %v1103, %v1261
      %v1274 = vadd.f32 %v1104, %v1264
      %s1275 = scalar_lea.vmem %s198, 16
      %v1276 = vld [vmem:[%s1275] sm:$0xf]
      %v1277 = vld [vmem:[%s1275 + $0x8] sm:$0xf]
      %v1278 = vld [vmem:[%s1275 + $0x10] sm:$0xf]
      %v1279 = vld [vmem:[%s1275 + $0x18] sm:$0xf]
      %v1280 = vld [vmem:[%s1275 + $0x20] sm:$0xf]
      %v1281 = vld [vmem:[%s1275 + $0x28] sm:$0xf]
      %v1282 = vld [vmem:[%s1275 + $0x30] sm:$0xf]
      %v1283 = vld [vmem:[%s1275 + $0x38] sm:$0xf]
      %s1284 = scalar_lea.vmem %s1, 96
      %v1285 = vld [vmem:[%s1284] sm:$0xf]
      %v1286 = vld [vmem:[%s1284 + $0x4] sm:$0xf]
      %v1287 = vld [vmem:[%s1284 + $0x8] sm:$0xf]
      %v1288 = vld [vmem:[%s1284 + $0xc] sm:$0xf]
      %v1297 = vunpack.c.l.b16 %v1276
      %v1298 = vunpack.c.l.b16 %v1277
      %v1299 = vunpack.c.l.b16 %v1278
      %v1300 = vunpack.c.l.b16 %v1279
      %v1301 = vunpack.c.l.b16 %v1280
      %v1302 = vunpack.c.l.b16 %v1281
      %v1303 = vunpack.c.l.b16 %v1282
      %v1304 = vunpack.c.l.b16 %v1283
      %v1305 = vpack.c.b16 %v1298, %v1297
      %v1306 = vpack.c.b16 %v1300, %v1299
      %v1307 = vpack.c.b16 %v1302, %v1301
      %v1308 = vpack.c.b16 %v1304, %v1303
      %v1313 = vunpack.c.l.b16 %v1285
      %v1314 = vunpack.c.l.b16 %v1286
      %v1315 = vunpack.c.l.b16 %v1287
      %v1316 = vunpack.c.l.b16 %v1288
      %v1317 = vpack.c.b16 %v1314, %v1313
      %v1318 = vpack.c.b16 %v1316, %v1315
      %v1322 = vsel %vm372, %v1305, 0
      %v1325 = vsel %vm372, %v1306, 0
      %v1328 = vsel %vm372, %v1307, 0
      %v1331 = vsel %vm372, %v1308, 0
      %1333 = vmatprep.subr.bf16.mxu0 0
      %1334 = vmatpush1.bf16.msra.mxu0 %v1317
      %1335 = vmatprep.subr.bf16.mxu0 0
      %1336 = vmatpush1.bf16.msra.mxu0 %v1318
      %1337 = vmatprep.subr.bf16.mxu0 0
      %1338 = vmatpush1.bf16.msra.mxu0 0
      %1339 = vmatprep.subr.bf16.mxu0 0
      %1340 = vmatpush1.bf16.msra.mxu0 0
      %1341 = vmatprep.subr.bf16.mxu0 0
      %1342 = vmatpush1.bf16.msra.mxu0 0
      %1343 = vmatprep.subr.bf16.mxu0 0
      %1344 = vmatpush1.bf16.msra.mxu0 0
      %1345 = vmatprep.subr.bf16.mxu0 0
      %1346 = vmatpush1.bf16.msra.mxu0 0
      %1347 = vmatprep.subr.bf16.mxu0 0
      %1348 = vmatpush1.bf16.msra.mxu0 0
      %1349 = vmatprep.subr.bf16.mxu0 0
      %1350 = vmatpush1.bf16.msra.mxu0 0
      %1351 = vmatprep.subr.bf16.mxu0 0
      %1352 = vmatpush1.bf16.msra.mxu0 0
      %1353 = vmatprep.subr.bf16.mxu0 0
      %1354 = vmatpush1.bf16.msra.mxu0 0
      %1355 = vmatprep.subr.bf16.mxu0 0
      %1356 = vmatpush1.bf16.msra.mxu0 0
      %1357 = vmatprep.subr.bf16.mxu0 0
      %1358 = vmatpush1.bf16.msra.mxu0 0
      %1359 = vmatprep.subr.bf16.mxu0 0
      %1360 = vmatpush1.bf16.msra.mxu0 0
      %1361 = vmatprep.subr.bf16.mxu0 0
      %1362 = vmatpush1.bf16.msra.mxu0 0
      %1363 = vmatprep.subr.bf16.mxu0 0
      %1364 = vmatpush1.bf16.msra.mxu0 0
      %1365 = vmatprep.mubr.bf16.mxu0 0
      %1366 = vmatmul.mubr.bf16.gmra.mrb[0].mxu0 %v1322
      %v1367 = vpop.f32.mrb[0].mxu0
      %v1368 = vadd.f32 0.0, %v1367
      %v1369 = vpop.f32.mrb[0].mxu0
      %v1370 = vpop.f32.mrb[0].mxu0
      %v1371 = vadd.f32 0.0, %v1370
      %v1372 = vpop.f32.mrb[0].mxu0
      %1373 = vmatprep.mubr.bf16.mxu0 0
      %1374 = vmatmul.mubr.bf16.gmra.mrb[0].mxu0 %v1325
      %v1375 = vpop.f32.mrb[0].mxu0
      %v1376 = vadd.f32 0.0, %v1375
      %v1377 = vpop.f32.mrb[0].mxu0
      %v1378 = vpop.f32.mrb[0].mxu0
      %v1379 = vadd.f32 0.0, %v1378
      %v1380 = vpop.f32.mrb[0].mxu0
      %1381 = vmatprep.mubr.bf16.mxu0 0
      %1382 = vmatmul.mubr.bf16.gmra.mrb[0].mxu0 %v1328
      %v1383 = vpop.f32.mrb[0].mxu0
      %v1384 = vadd.f32 0.0, %v1383
      %v1385 = vpop.f32.mrb[0].mxu0
      %v1386 = vpop.f32.mrb[0].mxu0
      %v1387 = vadd.f32 0.0, %v1386
      %v1388 = vpop.f32.mrb[0].mxu0
      %1389 = vmatprep.mubr.bf16.mxu0 0
      %1390 = vmatmul.mubr.bf16.gmra.mrb[0].mxu0 %v1331
      %v1391 = vpop.f32.mrb[0].mxu0
      %v1392 = vadd.f32 0.0, %v1391
      %v1393 = vpop.f32.mrb[0].mxu0
      %v1394 = vpop.f32.mrb[0].mxu0
      %v1395 = vadd.f32 0.0, %v1394
      %v1396 = vpop.f32.mrb[0].mxu0
      %1397 = vdwg.mxu0
      %v1398 = vadd.f32 %v1267, %v1368
      %v1399 = vadd.f32 %v1268, %v1371
      %v1400 = vadd.f32 %v1269, %v1376
      %v1401 = vadd.f32 %v1270, %v1379
      %v1402 = vadd.f32 %v1271, %v1384
      %v1403 = vadd.f32 %v1272, %v1387
      %v1404 = vadd.f32 %v1273, %v1392
      %v1405 = vadd.f32 %v1274, %v1395
      %v1406 = vld [vmem:[%s1275] sm:$0xf]
      %v1407 = vld [vmem:[%s1275 + $0x4] sm:$0x1]
      %v1408 = vld [vmem:[%s1275 + $0x8] sm:$0xf]
      %v1409 = vld [vmem:[%s1275 + $0xc] sm:$0x1]
      %v1410 = vld [vmem:[%s1275 + $0x10] sm:$0xf]
      %v1411 = vld [vmem:[%s1275 + $0x14] sm:$0x1]
      %v1412 = vld [vmem:[%s1275 + $0x18] sm:$0xf]
      %v1413 = vld [vmem:[%s1275 + $0x1c] sm:$0x1]
      %v1414 = vld [vmem:[%s1275 + $0x20] sm:$0xf]
      %v1415 = vld [vmem:[%s1275 + $0x24] sm:$0x1]
      %v1416 = vld [vmem:[%s1275 + $0x28] sm:$0xf]
      %v1417 = vld [vmem:[%s1275 + $0x2c] sm:$0x1]
      %v1418 = vld [vmem:[%s1275 + $0x30] sm:$0xf]
      %v1419 = vld [vmem:[%s1275 + $0x34] sm:$0x1]
      %v1420 = vld [vmem:[%s1275 + $0x38] sm:$0xf]
      %v1421 = vld [vmem:[%s1275 + $0x3c] sm:$0x1]
      %v1423 = vshrl.u32 %v1406, 16
      %v1425 = vrot.slane %v1423, 4
      %v1426 = vshll.u32 %v1406, 16
      %v1428 = vrot.slane %v1426, 5
      %v1429 = vor.u32 %v1425, %v1428
      %v1430 = vrot.slane %v1429, 4
      %v1432 = vshll.u32 %v1407, 16
      %v1434 = vrot.slane %v1432, 5
      %v1435 = vsel %vm230, %v1430, %v1434
      %v1437 = vshrl.u32 %v1408, 16
      %v1439 = vrot.slane %v1437, 4
      %v1440 = vshll.u32 %v1408, 16
      %v1442 = vrot.slane %v1440, 5
      %v1443 = vor.u32 %v1439, %v1442
      %v1444 = vrot.slane %v1443, 4
      %v1446 = vshll.u32 %v1409, 16
      %v1448 = vrot.slane %v1446, 5
      %v1449 = vsel %vm230, %v1444, %v1448
      %v1451 = vshrl.u32 %v1410, 16
      %v1453 = vrot.slane %v1451, 4
      %v1454 = vshll.u32 %v1410, 16
      %v1456 = vrot.slane %v1454, 5
      %v1457 = vor.u32 %v1453, %v1456
      %v1458 = vrot.slane %v1457, 4
      %v1460 = vshll.u32 %v1411, 16
      %v1462 = vrot.slane %v1460, 5
      %v1463 = vsel %vm230, %v1458, %v1462
      %v1465 = vshrl.u32 %v1412, 16
      %v1467 = vrot.slane %v1465, 4
      %v1468 = vshll.u32 %v1412, 16
      %v1470 = vrot.slane %v1468, 5
      %v1471 = vor.u32 %v1467, %v1470
      %v1472 = vrot.slane %v1471, 4
      %v1474 = vshll.u32 %v1413, 16
      %v1476 = vrot.slane %v1474, 5
      %v1477 = vsel %vm230, %v1472, %v1476
      %v1479 = vshrl.u32 %v1414, 16
      %v1481 = vrot.slane %v1479, 4
      %v1482 = vshll.u32 %v1414, 16
      %v1484 = vrot.slane %v1482, 5
      %v1485 = vor.u32 %v1481, %v1484
      %v1486 = vrot.slane %v1485, 4
      %v1488 = vshll.u32 %v1415, 16
      %v1490 = vrot.slane %v1488, 5
      %v1491 = vsel %vm230, %v1486, %v1490
      %v1493 = vshrl.u32 %v1416, 16
      %v1495 = vrot.slane %v1493, 4
      %v1496 = vshll.u32 %v1416, 16
      %v1498 = vrot.slane %v1496, 5
      %v1499 = vor.u32 %v1495, %v1498
      %v1500 = vrot.slane %v1499, 4
      %v1502 = vshll.u32 %v1417, 16
      %v1504 = vrot.slane %v1502, 5
      %v1505 = vsel %vm230, %v1500, %v1504
      %v1507 = vshrl.u32 %v1418, 16
      %v1509 = vrot.slane %v1507, 4
      %v1510 = vshll.u32 %v1418, 16
      %v1512 = vrot.slane %v1510, 5
      %v1513 = vor.u32 %v1509, %v1512
      %v1514 = vrot.slane %v1513, 4
      %v1516 = vshll.u32 %v1419, 16
      %v1518 = vrot.slane %v1516, 5
      %v1519 = vsel %vm230, %v1514, %v1518
      %v1521 = vshrl.u32 %v1420, 16
      %v1523 = vrot.slane %v1521, 4
      %v1524 = vshll.u32 %v1420, 16
      %v1526 = vrot.slane %v1524, 5
      %v1527 = vor.u32 %v1523, %v1526
      %v1528 = vrot.slane %v1527, 4
      %v1530 = vshll.u32 %v1421, 16
      %v1532 = vrot.slane %v1530, 5
      %v1533 = vsel %vm230, %v1528, %v1532
      %s1534 = scalar_lea.vmem %s1, 112
      %v1535 = vld [vmem:[%s1534] sm:$0xf]
      %v1536 = vld [vmem:[%s1534 + $0x4] sm:$0xf]
      %v1537 = vld [vmem:[%s1534 + $0x8] sm:$0xf]
      %v1538 = vld [vmem:[%s1534 + $0xc] sm:$0xf]
      %v1539 = vunpack.c.l.b16 %v1435
      %v1540 = vunpack.c.l.b16 %v1449
      %v1541 = vunpack.c.l.b16 %v1463
      %v1542 = vunpack.c.l.b16 %v1477
      %v1543 = vunpack.c.l.b16 %v1491
      %v1544 = vunpack.c.l.b16 %v1505
      %v1545 = vunpack.c.l.b16 %v1519
      %v1546 = vunpack.c.l.b16 %v1533
      %v1547 = vpack.c.b16 %v1540, %v1539
      %v1548 = vpack.c.b16 %v1542, %v1541
      %v1549 = vpack.c.b16 %v1544, %v1543
      %v1550 = vpack.c.b16 %v1546, %v1545
      %v1555 = vunpack.c.l.b16 %v1535
      %v1556 = vunpack.c.l.b16 %v1536
      %v1557 = vunpack.c.l.b16 %v1537
      %v1558 = vunpack.c.l.b16 %v1538
      %v1559 = vpack.c.b16 %v1556, %v1555
      %v1560 = vpack.c.b16 %v1558, %v1557
      %v1564 = vsel %vm372, %v1547, 0
      %v1567 = vsel %vm372, %v1548, 0
      %v1570 = vsel %vm372, %v1549, 0
      %v1573 = vsel %vm372, %v1550, 0
      %1575 = vmatprep.subr.bf16.mxu0 0
      %1576 = vmatpush1.bf16.msra.mxu0 %v1559
      %1577 = vmatprep.subr.bf16.mxu0 0
      %1578 = vmatpush1.bf16.msra.mxu0 %v1560
      %1579 = vmatprep.subr.bf16.mxu0 0
      %1580 = vmatpush1.bf16.msra.mxu0 0
      %1581 = vmatprep.subr.bf16.mxu0 0
      %1582 = vmatpush1.bf16.msra.mxu0 0
      %1583 = vmatprep.subr.bf16.mxu0 0
      %1584 = vmatpush1.bf16.msra.mxu0 0
      %1585 = vmatprep.subr.bf16.mxu0 0
      %1586 = vmatpush1.bf16.msra.mxu0 0
      %1587 = vmatprep.subr.bf16.mxu0 0
      %1588 = vmatpush1.bf16.msra.mxu0 0
      %1589 = vmatprep.subr.bf16.mxu0 0
      %1590 = vmatpush1.bf16.msra.mxu0 0
      %1591 = vmatprep.subr.bf16.mxu0 0
      %1592 = vmatpush1.bf16.msra.mxu0 0
      %1593 = vmatprep.subr.bf16.mxu0 0
      %1594 = vmatpush1.bf16.msra.mxu0 0
      %1595 = vmatprep.subr.bf16.mxu0 0
      %1596 = vmatpush1.bf16.msra.mxu0 0
      %1597 = vmatprep.subr.bf16.mxu0 0
      %1598 = vmatpush1.bf16.msra.mxu0 0
      %1599 = vmatprep.subr.bf16.mxu0 0
      %1600 = vmatpush1.bf16.msra.mxu0 0
      %1601 = vmatprep.subr.bf16.mxu0 0
      %1602 = vmatpush1.bf16.msra.mxu0 0
      %1603 = vmatprep.subr.bf16.mxu0 0
      %1604 = vmatpush1.bf16.msra.mxu0 0
      %1605 = vmatprep.subr.bf16.mxu0 0
      %1606 = vmatpush1.bf16.msra.mxu0 0
      %1607 = vmatprep.mubr.bf16.mxu0 0
      %1608 = vmatmul.mubr.bf16.gmra.mrb[0].mxu0 %v1564
      %v1609 = vpop.f32.mrb[0].mxu0
      %v1610 = vadd.f32 0.0, %v1609
      %v1611 = vpop.f32.mrb[0].mxu0
      %v1612 = vpop.f32.mrb[0].mxu0
      %v1613 = vadd.f32 0.0, %v1612
      %v1614 = vpop.f32.mrb[0].mxu0
      %1615 = vmatprep.mubr.bf16.mxu0 0
      %1616 = vmatmul.mubr.bf16.gmra.mrb[0].mxu0 %v1567
      %v1617 = vpop.f32.mrb[0].mxu0
      %v1618 = vadd.f32 0.0, %v1617
      %v1619 = vpop.f32.mrb[0].mxu0
      %v1620 = vpop.f32.mrb[0].mxu0
      %v1621 = vadd.f32 0.0, %v1620
      %v1622 = vpop.f32.mrb[0].mxu0
      %1623 = vmatprep.mubr.bf16.mxu0 0
      %1624 = vmatmul.mubr.bf16.gmra.mrb[0].mxu0 %v1570
      %v1625 = vpop.f32.mrb[0].mxu0
      %v1626 = vadd.f32 0.0, %v1625
      %v1627 = vpop.f32.mrb[0].mxu0
      %v1628 = vpop.f32.mrb[0].mxu0
      %v1629 = vadd.f32 0.0, %v1628
      %v1630 = vpop.f32.mrb[0].mxu0
      %1631 = vmatprep.mubr.bf16.mxu0 0
      %1632 = vmatmul.mubr.bf16.gmra.mrb[0].mxu0 %v1573
      %v1633 = vpop.f32.mrb[0].mxu0
      %v1634 = vadd.f32 0.0, %v1633
      %v1635 = vpop.f32.mrb[0].mxu0
      %v1636 = vpop.f32.mrb[0].mxu0
      %v1637 = vadd.f32 0.0, %v1636
      %v1638 = vpop.f32.mrb[0].mxu0
      %1639 = vdwg.mxu0
      %v1640 = vadd.f32 %v1398, %v1610
      %v1641 = vadd.f32 %v1399, %v1613
      %v1642 = vadd.f32 %v1400, %v1618
      %v1643 = vadd.f32 %v1401, %v1621
      %v1644 = vadd.f32 %v1402, %v1626
      %v1645 = vadd.f32 %v1403, %v1629
      %v1646 = vadd.f32 %v1404, %v1634
      %v1647 = vadd.f32 %v1405, %v1637
      %v1648 = vld [vmem:[%s1275] sm:$0xe]
      %v1649 = vld [vmem:[%s1275 + $0x8] sm:$0xe]
      %v1650 = vld [vmem:[%s1275 + $0x10] sm:$0xe]
      %v1651 = vld [vmem:[%s1275 + $0x18] sm:$0xe]
      %v1652 = vld [vmem:[%s1275 + $0x20] sm:$0xe]
      %v1653 = vld [vmem:[%s1275 + $0x28] sm:$0xe]
      %v1654 = vld [vmem:[%s1275 + $0x30] sm:$0xe]
      %v1655 = vld [vmem:[%s1275 + $0x38] sm:$0xe]
      %v1672 = vrot.slane %v1648, 5
      %v1673 = vrot.slane %v1672, 4
      %v1674 = vrot.slane %v1407, 5
      %v1675 = vsel %vm585, %v1673, %v1674
      %v1676 = vrot.slane %v1649, 5
      %v1677 = vrot.slane %v1676, 4
      %v1678 = vrot.slane %v1409, 5
      %v1679 = vsel %vm585, %v1677, %v1678
      %v1680 = vrot.slane %v1650, 5
      %v1681 = vrot.slane %v1680, 4
      %v1682 = vrot.slane %v1411, 5
      %v1683 = vsel %vm585, %v1681, %v1682
      %v1684 = vrot.slane %v1651, 5
      %v1685 = vrot.slane %v1684, 4
      %v1686 = vrot.slane %v1413, 5
      %v1687 = vsel %vm585, %v1685, %v1686
      %v1688 = vrot.slane %v1652, 5
      %v1689 = vrot.slane %v1688, 4
      %v1690 = vrot.slane %v1415, 5
      %v1691 = vsel %vm585, %v1689, %v1690
      %v1692 = vrot.slane %v1653, 5
      %v1693 = vrot.slane %v1692, 4
      %v1694 = vrot.slane %v1417, 5
      %v1695 = vsel %vm585, %v1693, %v1694
      %v1696 = vrot.slane %v1654, 5
      %v1697 = vrot.slane %v1696, 4
      %v1698 = vrot.slane %v1419, 5
      %v1699 = vsel %vm585, %v1697, %v1698
      %v1700 = vrot.slane %v1655, 5
      %v1701 = vrot.slane %v1700, 4
      %v1702 = vrot.slane %v1421, 5
      %v1703 = vsel %vm585, %v1701, %v1702
      %s1704 = scalar_lea.vmem %s1, 128
      %v1705 = vld [vmem:[%s1704] sm:$0xf]
      %v1706 = vld [vmem:[%s1704 + $0x4] sm:$0xf]
      %v1707 = vld [vmem:[%s1704 + $0x8] sm:$0xf]
      %v1708 = vld [vmem:[%s1704 + $0xc] sm:$0xf]
      %v1709 = vunpack.c.l.b16 %v1675
      %v1710 = vunpack.c.l.b16 %v1679
      %v1711 = vunpack.c.l.b16 %v1683
      %v1712 = vunpack.c.l.b16 %v1687
      %v1713 = vunpack.c.l.b16 %v1691
      %v1714 = vunpack.c.l.b16 %v1695
      %v1715 = vunpack.c.l.b16 %v1699
      %v1716 = vunpack.c.l.b16 %v1703
      %v1717 = vpack.c.b16 %v1710, %v1709
      %v1718 = vpack.c.b16 %v1712, %v1711
      %v1719 = vpack.c.b16 %v1714, %v1713
      %v1720 = vpack.c.b16 %v1716, %v1715
      %v1725 = vunpack.c.l.b16 %v1705
      %v1726 = vunpack.c.l.b16 %v1706
      %v1727 = vunpack.c.l.b16 %v1707
      %v1728 = vunpack.c.l.b16 %v1708
      %v1729 = vpack.c.b16 %v1726, %v1725
      %v1730 = vpack.c.b16 %v1728, %v1727
      %v1734 = vsel %vm372, %v1717, 0
      %v1737 = vsel %vm372, %v1718, 0
      %v1740 = vsel %vm372, %v1719, 0
      %v1743 = vsel %vm372, %v1720, 0
      %1745 = vmatprep.subr.bf16.mxu0 0
      %1746 = vmatpush1.bf16.msra.mxu0 %v1729
      %1747 = vmatprep.subr.bf16.mxu0 0
      %1748 = vmatpush1.bf16.msra.mxu0 %v1730
      %1749 = vmatprep.subr.bf16.mxu0 0
      %1750 = vmatpush1.bf16.msra.mxu0 0
      %1751 = vmatprep.subr.bf16.mxu0 0
      %1752 = vmatpush1.bf16.msra.mxu0 0
      %1753 = vmatprep.subr.bf16.mxu0 0
      %1754 = vmatpush1.bf16.msra.mxu0 0
      %1755 = vmatprep.subr.bf16.mxu0 0
      %1756 = vmatpush1.bf16.msra.mxu0 0
      %1757 = vmatprep.subr.bf16.mxu0 0
      %1758 = vmatpush1.bf16.msra.mxu0 0
      %1759 = vmatprep.subr.bf16.mxu0 0
      %1760 = vmatpush1.bf16.msra.mxu0 0
      %1761 = vmatprep.subr.bf16.mxu0 0
      %1762 = vmatpush1.bf16.msra.mxu0 0
      %1763 = vmatprep.subr.bf16.mxu0 0
      %1764 = vmatpush1.bf16.msra.mxu0 0
      %1765 = vmatprep.subr.bf16.mxu0 0
      %1766 = vmatpush1.bf16.msra.mxu0 0
      %1767 = vmatprep.subr.bf16.mxu0 0
      %1768 = vmatpush1.bf16.msra.mxu0 0
      %1769 = vmatprep.subr.bf16.mxu0 0
      %1770 = vmatpush1.bf16.msra.mxu0 0
      %1771 = vmatprep.subr.bf16.mxu0 0
      %1772 = vmatpush1.bf16.msra.mxu0 0
      %1773 = vmatprep.subr.bf16.mxu0 0
      %1774 = vmatpush1.bf16.msra.mxu0 0
      %1775 = vmatprep.subr.bf16.mxu0 0
      %1776 = vmatpush1.bf16.msra.mxu0 0
      %1777 = vmatprep.mubr.bf16.mxu0 0
      %1778 = vmatmul.mubr.bf16.gmra.mrb[0].mxu0 %v1734
      %v1779 = vpop.f32.mrb[0].mxu0
      %v1780 = vadd.f32 0.0, %v1779
      %v1781 = vpop.f32.mrb[0].mxu0
      %v1782 = vpop.f32.mrb[0].mxu0
      %v1783 = vadd.f32 0.0, %v1782
      %v1784 = vpop.f32.mrb[0].mxu0
      %1785 = vmatprep.mubr.bf16.mxu0 0
      %1786 = vmatmul.mubr.bf16.gmra.mrb[0].mxu0 %v1737
      %v1787 = vpop.f32.mrb[0].mxu0
      %v1788 = vadd.f32 0.0, %v1787
      %v1789 = vpop.f32.mrb[0].mxu0
      %v1790 = vpop.f32.mrb[0].mxu0
      %v1791 = vadd.f32 0.0, %v1790
      %v1792 = vpop.f32.mrb[0].mxu0
      %1793 = vmatprep.mubr.bf16.mxu0 0
      %1794 = vmatmul.mubr.bf16.gmra.mrb[0].mxu0 %v1740
      %v1795 = vpop.f32.mrb[0].mxu0
      %v1796 = vadd.f32 0.0, %v1795
      %v1797 = vpop.f32.mrb[0].mxu0
      %v1798 = vpop.f32.mrb[0].mxu0
      %v1799 = vadd.f32 0.0, %v1798
      %v1800 = vpop.f32.mrb[0].mxu0
      %1801 = vmatprep.mubr.bf16.mxu0 0
      %1802 = vmatmul.mubr.bf16.gmra.mrb[0].mxu0 %v1743
      %v1803 = vpop.f32.mrb[0].mxu0
      %v1804 = vadd.f32 0.0, %v1803
      %v1805 = vpop.f32.mrb[0].mxu0
      %v1806 = vpop.f32.mrb[0].mxu0
      %v1807 = vadd.f32 0.0, %v1806
      %v1808 = vpop.f32.mrb[0].mxu0
      %1809 = vdwg.mxu0
      %v1810 = vadd.f32 %v1640, %v1780
      %v1811 = vadd.f32 %v1641, %v1783
      %v1812 = vadd.f32 %v1642, %v1788
      %v1813 = vadd.f32 %v1643, %v1791
      %v1814 = vadd.f32 %v1644, %v1796
      %v1815 = vadd.f32 %v1645, %v1799
      %v1816 = vadd.f32 %v1646, %v1804
      %v1817 = vadd.f32 %v1647, %v1807
      %v1818 = vld [vmem:[%s2] sm:$0x1]
      %v1820 = vlaneseq
      %v1821 = vshrl.u32 %v1820, 7
      %v1822 = vsub.s32 0, %v1821
      %v1823 = vrot.slane %v1818, %v1822
      %v1825 = vadd.f32 %v1810, %v1823
      %v1826 = vadd.f32 %v1811, %v1823
      %v1827 = vadd.f32 %v1812, %v1823
      %v1828 = vadd.f32 %v1813, %v1823
      %v1829 = vadd.f32 %v1814, %v1823
      %v1830 = vadd.f32 %v1815, %v1823
      %v1831 = vadd.f32 %v1816, %v1823
      %v1832 = vadd.f32 %v1817, %v1823
      %v1833 = vpack.c.bf16 %v1825, %v1825
      %v1834 = vpack.c.bf16 %v1826, %v1826
      %v1835 = vpack.c.bf16 %v1827, %v1827
      %v1836 = vpack.c.bf16 %v1828, %v1828
      %v1837 = vpack.c.bf16 %v1829, %v1829
      %v1838 = vpack.c.bf16 %v1830, %v1830
      %v1839 = vpack.c.bf16 %v1831, %v1831
      %v1840 = vpack.c.bf16 %v1832, %v1832
      %vm1841 = vcmask 257024
      %1842 = vst.msk [vmem:[%s203] sm:$0xf] %vm1841, %v1833
      %1843 = vst.msk [vmem:[%s203 + $0x4] sm:$0xf] %vm1841, %v1834
      %1844 = vst.msk [vmem:[%s203 + $0x8] sm:$0xf] %vm1841, %v1835
      %1845 = vst.msk [vmem:[%s203 + $0xc] sm:$0xf] %vm1841, %v1836
      %1846 = vst.msk [vmem:[%s203 + $0x10] sm:$0xf] %vm1841, %v1837
      %1847 = vst.msk [vmem:[%s203 + $0x14] sm:$0xf] %vm1841, %v1838
      %1848 = vst.msk [vmem:[%s203 + $0x18] sm:$0xf] %vm1841, %v1839
      %1849 = vst.msk [vmem:[%s203 + $0x1c] sm:$0xf] %vm1841, %v1840
      %v1850 = vsel %vm372, %v1825, 0.0
      %v1851 = vsel %vm372, %v1826, 0.0
      %v1852 = vadd.f32 %v1850, %v1851
      %v1853 = vsel %vm372, %v1827, 0.0
      %v1854 = vadd.f32 %v1852, %v1853
      %v1855 = vsel %vm372, %v1828, 0.0
      %v1856 = vadd.f32 %v1854, %v1855
      %v1857 = vsel %vm372, %v1829, 0.0
      %v1858 = vadd.f32 %v1856, %v1857
      %v1859 = vsel %vm372, %v1830, 0.0
      %v1860 = vadd.f32 %v1858, %v1859
      %v1861 = vsel %vm372, %v1831, 0.0
      %v1862 = vadd.f32 %v1860, %v1861
      %v1863 = vsel %vm372, %v1832, 0.0
      %v1864 = vadd.f32 %v1862, %v1863
      %v1865 = vrot.slane %v1864, 4
      %v1866 = vadd.f32 %v1864, %v1865
      %v1867 = vrot.slane %v1866, 2
      %v1868 = vadd.f32 %v1866, %v1867
      %v1869 = vrot.slane %v1868, 1
      %v1870 = vadd.f32 %v1868, %v1869
      %vm1871 = vcmask 253952
      %1872 = vst.msk [vmem:[%s206] sm:$0x1] %vm1871, %v1870
      %p1873 = scmp.lt.s32.totalorder %s16, 1
      %s1874 = scalar_select %p1873, %s16, 1
      %s1875 = smul.addr %s1874, 8
      %s1876 = smul.addr %s1875, 4
      %s1877 = scalar_lea.vmem %s3, %s1876
      %p1878 = scmp.lt.s32.totalorder %s16, 1
      %s1879 = scalar_select %p1878, %s16, 1
      %s1880 = scalar_lea.vmem %s4, %s1879
      // Predicated region
      $region33: #{basic_block_pallas.4} parent=31 // pred_check
        %p1881 = pneg %p102
      $region34: #{basic_block_pallas.4} parent=31 // pred_check_branch
        %1883 = sbr.rel (%p1881) target = $region36
      $region35: #{basic_block_pallas.4} parent=31 // pred_region
        _
      $region36: #{basic_block_pallas.4} parent=31 // pred_fallthru
        _
      // Predicated region
      $region37: #{basic_block_pallas.4} parent=31 // pred_check
        %p1884 = pneg %p128
      $region38: #{basic_block_pallas.4} parent=31 // pred_check_branch
        %1886 = sbr.rel (%p1884) target = $region40
      $region39: #{basic_block_pallas.4} parent=31 // pred_region
        _
      $region40: #{basic_block_pallas.4} parent=31 // pred_fallthru
        _
    $region32: #{basic_block_pallas.4} parent=5 // pred_fallthru
      _
    %p1887 = scmp.le.s32.totalorder 2, %s11
    // Predicated region
    $region41: #{basic_block_pallas.4} parent=5 // pred_check
      %p1888 = pneg %p1887
    $region42: #{basic_block_pallas.4} parent=5 // pred_check_branch
      %1890 = sbr.rel (%p1888) target = $region44
    $region43: #{basic_block_pallas.4} parent=5 // pred_region
      %s1891 = ssub.s32 %s11, 2
      // Predicated region
      $region45: #{basic_block_pallas.4} parent=43 // pred_check
        %p1892 = pneg %p108
      $region46: #{basic_block_pallas.4} parent=43 // pred_check_branch
        %1894 = sbr.rel (%p1892) target = $region48
      $region47: #{basic_block_pallas.4} parent=43 // pred_region
        %p1895 = scmp.lt.s32.totalorder %s17, 1
        %s1896 = scalar_select %p1895, %s17, 1
        %s1897 = smul.addr %s1896, 8
        %s1898 = smul.addr %s1897, 4
        %s1899 = scalar_lea.vmem %s3, %s1898
      $region48: #{basic_block_pallas.4} parent=43 // pred_fallthru
        _
      // Predicated region
      $region49: #{basic_block_pallas.4} parent=43 // pred_check
        %p1900 = pneg %p134
      $region50: #{basic_block_pallas.4} parent=43 // pred_check_branch
        %1902 = sbr.rel (%p1900) target = $region52
      $region51: #{basic_block_pallas.4} parent=43 // pred_region
        %p1903 = scmp.lt.s32.totalorder %s17, 1
        %s1904 = scalar_select %p1903, %s17, 1
        %s1905 = scalar_lea.vmem %s4, %s1904
      $region52: #{basic_block_pallas.4} parent=43 // pred_fallthru
        _
    $region44: #{basic_block_pallas.4} parent=5 // pred_fallthru
      _
  $region6: #{basic_block_pallas.4} parent=0 // loop_footer
    %s15 = sadd.s32 1, %s11
  $region7: #{basic_block_pallas.4} parent=0 // loop_footer_branch
    %10 = sbr.rel target = $region3
  $region8: #{basic_block_pallas.4} parent=0 // loop_exit
    _

// kernel: basic_block_pallas.3
$region0: #{basic_block_pallas.3}
  #allocation0 [shape = 'u32[]', space=smem, size = 0x4, offset = 0x4, fixed_abs, tag = 'smem constant byte address 0x4 - core index']
  #allocation1 [shape = 'u32[144,128]{1,0:T(1,128)}', space=vmem, size = 0x12000, scoped, tag = 'internal scratch']
  %s0 = inlined_call_operand.vmem [shape: bf16[8,9,9,16], index: 0, kind: input, shape index: {}]
  %s1 = inlined_call_operand.vmem [shape: bf16[9,16,32], index: 1, kind: input, shape index: {}]
  %s2 = inlined_call_operand.vmem [shape: f32[1,32], index: 2, kind: input, shape index: {}]
  %s3 = inlined_call_operand.vmem [shape: bf16[2,10,10,32], index: 3, kind: output, shape index: {}]
  %s4 = sld [smem:[#allocation0]]
  $region45: #{basic_block_pallas.3} parent=0
    _
  %s6 = ssub.s32 1, %s4
  %s7 = scalar_select 0, %s6, %s4
  loop: start=0, step=1, limit=4
  $region2: #{basic_block_pallas.3} parent=0 // loop_pre_header
    _
  $region3: #{basic_block_pallas.3} parent=0 // loop_header
    %s9 = sphi 0, %s13
    %p10 = scmp.ge.s32.totalorder %s9, 4
    %s19 = sphi 0, %s21
    %s22 = sphi 0, %s19
    %s23 = sphi 0, %s22
    %s39 = sphi 0, %s23
    %s43 = sphi 0, %s43
    %s45 = sphi 0, %s43
    %s46 = sphi 0, %s45
    %s60 = sphi 0, %s46
    %s64 = sphi 0, %s64
    %s66 = sphi 0, %s64
    %s67 = sphi 0, %s66
    %s81 = sphi 0, %s67
    %s87 = sphi 0, %s89
    %s90 = sphi 0, %s87
    %s91 = sphi 0, %s90
    %s107 = sphi 0, %s91
  $region4: #{basic_block_pallas.3} parent=0 // loop_header_branch
    %12 = sbr.rel (%p10) target = $region8
  $region5: #{basic_block_pallas.3} parent=0 // loop_body
    %s14 = ssub.s32 %s9, 1
    %s15 = ssub.s32 %s9, 2
    %s16 = sadd.s32 %s9, 1
    %s17 = ssub.s32 %s9, %s16
    %p18 = scmp.eq.s32.totalorder %s17, 0
    %s20 = sadd.s32 %s19, 1
    %s21 = scalar_select %p18, %s19, %s20
    %p24 = pneg %p18
    %p25 = scmp.eq.s32.totalorder %s9, 1
    %p26 = por %p24, %p25
    %p27 = scmp.ne.s32.totalorder %s19, %s22
    %p28 = scmp.eq.s32.totalorder %s9, 0
    %p29 = por %p27, %p28
    %p30 = scmp.ne.s32.totalorder %s19, %s22
    %p31 = scmp.eq.s32.totalorder %s14, 1
    %p32 = por %p30, %p31
    %p33 = scmp.ne.s32.totalorder %s22, %s23
    %p34 = scmp.eq.s32.totalorder %s14, 0
    %p35 = por %p33, %p34
    %p36 = scmp.ne.s32.totalorder %s22, %s23
    %p37 = scmp.eq.s32.totalorder %s15, 1
    %p38 = por %p36, %p37
    %p40 = scmp.ne.s32.totalorder %s23, %s39
    %p41 = scmp.eq.s32.totalorder %s15, 0
    %p42 = por %p40, %p41
    %s44 = sadd.s32 %s43, 1
    %p47 = scmp.eq.s32.totalorder %s9, 1
    %p48 = scmp.ne.s32.totalorder %s43, %s45
    %p49 = scmp.eq.s32.totalorder %s9, 0
    %p50 = por %p48, %p49
    %p51 = scmp.ne.s32.totalorder %s43, %s45
    %p52 = scmp.eq.s32.totalorder %s14, 1
    %p53 = por %p51, %p52
    %p54 = scmp.ne.s32.totalorder %s45, %s46
    %p55 = scmp.eq.s32.totalorder %s14, 0
    %p56 = por %p54, %p55
    %p57 = scmp.ne.s32.totalorder %s45, %s46
    %p58 = scmp.eq.s32.totalorder %s15, 1
    %p59 = por %p57, %p58
    %p61 = scmp.ne.s32.totalorder %s46, %s60
    %p62 = scmp.eq.s32.totalorder %s15, 0
    %p63 = por %p61, %p62
    %s65 = sadd.s32 %s64, 1
    %p68 = scmp.eq.s32.totalorder %s9, 1
    %p69 = scmp.ne.s32.totalorder %s64, %s66
    %p70 = scmp.eq.s32.totalorder %s9, 0
    %p71 = por %p69, %p70
    %p72 = scmp.ne.s32.totalorder %s64, %s66
    %p73 = scmp.eq.s32.totalorder %s14, 1
    %p74 = por %p72, %p73
    %p75 = scmp.ne.s32.totalorder %s66, %s67
    %p76 = scmp.eq.s32.totalorder %s14, 0
    %p77 = por %p75, %p76
    %p78 = scmp.ne.s32.totalorder %s66, %s67
    %p79 = scmp.eq.s32.totalorder %s15, 1
    %p80 = por %p78, %p79
    %p82 = scmp.ne.s32.totalorder %s67, %s81
    %p83 = scmp.eq.s32.totalorder %s15, 0
    %p84 = por %p82, %p83
    %s85 = ssub.s32 %s9, %s16
    %p86 = scmp.eq.s32.totalorder %s85, 0
    %s88 = sadd.s32 %s87, 1
    %s89 = scalar_select %p86, %s87, %s88
    %p92 = pneg %p86
    %p93 = scmp.eq.s32.totalorder %s9, 1
    %p94 = por %p92, %p93
    %p95 = scmp.ne.s32.totalorder %s87, %s90
    %p96 = scmp.eq.s32.totalorder %s9, 0
    %p97 = por %p95, %p96
    %p98 = scmp.ne.s32.totalorder %s87, %s90
    %p99 = scmp.eq.s32.totalorder %s14, 1
    %p100 = por %p98, %p99
    %p101 = scmp.ne.s32.totalorder %s90, %s91
    %p102 = scmp.eq.s32.totalorder %s14, 0
    %p103 = por %p101, %p102
    %p104 = scmp.ne.s32.totalorder %s90, %s91
    %p105 = scmp.eq.s32.totalorder %s15, 1
    %p106 = por %p104, %p105
    %p108 = scmp.ne.s32.totalorder %s91, %s107
    %p109 = scmp.eq.s32.totalorder %s15, 0
    %p110 = por %p108, %p109
    %p111 = scmp.le.s32.totalorder 1, %s9
    %p112 = scmp.lt.s32.totalorder %s9, 3
    %p113 = pnand %p111, %p112
    %p114 = pneg %p113
    // Predicated region
    $region9: #{basic_block_pallas.3} parent=5 // pred_check
      _
    $region10: #{basic_block_pallas.3} parent=5 // pred_check_branch
      %116 = sbr.rel (%p113) target = $region12
    $region11: #{basic_block_pallas.3} parent=5 // pred_region
      %s117 = ssub.s32 %s9, 1
      // Predicated region
      $region13: #{basic_block_pallas.3} parent=11 // pred_check
        %p118 = pneg %p56
      $region14: #{basic_block_pallas.3} parent=11 // pred_check_branch
        %120 = sbr.rel (%p118) target = $region16
      $region15: #{basic_block_pallas.3} parent=11 // pred_region
        _
      $region16: #{basic_block_pallas.3} parent=11 // pred_fallthru
        _
      // Predicated region
      $region17: #{basic_block_pallas.3} parent=11 // pred_check
        %p121 = pneg %p77
      $region18: #{basic_block_pallas.3} parent=11 // pred_check_branch
        %123 = sbr.rel (%p121) target = $region20
      $region19: #{basic_block_pallas.3} parent=11 // pred_region
        _
      $region20: #{basic_block_pallas.3} parent=11 // pred_fallthru
        _
    $region12: #{basic_block_pallas.3} parent=5 // pred_fallthru
      _
    %p124 = scmp.lt.s32.totalorder %s9, 2
    // Predicated region
    $region21: #{basic_block_pallas.3} parent=5 // pred_check
      %p125 = pneg %p124
    $region22: #{basic_block_pallas.3} parent=5 // pred_check_branch
      %127 = sbr.rel (%p125) target = $region24
    $region23: #{basic_block_pallas.3} parent=5 // pred_region
      // Predicated region
      $region25: #{basic_block_pallas.3} parent=23 // pred_check
        %p128 = pneg %p29
      $region26: #{basic_block_pallas.3} parent=23 // pred_check_branch
        %130 = sbr.rel (%p128) target = $region28
      $region27: #{basic_block_pallas.3} parent=23 // pred_region
        %s131 = smul.u32 4, %s9
        %p132 = scmp.lt.s32.totalorder %s131, 7
        %s133 = scalar_select %p132, %s131, 7
        %s134 = smul.addr %s133, 18
        %s135 = smul.addr %s134, 4
        %s136 = scalar_lea.vmem %s0, %s135
        %s137 = smul.u32 4, %s9
      $region28: #{basic_block_pallas.3} parent=23 // pred_fallthru
        _
    $region24: #{basic_block_pallas.3} parent=5 // pred_fallthru
      _
    %p138 = scmp.le.s32.totalorder 1, %s9
    %p139 = scmp.lt.s32.totalorder %s9, 3
    %p140 = pnand %p138, %p139
    %p141 = pneg %p140
    // Predicated region
    $region29: #{basic_block_pallas.3} parent=5 // pred_check
      _
    $region30: #{basic_block_pallas.3} parent=5 // pred_check_branch
      %143 = sbr.rel (%p140) target = $region32
    $region31: #{basic_block_pallas.3} parent=5 // pred_region
      %s144 = ssub.s32 %s9, 1
      %s145 = smul.u32 4, %s14
      %p146 = scmp.lt.s32.totalorder %s145, 7
      %s147 = scalar_select %p146, %s145, 7
      %s148 = smul.addr %s147, 18
      %s149 = smul.addr %s148, 4
      %s150 = scalar_lea.vmem %s0, %s149
      %p151 = pneg %p35
      %p152 = pneg %p32
      %p153 = pneg %p56
      %p154 = pneg %p53
      %p155 = pneg %p77
      %p156 = pneg %p74
      %p157 = pneg %p103
      %p158 = pneg %p100
      %p159 = scmp.lt.s32.totalorder %s14, 1
      %s160 = scalar_select %p159, %s14, 1
      %s161 = smul.addr %s160, 20
      %s162 = smul.addr %s161, 4
      %s163 = scalar_lea.vmem %s3, %s162
      %s164 = smul.u32 4, %s14
      %p165 = scmp.lt.s32.totalorder %s164, 7
      %s166 = scalar_select %p165, %s164, 7
      %s167 = smul.addr %s166, 18
      %s168 = smul.addr %s167, 4
      %s169 = scalar_lea.vmem %s0, %s168
      %s170 = smul.u32 4, %s14
      %p171 = scmp.lt.s32.totalorder %s14, 1
      %s172 = scalar_select %p171, %s14, 1
      %s173 = smul.addr %s172, 20
      %s174 = smul.addr %s173, 4
      %s175 = scalar_lea.vmem %s3, %s174
      %v177 = vld [vmem:[%s169] sm:$0xf]
      %v178 = vld [vmem:[%s169 + $0x8] sm:$0xf]
      %v179 = vld [vmem:[%s169 + $0x10] sm:$0xf]
      %v180 = vld [vmem:[%s169 + $0x18] sm:$0xf]
      %v181 = vld [vmem:[%s169 + $0x20] sm:$0xf]
      %v182 = vld [vmem:[%s169 + $0x28] sm:$0xf]
      %v183 = vld [vmem:[%s169 + $0x30] sm:$0xf]
      %v184 = vld [vmem:[%s169 + $0x38] sm:$0xf]
      %v185 = vld [vmem:[%s1] sm:$0xf]
      %v186 = vld [vmem:[%s1 + $0x4] sm:$0xf]
      %s187 = scalar_lea.vmem %s169, 72
      %v188 = vld [vmem:[%s187] sm:$0xf]
      %v189 = vld [vmem:[%s187 + $0x8] sm:$0xf]
      %v190 = vld [vmem:[%s187 + $0x10] sm:$0xf]
      %v191 = vld [vmem:[%s187 + $0x18] sm:$0xf]
      %v192 = vld [vmem:[%s187 + $0x20] sm:$0xf]
      %v193 = vld [vmem:[%s187 + $0x28] sm:$0xf]
      %v194 = vld [vmem:[%s187 + $0x30] sm:$0xf]
      %v195 = vld [vmem:[%s187 + $0x38] sm:$0xf]
      %s196 = scalar_lea.vmem %s1, 8
      %v197 = vld [vmem:[%s196] sm:$0xf]
      %v198 = vld [vmem:[%s196 + $0x4] sm:$0xf]
      %v207 = vunpack.c.l.b16 %v188
      %v208 = vunpack.c.l.b16 %v189
      %v209 = vunpack.c.l.b16 %v190
      %v210 = vunpack.c.l.b16 %v191
      %v211 = vunpack.c.l.b16 %v192
      %v212 = vunpack.c.l.b16 %v193
      %v213 = vunpack.c.l.b16 %v194
      %v214 = vunpack.c.l.b16 %v195
      %v215 = vpack.c.b16 %v208, %v207
      %v216 = vpack.c.b16 %v210, %v209
      %v217 = vpack.c.b16 %v212, %v211
      %v218 = vpack.c.b16 %v214, %v213
      %v221 = vunpack.c.l.b16 %v197
      %v222 = vunpack.c.l.b16 %v198
      %v223 = vpack.c.b16 %v222, %v221
      %vm225 = vcmask 130048
      %v227 = vsel %vm225, %v215, 0
      %v230 = vsel %vm225, %v216, 0
      %v233 = vsel %vm225, %v217, 0
      %v236 = vsel %vm225, %v218, 0
      %238 = vmatprep.subr.bf16.mxu0 0
      %239 = vmatpush1.bf16.msra.mxu0 %v223
      %240 = vmatprep.subr.bf16.mxu0 0
      %241 = vmatpush1.bf16.msra.mxu0 0
      %242 = vmatprep.subr.bf16.mxu0 0
      %243 = vmatpush1.bf16.msra.mxu0 0
      %244 = vmatprep.subr.bf16.mxu0 0
      %245 = vmatpush1.bf16.msra.mxu0 0
      %246 = vmatprep.subr.bf16.mxu0 0
      %247 = vmatpush1.bf16.msra.mxu0 0
      %248 = vmatprep.subr.bf16.mxu0 0
      %249 = vmatpush1.bf16.msra.mxu0 0
      %250 = vmatprep.subr.bf16.mxu0 0
      %251 = vmatpush1.bf16.msra.mxu0 0
      %252 = vmatprep.subr.bf16.mxu0 0
      %253 = vmatpush1.bf16.msra.mxu0 0
      %254 = vmatprep.subr.bf16.mxu0 0
      %255 = vmatpush1.bf16.msra.mxu0 0
      %256 = vmatprep.subr.bf16.mxu0 0
      %257 = vmatpush1.bf16.msra.mxu0 0
      %258 = vmatprep.subr.bf16.mxu0 0
      %259 = vmatpush1.bf16.msra.mxu0 0
      %260 = vmatprep.subr.bf16.mxu0 0
      %261 = vmatpush1.bf16.msra.mxu0 0
      %262 = vmatprep.subr.bf16.mxu0 0
      %263 = vmatpush1.bf16.msra.mxu0 0
      %264 = vmatprep.subr.bf16.mxu0 0
      %265 = vmatpush1.bf16.msra.mxu0 0
      %266 = vmatprep.subr.bf16.mxu0 0
      %267 = vmatpush1.bf16.msra.mxu0 0
      %268 = vmatprep.subr.bf16.mxu0 0
      %269 = vmatpush1.bf16.msra.mxu0 0
      %270 = vmatprep.mubr.bf16.mxu0 0
      %271 = vmatmul.mubr.bf16.gmra.mrb[0].mxu0 %v227
      %v272 = vpop.f32.mrb[0].mxu0
      %v273 = vadd.f32 0.0, %v272
      %v274 = vpop.f32.mrb[0].mxu0
      %v275 = vpop.f32.mrb[0].mxu0
      %v276 = vadd.f32 0.0, %v275
      %v277 = vpop.f32.mrb[0].mxu0
      %278 = vmatprep.mubr.bf16.mxu0 0
      %279 = vmatmul.mubr.bf16.gmra.mrb[0].mxu0 %v230
      %v280 = vpop.f32.mrb[0].mxu0
      %v281 = vadd.f32 0.0, %v280
      %v282 = vpop.f32.mrb[0].mxu0
      %v283 = vpop.f32.mrb[0].mxu0
      %v284 = vadd.f32 0.0, %v283
      %v285 = vpop.f32.mrb[0].mxu0
      %286 = vmatprep.mubr.bf16.mxu0 0
      %287 = vmatmul.mubr.bf16.gmra.mrb[0].mxu0 %v233
      %v288 = vpop.f32.mrb[0].mxu0
      %v289 = vadd.f32 0.0, %v288
      %v290 = vpop.f32.mrb[0].mxu0
      %v291 = vpop.f32.mrb[0].mxu0
      %v292 = vadd.f32 0.0, %v291
      %v293 = vpop.f32.mrb[0].mxu0
      %294 = vmatprep.mubr.bf16.mxu0 0
      %295 = vmatmul.mubr.bf16.gmra.mrb[0].mxu0 %v236
      %v296 = vpop.f32.mrb[0].mxu0
      %v297 = vadd.f32 0.0, %v296
      %v298 = vpop.f32.mrb[0].mxu0
      %v299 = vpop.f32.mrb[0].mxu0
      %v300 = vadd.f32 0.0, %v299
      %v301 = vpop.f32.mrb[0].mxu0
      %302 = vdwg.mxu0
      %v311 = vunpack.c.l.b16 %v177
      %v312 = vunpack.c.l.b16 %v178
      %v313 = vunpack.c.l.b16 %v179
      %v314 = vunpack.c.l.b16 %v180
      %v315 = vunpack.c.l.b16 %v181
      %v316 = vunpack.c.l.b16 %v182
      %v317 = vunpack.c.l.b16 %v183
      %v318 = vunpack.c.l.b16 %v184
      %v319 = vpack.c.b16 %v312, %v311
      %v320 = vpack.c.b16 %v314, %v313
      %v321 = vpack.c.b16 %v316, %v315
      %v322 = vpack.c.b16 %v318, %v317
      %v325 = vunpack.c.l.b16 %v185
      %v326 = vunpack.c.l.b16 %v186
      %v327 = vpack.c.b16 %v326, %v325
      %v330 = vsel %vm225, %v319, 0
      %v333 = vsel %vm225, %v320, 0
      %v336 = vsel %vm225, %v321, 0
      %v339 = vsel %vm225, %v322, 0
      %341 = vmatprep.subr.bf16.mxu0 0
      %342 = vmatpush1.bf16.msra.mxu0 %v327
      %343 = vmatprep.subr.bf16.mxu0 0
      %344 = vmatpush1.bf16.msra.mxu0 0
      %345 = vmatprep.subr.bf16.mxu0 0
      %346 = vmatpush1.bf16.msra.mxu0 0
      %347 = vmatprep.subr.bf16.mxu0 0
      %348 = vmatpush1.bf16.msra.mxu0 0
      %349 = vmatprep.subr.bf16.mxu0 0
      %350 = vmatpush1.bf16.msra.mxu0 0
      %351 = vmatprep.subr.bf16.mxu0 0
      %352 = vmatpush1.bf16.msra.mxu0 0
      %353 = vmatprep.subr.bf16.mxu0 0
      %354 = vmatpush1.bf16.msra.mxu0 0
      %355 = vmatprep.subr.bf16.mxu0 0
      %356 = vmatpush1.bf16.msra.mxu0 0
      %357 = vmatprep.subr.bf16.mxu0 0
      %358 = vmatpush1.bf16.msra.mxu0 0
      %359 = vmatprep.subr.bf16.mxu0 0
      %360 = vmatpush1.bf16.msra.mxu0 0
      %361 = vmatprep.subr.bf16.mxu0 0
      %362 = vmatpush1.bf16.msra.mxu0 0
      %363 = vmatprep.subr.bf16.mxu0 0
      %364 = vmatpush1.bf16.msra.mxu0 0
      %365 = vmatprep.subr.bf16.mxu0 0
      %366 = vmatpush1.bf16.msra.mxu0 0
      %367 = vmatprep.subr.bf16.mxu0 0
      %368 = vmatpush1.bf16.msra.mxu0 0
      %369 = vmatprep.subr.bf16.mxu0 0
      %370 = vmatpush1.bf16.msra.mxu0 0
      %371 = vmatprep.subr.bf16.mxu0 0
      %372 = vmatpush1.bf16.msra.mxu0 0
      %373 = vmatprep.mubr.bf16.mxu0 0
      %374 = vmatmul.mubr.bf16.gmra.mrb[0].mxu0 %v330
      %v375 = vpop.f32.mrb[0].mxu0
      %v376 = vadd.f32 %v273, %v375
      %v377 = vpop.f32.mrb[0].mxu0
      %v378 = vpop.f32.mrb[0].mxu0
      %v379 = vadd.f32 %v276, %v378
      %v380 = vpop.f32.mrb[0].mxu0
      %381 = vmatprep.mubr.bf16.mxu0 0
      %382 = vmatmul.mubr.bf16.gmra.mrb[0].mxu0 %v333
      %v383 = vpop.f32.mrb[0].mxu0
      %v384 = vadd.f32 %v281, %v383
      %v385 = vpop.f32.mrb[0].mxu0
      %v386 = vpop.f32.mrb[0].mxu0
      %v387 = vadd.f32 %v284, %v386
      %v388 = vpop.f32.mrb[0].mxu0
      %389 = vmatprep.mubr.bf16.mxu0 0
      %390 = vmatmul.mubr.bf16.gmra.mrb[0].mxu0 %v336
      %v391 = vpop.f32.mrb[0].mxu0
      %v392 = vadd.f32 %v289, %v391
      %v393 = vpop.f32.mrb[0].mxu0
      %v394 = vpop.f32.mrb[0].mxu0
      %v395 = vadd.f32 %v292, %v394
      %v396 = vpop.f32.mrb[0].mxu0
      %397 = vmatprep.mubr.bf16.mxu0 0
      %398 = vmatmul.mubr.bf16.gmra.mrb[0].mxu0 %v339
      %v399 = vpop.f32.mrb[0].mxu0
      %v400 = vadd.f32 %v297, %v399
      %v401 = vpop.f32.mrb[0].mxu0
      %v402 = vpop.f32.mrb[0].mxu0
      %v403 = vadd.f32 %v300, %v402
      %v404 = vpop.f32.mrb[0].mxu0
      %405 = vdwg.mxu0
      %v406 = vld [vmem:[%s169] sm:$0xf]
      %v407 = vld [vmem:[%s169 + $0x4] sm:$0x1]
      %v408 = vld [vmem:[%s169 + $0x8] sm:$0xf]
      %v409 = vld [vmem:[%s169 + $0xc] sm:$0x1]
      %v410 = vld [vmem:[%s169 + $0x10] sm:$0xf]
      %v411 = vld [vmem:[%s169 + $0x14] sm:$0x1]
      %v412 = vld [vmem:[%s169 + $0x18] sm:$0xf]
      %v413 = vld [vmem:[%s169 + $0x1c] sm:$0x1]
      %v414 = vld [vmem:[%s169 + $0x20] sm:$0xf]
      %v415 = vld [vmem:[%s169 + $0x24] sm:$0x1]
      %v416 = vld [vmem:[%s169 + $0x28] sm:$0xf]
      %v417 = vld [vmem:[%s169 + $0x2c] sm:$0x1]
      %v418 = vld [vmem:[%s169 + $0x30] sm:$0xf]
      %v419 = vld [vmem:[%s169 + $0x34] sm:$0x1]
      %v420 = vld [vmem:[%s169 + $0x38] sm:$0xf]
      %v421 = vld [vmem:[%s169 + $0x3c] sm:$0x1]
      %vm422 = vsmask.f32 3328
      %vm423 = vsmask.f32 7440
      %vm424 = vmor %vm422, %vm423
      %v426 = vshrl.u32 %v406, 16
      %v428 = vrot.slane %v426, 4
      %v429 = vshll.u32 %v406, 16
      %v431 = vrot.slane %v429, 5
      %v432 = vor.u32 %v428, %v431
      %v433 = vrot.slane %v432, 4
      %v435 = vshll.u32 %v407, 16
      %v437 = vrot.slane %v435, 5
      %v438 = vsel %vm424, %v433, %v437
      %v440 = vshrl.u32 %v408, 16
      %v442 = vrot.slane %v440, 4
      %v443 = vshll.u32 %v408, 16
      %v445 = vrot.slane %v443, 5
      %v446 = vor.u32 %v442, %v445
      %v447 = vrot.slane %v446, 4
      %v449 = vshll.u32 %v409, 16
      %v451 = vrot.slane %v449, 5
      %v452 = vsel %vm424, %v447, %v451
      %v454 = vshrl.u32 %v410, 16
      %v456 = vrot.slane %v454, 4
      %v457 = vshll.u32 %v410, 16
      %v459 = vrot.slane %v457, 5
      %v460 = vor.u32 %v456, %v459
      %v461 = vrot.slane %v460, 4
      %v463 = vshll.u32 %v411, 16
      %v465 = vrot.slane %v463, 5
      %v466 = vsel %vm424, %v461, %v465
      %v468 = vshrl.u32 %v412, 16
      %v470 = vrot.slane %v468, 4
      %v471 = vshll.u32 %v412, 16
      %v473 = vrot.slane %v471, 5
      %v474 = vor.u32 %v470, %v473
      %v475 = vrot.slane %v474, 4
      %v477 = vshll.u32 %v413, 16
      %v479 = vrot.slane %v477, 5
      %v480 = vsel %vm424, %v475, %v479
      %v482 = vshrl.u32 %v414, 16
      %v484 = vrot.slane %v482, 4
      %v485 = vshll.u32 %v414, 16
      %v487 = vrot.slane %v485, 5
      %v488 = vor.u32 %v484, %v487
      %v489 = vrot.slane %v488, 4
      %v491 = vshll.u32 %v415, 16
      %v493 = vrot.slane %v491, 5
      %v494 = vsel %vm424, %v489, %v493
      %v496 = vshrl.u32 %v416, 16
      %v498 = vrot.slane %v496, 4
      %v499 = vshll.u32 %v416, 16
      %v501 = vrot.slane %v499, 5
      %v502 = vor.u32 %v498, %v501
      %v503 = vrot.slane %v502, 4
      %v505 = vshll.u32 %v417, 16
      %v507 = vrot.slane %v505, 5
      %v508 = vsel %vm424, %v503, %v507
      %v510 = vshrl.u32 %v418, 16
      %v512 = vrot.slane %v510, 4
      %v513 = vshll.u32 %v418, 16
      %v515 = vrot.slane %v513, 5
      %v516 = vor.u32 %v512, %v515
      %v517 = vrot.slane %v516, 4
      %v519 = vshll.u32 %v419, 16
      %v521 = vrot.slane %v519, 5
      %v522 = vsel %vm424, %v517, %v521
      %v524 = vshrl.u32 %v420, 16
      %v526 = vrot.slane %v524, 4
      %v527 = vshll.u32 %v420, 16
      %v529 = vrot.slane %v527, 5
      %v530 = vor.u32 %v526, %v529
      %v531 = vrot.slane %v530, 4
      %v533 = vshll.u32 %v421, 16
      %v535 = vrot.slane %v533, 5
      %v536 = vsel %vm424, %v531, %v535
      %s537 = scalar_lea.vmem %s1, 16
      %v538 = vld [vmem:[%s537] sm:$0xf]
      %v539 = vld [vmem:[%s537 + $0x4] sm:$0xf]
      %v540 = vunpack.c.l.b16 %v438
      %v541 = vunpack.c.l.b16 %v452
      %v542 = vunpack.c.l.b16 %v466
      %v543 = vunpack.c.l.b16 %v480
      %v544 = vunpack.c.l.b16 %v494
      %v545 = vunpack.c.l.b16 %v508
      %v546 = vunpack.c.l.b16 %v522
      %v547 = vunpack.c.l.b16 %v536
      %v548 = vpack.c.b16 %v541, %v540
      %v549 = vpack.c.b16 %v543, %v542
      %v550 = vpack.c.b16 %v545, %v544
      %v551 = vpack.c.b16 %v547, %v546
      %v554 = vunpack.c.l.b16 %v538
      %v555 = vunpack.c.l.b16 %v539
      %v556 = vpack.c.b16 %v555, %v554
      %v559 = vsel %vm225, %v548, 0
      %v562 = vsel %vm225, %v549, 0
      %v565 = vsel %vm225, %v550, 0
      %v568 = vsel %vm225, %v551, 0
      %570 = vmatprep.subr.bf16.mxu0 0
      %571 = vmatpush1.bf16.msra.mxu0 %v556
      %572 = vmatprep.subr.bf16.mxu0 0
      %573 = vmatpush1.bf16.msra.mxu0 0
      %574 = vmatprep.subr.bf16.mxu0 0
      %575 = vmatpush1.bf16.msra.mxu0 0
      %576 = vmatprep.subr.bf16.mxu0 0
      %577 = vmatpush1.bf16.msra.mxu0 0
      %578 = vmatprep.subr.bf16.mxu0 0
      %579 = vmatpush1.bf16.msra.mxu0 0
      %580 = vmatprep.subr.bf16.mxu0 0
      %581 = vmatpush1.bf16.msra.mxu0 0
      %582 = vmatprep.subr.bf16.mxu0 0
      %583 = vmatpush1.bf16.msra.mxu0 0
      %584 = vmatprep.subr.bf16.mxu0 0
      %585 = vmatpush1.bf16.msra.mxu0 0
      %586 = vmatprep.subr.bf16.mxu0 0
      %587 = vmatpush1.bf16.msra.mxu0 0
      %588 = vmatprep.subr.bf16.mxu0 0
      %589 = vmatpush1.bf16.msra.mxu0 0
      %590 = vmatprep.subr.bf16.mxu0 0
      %591 = vmatpush1.bf16.msra.mxu0 0
      %592 = vmatprep.subr.bf16.mxu0 0
      %593 = vmatpush1.bf16.msra.mxu0 0
      %594 = vmatprep.subr.bf16.mxu0 0
      %595 = vmatpush1.bf16.msra.mxu0 0
      %596 = vmatprep.subr.bf16.mxu0 0
      %597 = vmatpush1.bf16.msra.mxu0 0
      %598 = vmatprep.subr.bf16.mxu0 0
      %599 = vmatpush1.bf16.msra.mxu0 0
      %600 = vmatprep.subr.bf16.mxu0 0
      %601 = vmatpush1.bf16.msra.mxu0 0
      %602 = vmatprep.mubr.bf16.mxu0 0
      %603 = vmatmul.mubr.bf16.gmra.mrb[0].mxu0 %v559
      %v604 = vpop.f32.mrb[0].mxu0
      %v605 = vadd.f32 0.0, %v604
      %v606 = vpop.f32.mrb[0].mxu0
      %v607 = vpop.f32.mrb[0].mxu0
      %v608 = vadd.f32 0.0, %v607
      %v609 = vpop.f32.mrb[0].mxu0
      %610 = vmatprep.mubr.bf16.mxu0 0
      %611 = vmatmul.mubr.bf16.gmra.mrb[0].mxu0 %v562
      %v612 = vpop.f32.mrb[0].mxu0
      %v613 = vadd.f32 0.0, %v612
      %v614 = vpop.f32.mrb[0].mxu0
      %v615 = vpop.f32.mrb[0].mxu0
      %v616 = vadd.f32 0.0, %v615
      %v617 = vpop.f32.mrb[0].mxu0
      %618 = vmatprep.mubr.bf16.mxu0 0
      %619 = vmatmul.mubr.bf16.gmra.mrb[0].mxu0 %v565
      %v620 = vpop.f32.mrb[0].mxu0
      %v621 = vadd.f32 0.0, %v620
      %v622 = vpop.f32.mrb[0].mxu0
      %v623 = vpop.f32.mrb[0].mxu0
      %v624 = vadd.f32 0.0, %v623
      %v625 = vpop.f32.mrb[0].mxu0
      %626 = vmatprep.mubr.bf16.mxu0 0
      %627 = vmatmul.mubr.bf16.gmra.mrb[0].mxu0 %v568
      %v628 = vpop.f32.mrb[0].mxu0
      %v629 = vadd.f32 0.0, %v628
      %v630 = vpop.f32.mrb[0].mxu0
      %v631 = vpop.f32.mrb[0].mxu0
      %v632 = vadd.f32 0.0, %v631
      %v633 = vpop.f32.mrb[0].mxu0
      %634 = vdwg.mxu0
      %v635 = vadd.f32 %v376, %v605
      %v636 = vadd.f32 %v379, %v608
      %v637 = vadd.f32 %v384, %v613
      %v638 = vadd.f32 %v387, %v616
      %v639 = vadd.f32 %v392, %v621
      %v640 = vadd.f32 %v395, %v624
      %v641 = vadd.f32 %v400, %v629
      %v642 = vadd.f32 %v403, %v632
      %s643 = scalar_lea.vmem %s169, 144
      %v644 = vld [vmem:[%s643] sm:$0xf]
      %v645 = vld [vmem:[%s643 + $0x8] sm:$0xf]
      %v646 = vld [vmem:[%s643 + $0x10] sm:$0xf]
      %v647 = vld [vmem:[%s643 + $0x18] sm:$0xf]
      %v648 = vld [vmem:[%s643 + $0x20] sm:$0xf]
      %v649 = vld [vmem:[%s643 + $0x28] sm:$0xf]
      %v650 = vld [vmem:[%s643 + $0x30] sm:$0xf]
      %v651 = vld [vmem:[%s643 + $0x38] sm:$0xf]
      %s652 = scalar_lea.vmem %s1, 24
      %v653 = vld [vmem:[%s652] sm:$0xf]
      %v654 = vld [vmem:[%s652 + $0x4] sm:$0xf]
      %v663 = vunpack.c.l.b16 %v644
      %v664 = vunpack.c.l.b16 %v645
      %v665 = vunpack.c.l.b16 %v646
      %v666 = vunpack.c.l.b16 %v647
      %v667 = vunpack.c.l.b16 %v648
      %v668 = vunpack.c.l.b16 %v649
      %v669 = vunpack.c.l.b16 %v650
      %v670 = vunpack.c.l.b16 %v651
      %v671 = vpack.c.b16 %v664, %v663
      %v672 = vpack.c.b16 %v666, %v665
      %v673 = vpack.c.b16 %v668, %v667
      %v674 = vpack.c.b16 %v670, %v669
      %v677 = vunpack.c.l.b16 %v653
      %v678 = vunpack.c.l.b16 %v654
      %v679 = vpack.c.b16 %v678, %v677
      %v682 = vsel %vm225, %v671, 0
      %v685 = vsel %vm225, %v672, 0
      %v688 = vsel %vm225, %v673, 0
      %v691 = vsel %vm225, %v674, 0
      %693 = vmatprep.subr.bf16.mxu0 0
      %694 = vmatpush1.bf16.msra.mxu0 %v679
      %695 = vmatprep.subr.bf16.mxu0 0
      %696 = vmatpush1.bf16.msra.mxu0 0
      %697 = vmatprep.subr.bf16.mxu0 0
      %698 = vmatpush1.bf16.msra.mxu0 0
      %699 = vmatprep.subr.bf16.mxu0 0
      %700 = vmatpush1.bf16.msra.mxu0 0
      %701 = vmatprep.subr.bf16.mxu0 0
      %702 = vmatpush1.bf16.msra.mxu0 0
      %703 = vmatprep.subr.bf16.mxu0 0
      %704 = vmatpush1.bf16.msra.mxu0 0
      %705 = vmatprep.subr.bf16.mxu0 0
      %706 = vmatpush1.bf16.msra.mxu0 0
      %707 = vmatprep.subr.bf16.mxu0 0
      %708 = vmatpush1.bf16.msra.mxu0 0
      %709 = vmatprep.subr.bf16.mxu0 0
      %710 = vmatpush1.bf16.msra.mxu0 0
      %711 = vmatprep.subr.bf16.mxu0 0
      %712 = vmatpush1.bf16.msra.mxu0 0
      %713 = vmatprep.subr.bf16.mxu0 0
      %714 = vmatpush1.bf16.msra.mxu0 0
      %715 = vmatprep.subr.bf16.mxu0 0
      %716 = vmatpush1.bf16.msra.mxu0 0
      %717 = vmatprep.subr.bf16.mxu0 0
      %718 = vmatpush1.bf16.msra.mxu0 0
      %719 = vmatprep.subr.bf16.mxu0 0
      %720 = vmatpush1.bf16.msra.mxu0 0
      %721 = vmatprep.subr.bf16.mxu0 0
      %722 = vmatpush1.bf16.msra.mxu0 0
      %723 = vmatprep.subr.bf16.mxu0 0
      %724 = vmatpush1.bf16.msra.mxu0 0
      %725 = vmatprep.mubr.bf16.mxu0 0
      %726 = vmatmul.mubr.bf16.gmra.mrb[0].mxu0 %v682
      %v727 = vpop.f32.mrb[0].mxu0
      %v728 = vadd.f32 0.0, %v727
      %v729 = vpop.f32.mrb[0].mxu0
      %v730 = vpop.f32.mrb[0].mxu0
      %v731 = vadd.f32 0.0, %v730
      %v732 = vpop.f32.mrb[0].mxu0
      %733 = vmatprep.mubr.bf16.mxu0 0
      %734 = vmatmul.mubr.bf16.gmra.mrb[0].mxu0 %v685
      %v735 = vpop.f32.mrb[0].mxu0
      %v736 = vadd.f32 0.0, %v735
      %v737 = vpop.f32.mrb[0].mxu0
      %v738 = vpop.f32.mrb[0].mxu0
      %v739 = vadd.f32 0.0, %v738
      %v740 = vpop.f32.mrb[0].mxu0
      %741 = vmatprep.mubr.bf16.mxu0 0
      %742 = vmatmul.mubr.bf16.gmra.mrb[0].mxu0 %v688
      %v743 = vpop.f32.mrb[0].mxu0
      %v744 = vadd.f32 0.0, %v743
      %v745 = vpop.f32.mrb[0].mxu0
      %v746 = vpop.f32.mrb[0].mxu0
      %v747 = vadd.f32 0.0, %v746
      %v748 = vpop.f32.mrb[0].mxu0
      %749 = vmatprep.mubr.bf16.mxu0 0
      %750 = vmatmul.mubr.bf16.gmra.mrb[0].mxu0 %v691
      %v751 = vpop.f32.mrb[0].mxu0
      %v752 = vadd.f32 0.0, %v751
      %v753 = vpop.f32.mrb[0].mxu0
      %v754 = vpop.f32.mrb[0].mxu0
      %v755 = vadd.f32 0.0, %v754
      %v756 = vpop.f32.mrb[0].mxu0
      %757 = vdwg.mxu0
      %v758 = vadd.f32 %v635, %v728
      %v759 = vadd.f32 %v636, %v731
      %v760 = vadd.f32 %v637, %v736
      %v761 = vadd.f32 %v638, %v739
      %v762 = vadd.f32 %v639, %v744
      %v763 = vadd.f32 %v640, %v747
      %v764 = vadd.f32 %v641, %v752
      %v765 = vadd.f32 %v642, %v755
      %s766 = scalar_lea.vmem %s169, 216
      %v767 = vld [vmem:[%s766] sm:$0xf]
      %v768 = vld [vmem:[%s766 + $0x8] sm:$0xf]
      %v769 = vld [vmem:[%s766 + $0x10] sm:$0xf]
      %v770 = vld [vmem:[%s766 + $0x18] sm:$0xf]
      %v771 = vld [vmem:[%s766 + $0x20] sm:$0xf]
      %v772 = vld [vmem:[%s766 + $0x28] sm:$0xf]
      %v773 = vld [vmem:[%s766 + $0x30] sm:$0xf]
      %v774 = vld [vmem:[%s766 + $0x38] sm:$0xf]
      %s775 = scalar_lea.vmem %s1, 32
      %v776 = vld [vmem:[%s775] sm:$0xf]
      %v777 = vld [vmem:[%s775 + $0x4] sm:$0xf]
      %v786 = vunpack.c.l.b16 %v767
      %v787 = vunpack.c.l.b16 %v768
      %v788 = vunpack.c.l.b16 %v769
      %v789 = vunpack.c.l.b16 %v770
      %v790 = vunpack.c.l.b16 %v771
      %v791 = vunpack.c.l.b16 %v772
      %v792 = vunpack.c.l.b16 %v773
      %v793 = vunpack.c.l.b16 %v774
      %v794 = vpack.c.b16 %v787, %v786
      %v795 = vpack.c.b16 %v789, %v788
      %v796 = vpack.c.b16 %v791, %v790
      %v797 = vpack.c.b16 %v793, %v792
      %v800 = vunpack.c.l.b16 %v776
      %v801 = vunpack.c.l.b16 %v777
      %v802 = vpack.c.b16 %v801, %v800
      %v805 = vsel %vm225, %v794, 0
      %v808 = vsel %vm225, %v795, 0
      %v811 = vsel %vm225, %v796, 0
      %v814 = vsel %vm225, %v797, 0
      %816 = vmatprep.subr.bf16.mxu0 0
      %817 = vmatpush1.bf16.msra.mxu0 %v802
      %818 = vmatprep.subr.bf16.mxu0 0
      %819 = vmatpush1.bf16.msra.mxu0 0
      %820 = vmatprep.subr.bf16.mxu0 0
      %821 = vmatpush1.bf16.msra.mxu0 0
      %822 = vmatprep.subr.bf16.mxu0 0
      %823 = vmatpush1.bf16.msra.mxu0 0
      %824 = vmatprep.subr.bf16.mxu0 0
      %825 = vmatpush1.bf16.msra.mxu0 0
      %826 = vmatprep.subr.bf16.mxu0 0
      %827 = vmatpush1.bf16.msra.mxu0 0
      %828 = vmatprep.subr.bf16.mxu0 0
      %829 = vmatpush1.bf16.msra.mxu0 0
      %830 = vmatprep.subr.bf16.mxu0 0
      %831 = vmatpush1.bf16.msra.mxu0 0
      %832 = vmatprep.subr.bf16.mxu0 0
      %833 = vmatpush1.bf16.msra.mxu0 0
      %834 = vmatprep.subr.bf16.mxu0 0
      %835 = vmatpush1.bf16.msra.mxu0 0
      %836 = vmatprep.subr.bf16.mxu0 0
      %837 = vmatpush1.bf16.msra.mxu0 0
      %838 = vmatprep.subr.bf16.mxu0 0
      %839 = vmatpush1.bf16.msra.mxu0 0
      %840 = vmatprep.subr.bf16.mxu0 0
      %841 = vmatpush1.bf16.msra.mxu0 0
      %842 = vmatprep.subr.bf16.mxu0 0
      %843 = vmatpush1.bf16.msra.mxu0 0
      %844 = vmatprep.subr.bf16.mxu0 0
      %845 = vmatpush1.bf16.msra.mxu0 0
      %846 = vmatprep.subr.bf16.mxu0 0
      %847 = vmatpush1.bf16.msra.mxu0 0
      %848 = vmatprep.mubr.bf16.mxu0 0
      %849 = vmatmul.mubr.bf16.gmra.mrb[0].mxu0 %v805
      %v850 = vpop.f32.mrb[0].mxu0
      %v851 = vadd.f32 0.0, %v850
      %v852 = vpop.f32.mrb[0].mxu0
      %v853 = vpop.f32.mrb[0].mxu0
      %v854 = vadd.f32 0.0, %v853
      %v855 = vpop.f32.mrb[0].mxu0
      %856 = vmatprep.mubr.bf16.mxu0 0
      %857 = vmatmul.mubr.bf16.gmra.mrb[0].mxu0 %v808
      %v858 = vpop.f32.mrb[0].mxu0
      %v859 = vadd.f32 0.0, %v858
      %v860 = vpop.f32.mrb[0].mxu0
      %v861 = vpop.f32.mrb[0].mxu0
      %v862 = vadd.f32 0.0, %v861
      %v863 = vpop.f32.mrb[0].mxu0
      %864 = vmatprep.mubr.bf16.mxu0 0
      %865 = vmatmul.mubr.bf16.gmra.mrb[0].mxu0 %v811
      %v866 = vpop.f32.mrb[0].mxu0
      %v867 = vadd.f32 0.0, %v866
      %v868 = vpop.f32.mrb[0].mxu0
      %v869 = vpop.f32.mrb[0].mxu0
      %v870 = vadd.f32 0.0, %v869
      %v871 = vpop.f32.mrb[0].mxu0
      %872 = vmatprep.mubr.bf16.mxu0 0
      %873 = vmatmul.mubr.bf16.gmra.mrb[0].mxu0 %v814
      %v874 = vpop.f32.mrb[0].mxu0
      %v875 = vadd.f32 0.0, %v874
      %v876 = vpop.f32.mrb[0].mxu0
      %v877 = vpop.f32.mrb[0].mxu0
      %v878 = vadd.f32 0.0, %v877
      %v879 = vpop.f32.mrb[0].mxu0
      %880 = vdwg.mxu0
      %v881 = vadd.f32 %v758, %v851
      %v882 = vadd.f32 %v759, %v854
      %v883 = vadd.f32 %v760, %v859
      %v884 = vadd.f32 %v761, %v862
      %v885 = vadd.f32 %v762, %v867
      %v886 = vadd.f32 %v763, %v870
      %v887 = vadd.f32 %v764, %v875
      %v888 = vadd.f32 %v765, %v878
      %v889 = vld [vmem:[%s643] sm:$0xf]
      %v890 = vld [vmem:[%s643 + $0x4] sm:$0x1]
      %v891 = vld [vmem:[%s643 + $0x8] sm:$0xf]
      %v892 = vld [vmem:[%s643 + $0xc] sm:$0x1]
      %v893 = vld [vmem:[%s643 + $0x10] sm:$0xf]
      %v894 = vld [vmem:[%s643 + $0x14] sm:$0x1]
      %v895 = vld [vmem:[%s643 + $0x18] sm:$0xf]
      %v896 = vld [vmem:[%s643 + $0x1c] sm:$0x1]
      %v897 = vld [vmem:[%s643 + $0x20] sm:$0xf]
      %v898 = vld [vmem:[%s643 + $0x24] sm:$0x1]
      %v899 = vld [vmem:[%s643 + $0x28] sm:$0xf]
      %v900 = vld [vmem:[%s643 + $0x2c] sm:$0x1]
      %v901 = vld [vmem:[%s643 + $0x30] sm:$0xf]
      %v902 = vld [vmem:[%s643 + $0x34] sm:$0x1]
      %v903 = vld [vmem:[%s643 + $0x38] sm:$0xf]
      %v904 = vld [vmem:[%s643 + $0x3c] sm:$0x1]
      %v906 = vshrl.u32 %v889, 16
      %v908 = vrot.slane %v906, 4
      %v909 = vshll.u32 %v889, 16
      %v911 = vrot.slane %v909, 5
      %v912 = vor.u32 %v908, %v911
      %v913 = vrot.slane %v912, 4
      %v915 = vshll.u32 %v890, 16
      %v917 = vrot.slane %v915, 5
      %v918 = vsel %vm424, %v913, %v917
      %v920 = vshrl.u32 %v891, 16
      %v922 = vrot.slane %v920, 4
      %v923 = vshll.u32 %v891, 16
      %v925 = vrot.slane %v923, 5
      %v926 = vor.u32 %v922, %v925
      %v927 = vrot.slane %v926, 4
      %v929 = vshll.u32 %v892, 16
      %v931 = vrot.slane %v929, 5
      %v932 = vsel %vm424, %v927, %v931
      %v934 = vshrl.u32 %v893, 16
      %v936 = vrot.slane %v934, 4
      %v937 = vshll.u32 %v893, 16
      %v939 = vrot.slane %v937, 5
      %v940 = vor.u32 %v936, %v939
      %v941 = vrot.slane %v940, 4
      %v943 = vshll.u32 %v894, 16
      %v945 = vrot.slane %v943, 5
      %v946 = vsel %vm424, %v941, %v945
      %v948 = vshrl.u32 %v895, 16
      %v950 = vrot.slane %v948, 4
      %v951 = vshll.u32 %v895, 16
      %v953 = vrot.slane %v951, 5
      %v954 = vor.u32 %v950, %v953
      %v955 = vrot.slane %v954, 4
      %v957 = vshll.u32 %v896, 16
      %v959 = vrot.slane %v957, 5
      %v960 = vsel %vm424, %v955, %v959
      %v962 = vshrl.u32 %v897, 16
      %v964 = vrot.slane %v962, 4
      %v965 = vshll.u32 %v897, 16
      %v967 = vrot.slane %v965, 5
      %v968 = vor.u32 %v964, %v967
      %v969 = vrot.slane %v968, 4
      %v971 = vshll.u32 %v898, 16
      %v973 = vrot.slane %v971, 5
      %v974 = vsel %vm424, %v969, %v973
      %v976 = vshrl.u32 %v899, 16
      %v978 = vrot.slane %v976, 4
      %v979 = vshll.u32 %v899, 16
      %v981 = vrot.slane %v979, 5
      %v982 = vor.u32 %v978, %v981
      %v983 = vrot.slane %v982, 4
      %v985 = vshll.u32 %v900, 16
      %v987 = vrot.slane %v985, 5
      %v988 = vsel %vm424, %v983, %v987
      %v990 = vshrl.u32 %v901, 16
      %v992 = vrot.slane %v990, 4
      %v993 = vshll.u32 %v901, 16
      %v995 = vrot.slane %v993, 5
      %v996 = vor.u32 %v992, %v995
      %v997 = vrot.slane %v996, 4
      %v999 = vshll.u32 %v902, 16
      %v1001 = vrot.slane %v999, 5
      %v1002 = vsel %vm424, %v997, %v1001
      %v1004 = vshrl.u32 %v903, 16
      %v1006 = vrot.slane %v1004, 4
      %v1007 = vshll.u32 %v903, 16
      %v1009 = vrot.slane %v1007, 5
      %v1010 = vor.u32 %v1006, %v1009
      %v1011 = vrot.slane %v1010, 4
      %v1013 = vshll.u32 %v904, 16
      %v1015 = vrot.slane %v1013, 5
      %v1016 = vsel %vm424, %v1011, %v1015
      %s1017 = scalar_lea.vmem %s1, 40
      %v1018 = vld [vmem:[%s1017] sm:$0xf]
      %v1019 = vld [vmem:[%s1017 + $0x4] sm:$0xf]
      %v1020 = vunpack.c.l.b16 %v918
      %v1021 = vunpack.c.l.b16 %v932
      %v1022 = vunpack.c.l.b16 %v946
      %v1023 = vunpack.c.l.b16 %v960
      %v1024 = vunpack.c.l.b16 %v974
      %v1025 = vunpack.c.l.b16 %v988
      %v1026 = vunpack.c.l.b16 %v1002
      %v1027 = vunpack.c.l.b16 %v1016
      %v1028 = vpack.c.b16 %v1021, %v1020
      %v1029 = vpack.c.b16 %v1023, %v1022
      %v1030 = vpack.c.b16 %v1025, %v1024
      %v1031 = vpack.c.b16 %v1027, %v1026
      %v1034 = vunpack.c.l.b16 %v1018
      %v1035 = vunpack.c.l.b16 %v1019
      %v1036 = vpack.c.b16 %v1035, %v1034
      %v1039 = vsel %vm225, %v1028, 0
      %v1042 = vsel %vm225, %v1029, 0
      %v1045 = vsel %vm225, %v1030, 0
      %v1048 = vsel %vm225, %v1031, 0
      %1050 = vmatprep.subr.bf16.mxu0 0
      %1051 = vmatpush1.bf16.msra.mxu0 %v1036
      %1052 = vmatprep.subr.bf16.mxu0 0
      %1053 = vmatpush1.bf16.msra.mxu0 0
      %1054 = vmatprep.subr.bf16.mxu0 0
      %1055 = vmatpush1.bf16.msra.mxu0 0
      %1056 = vmatprep.subr.bf16.mxu0 0
      %1057 = vmatpush1.bf16.msra.mxu0 0
      %1058 = vmatprep.subr.bf16.mxu0 0
      %1059 = vmatpush1.bf16.msra.mxu0 0
      %1060 = vmatprep.subr.bf16.mxu0 0
      %1061 = vmatpush1.bf16.msra.mxu0 0
      %1062 = vmatprep.subr.bf16.mxu0 0
      %1063 = vmatpush1.bf16.msra.mxu0 0
      %1064 = vmatprep.subr.bf16.mxu0 0
      %1065 = vmatpush1.bf16.msra.mxu0 0
      %1066 = vmatprep.subr.bf16.mxu0 0
      %1067 = vmatpush1.bf16.msra.mxu0 0
      %1068 = vmatprep.subr.bf16.mxu0 0
      %1069 = vmatpush1.bf16.msra.mxu0 0
      %1070 = vmatprep.subr.bf16.mxu0 0
      %1071 = vmatpush1.bf16.msra.mxu0 0
      %1072 = vmatprep.subr.bf16.mxu0 0
      %1073 = vmatpush1.bf16.msra.mxu0 0
      %1074 = vmatprep.subr.bf16.mxu0 0
      %1075 = vmatpush1.bf16.msra.mxu0 0
      %1076 = vmatprep.subr.bf16.mxu0 0
      %1077 = vmatpush1.bf16.msra.mxu0 0
      %1078 = vmatprep.subr.bf16.mxu0 0
      %1079 = vmatpush1.bf16.msra.mxu0 0
      %1080 = vmatprep.subr.bf16.mxu0 0
      %1081 = vmatpush1.bf16.msra.mxu0 0
      %1082 = vmatprep.mubr.bf16.mxu0 0
      %1083 = vmatmul.mubr.bf16.gmra.mrb[0].mxu0 %v1039
      %v1084 = vpop.f32.mrb[0].mxu0
      %v1085 = vadd.f32 0.0, %v1084
      %v1086 = vpop.f32.mrb[0].mxu0
      %v1087 = vpop.f32.mrb[0].mxu0
      %v1088 = vadd.f32 0.0, %v1087
      %v1089 = vpop.f32.mrb[0].mxu0
      %1090 = vmatprep.mubr.bf16.mxu0 0
      %1091 = vmatmul.mubr.bf16.gmra.mrb[0].mxu0 %v1042
      %v1092 = vpop.f32.mrb[0].mxu0
      %v1093 = vadd.f32 0.0, %v1092
      %v1094 = vpop.f32.mrb[0].mxu0
      %v1095 = vpop.f32.mrb[0].mxu0
      %v1096 = vadd.f32 0.0, %v1095
      %v1097 = vpop.f32.mrb[0].mxu0
      %1098 = vmatprep.mubr.bf16.mxu0 0
      %1099 = vmatmul.mubr.bf16.gmra.mrb[0].mxu0 %v1045
      %v1100 = vpop.f32.mrb[0].mxu0
      %v1101 = vadd.f32 0.0, %v1100
      %v1102 = vpop.f32.mrb[0].mxu0
      %v1103 = vpop.f32.mrb[0].mxu0
      %v1104 = vadd.f32 0.0, %v1103
      %v1105 = vpop.f32.mrb[0].mxu0
      %1106 = vmatprep.mubr.bf16.mxu0 0
      %1107 = vmatmul.mubr.bf16.gmra.mrb[0].mxu0 %v1048
      %v1108 = vpop.f32.mrb[0].mxu0
      %v1109 = vadd.f32 0.0, %v1108
      %v1110 = vpop.f32.mrb[0].mxu0
      %v1111 = vpop.f32.mrb[0].mxu0
      %v1112 = vadd.f32 0.0, %v1111
      %v1113 = vpop.f32.mrb[0].mxu0
      %1114 = vdwg.mxu0
      %v1115 = vadd.f32 %v881, %v1085
      %v1116 = vadd.f32 %v882, %v1088
      %v1117 = vadd.f32 %v883, %v1093
      %v1118 = vadd.f32 %v884, %v1096
      %v1119 = vadd.f32 %v885, %v1101
      %v1120 = vadd.f32 %v886, %v1104
      %v1121 = vadd.f32 %v887, %v1109
      %v1122 = vadd.f32 %v888, %v1112
      %s1123 = scalar_lea.vmem %s169, 8
      %v1124 = vld [vmem:[%s1123] sm:$0xf]
      %v1125 = vld [vmem:[%s1123 + $0x8] sm:$0xf]
      %v1126 = vld [vmem:[%s1123 + $0x10] sm:$0xf]
      %v1127 = vld [vmem:[%s1123 + $0x18] sm:$0xf]
      %v1128 = vld [vmem:[%s1123 + $0x20] sm:$0xf]
      %v1129 = vld [vmem:[%s1123 + $0x28] sm:$0xf]
      %v1130 = vld [vmem:[%s1123 + $0x30] sm:$0xf]
      %v1131 = vld [vmem:[%s1123 + $0x38] sm:$0xf]
      %s1132 = scalar_lea.vmem %s1, 48
      %v1133 = vld [vmem:[%s1132] sm:$0xf]
      %v1134 = vld [vmem:[%s1132 + $0x4] sm:$0xf]
      %v1143 = vunpack.c.l.b16 %v1124
      %v1144 = vunpack.c.l.b16 %v1125
      %v1145 = vunpack.c.l.b16 %v1126
      %v1146 = vunpack.c.l.b16 %v1127
      %v1147 = vunpack.c.l.b16 %v1128
      %v1148 = vunpack.c.l.b16 %v1129
      %v1149 = vunpack.c.l.b16 %v1130
      %v1150 = vunpack.c.l.b16 %v1131
      %v1151 = vpack.c.b16 %v1144, %v1143
      %v1152 = vpack.c.b16 %v1146, %v1145
      %v1153 = vpack.c.b16 %v1148, %v1147
      %v1154 = vpack.c.b16 %v1150, %v1149
      %v1157 = vunpack.c.l.b16 %v1133
      %v1158 = vunpack.c.l.b16 %v1134
      %v1159 = vpack.c.b16 %v1158, %v1157
      %v1162 = vsel %vm225, %v1151, 0
      %v1165 = vsel %vm225, %v1152, 0
      %v1168 = vsel %vm225, %v1153, 0
      %v1171 = vsel %vm225, %v1154, 0
      %1173 = vmatprep.subr.bf16.mxu0 0
      %1174 = vmatpush1.bf16.msra.mxu0 %v1159
      %1175 = vmatprep.subr.bf16.mxu0 0
      %1176 = vmatpush1.bf16.msra.mxu0 0
      %1177 = vmatprep.subr.bf16.mxu0 0
      %1178 = vmatpush1.bf16.msra.mxu0 0
      %1179 = vmatprep.subr.bf16.mxu0 0
      %1180 = vmatpush1.bf16.msra.mxu0 0
      %1181 = vmatprep.subr.bf16.mxu0 0
      %1182 = vmatpush1.bf16.msra.mxu0 0
      %1183 = vmatprep.subr.bf16.mxu0 0
      %1184 = vmatpush1.bf16.msra.mxu0 0
      %1185 = vmatprep.subr.bf16.mxu0 0
      %1186 = vmatpush1.bf16.msra.mxu0 0
      %1187 = vmatprep.subr.bf16.mxu0 0
      %1188 = vmatpush1.bf16.msra.mxu0 0
      %1189 = vmatprep.subr.bf16.mxu0 0
      %1190 = vmatpush1.bf16.msra.mxu0 0
      %1191 = vmatprep.subr.bf16.mxu0 0
      %1192 = vmatpush1.bf16.msra.mxu0 0
      %1193 = vmatprep.subr.bf16.mxu0 0
      %1194 = vmatpush1.bf16.msra.mxu0 0
      %1195 = vmatprep.subr.bf16.mxu0 0
      %1196 = vmatpush1.bf16.msra.mxu0 0
      %1197 = vmatprep.subr.bf16.mxu0 0
      %1198 = vmatpush1.bf16.msra.mxu0 0
      %1199 = vmatprep.subr.bf16.mxu0 0
      %1200 = vmatpush1.bf16.msra.mxu0 0
      %1201 = vmatprep.subr.bf16.mxu0 0
      %1202 = vmatpush1.bf16.msra.mxu0 0
      %1203 = vmatprep.subr.bf16.mxu0 0
      %1204 = vmatpush1.bf16.msra.mxu0 0
      %1205 = vmatprep.mubr.bf16.mxu0 0
      %1206 = vmatmul.mubr.bf16.gmra.mrb[0].mxu0 %v1162
      %v1207 = vpop.f32.mrb[0].mxu0
      %v1208 = vadd.f32 0.0, %v1207
      %v1209 = vpop.f32.mrb[0].mxu0
      %v1210 = vpop.f32.mrb[0].mxu0
      %v1211 = vadd.f32 0.0, %v1210
      %v1212 = vpop.f32.mrb[0].mxu0
      %1213 = vmatprep.mubr.bf16.mxu0 0
      %1214 = vmatmul.mubr.bf16.gmra.mrb[0].mxu0 %v1165
      %v1215 = vpop.f32.mrb[0].mxu0
      %v1216 = vadd.f32 0.0, %v1215
      %v1217 = vpop.f32.mrb[0].mxu0
      %v1218 = vpop.f32.mrb[0].mxu0
      %v1219 = vadd.f32 0.0, %v1218
      %v1220 = vpop.f32.mrb[0].mxu0
      %1221 = vmatprep.mubr.bf16.mxu0 0
      %1222 = vmatmul.mubr.bf16.gmra.mrb[0].mxu0 %v1168
      %v1223 = vpop.f32.mrb[0].mxu0
      %v1224 = vadd.f32 0.0, %v1223
      %v1225 = vpop.f32.mrb[0].mxu0
      %v1226 = vpop.f32.mrb[0].mxu0
      %v1227 = vadd.f32 0.0, %v1226
      %v1228 = vpop.f32.mrb[0].mxu0
      %1229 = vmatprep.mubr.bf16.mxu0 0
      %1230 = vmatmul.mubr.bf16.gmra.mrb[0].mxu0 %v1171
      %v1231 = vpop.f32.mrb[0].mxu0
      %v1232 = vadd.f32 0.0, %v1231
      %v1233 = vpop.f32.mrb[0].mxu0
      %v1234 = vpop.f32.mrb[0].mxu0
      %v1235 = vadd.f32 0.0, %v1234
      %v1236 = vpop.f32.mrb[0].mxu0
      %1237 = vdwg.mxu0
      %v1238 = vadd.f32 %v1115, %v1208
      %v1239 = vadd.f32 %v1116, %v1211
      %v1240 = vadd.f32 %v1117, %v1216
      %v1241 = vadd.f32 %v1118, %v1219
      %v1242 = vadd.f32 %v1119, %v1224
      %v1243 = vadd.f32 %v1120, %v1227
      %v1244 = vadd.f32 %v1121, %v1232
      %v1245 = vadd.f32 %v1122, %v1235
      %s1246 = scalar_lea.vmem %s169, 80
      %v1247 = vld [vmem:[%s1246] sm:$0xf]
      %v1248 = vld [vmem:[%s1246 + $0x8] sm:$0xf]
      %v1249 = vld [vmem:[%s1246 + $0x10] sm:$0xf]
      %v1250 = vld [vmem:[%s1246 + $0x18] sm:$0xf]
      %v1251 = vld [vmem:[%s1246 + $0x20] sm:$0xf]
      %v1252 = vld [vmem:[%s1246 + $0x28] sm:$0xf]
      %v1253 = vld [vmem:[%s1246 + $0x30] sm:$0xf]
      %v1254 = vld [vmem:[%s1246 + $0x38] sm:$0xf]
      %s1255 = scalar_lea.vmem %s1, 56
      %v1256 = vld [vmem:[%s1255] sm:$0xf]
      %v1257 = vld [vmem:[%s1255 + $0x4] sm:$0xf]
      %v1266 = vunpack.c.l.b16 %v1247
      %v1267 = vunpack.c.l.b16 %v1248
      %v1268 = vunpack.c.l.b16 %v1249
      %v1269 = vunpack.c.l.b16 %v1250
      %v1270 = vunpack.c.l.b16 %v1251
      %v1271 = vunpack.c.l.b16 %v1252
      %v1272 = vunpack.c.l.b16 %v1253
      %v1273 = vunpack.c.l.b16 %v1254
      %v1274 = vpack.c.b16 %v1267, %v1266
      %v1275 = vpack.c.b16 %v1269, %v1268
      %v1276 = vpack.c.b16 %v1271, %v1270
      %v1277 = vpack.c.b16 %v1273, %v1272
      %v1280 = vunpack.c.l.b16 %v1256
      %v1281 = vunpack.c.l.b16 %v1257
      %v1282 = vpack.c.b16 %v1281, %v1280
      %v1285 = vsel %vm225, %v1274, 0
      %v1288 = vsel %vm225, %v1275, 0
      %v1291 = vsel %vm225, %v1276, 0
      %v1294 = vsel %vm225, %v1277, 0
      %1296 = vmatprep.subr.bf16.mxu0 0
      %1297 = vmatpush1.bf16.msra.mxu0 %v1282
      %1298 = vmatprep.subr.bf16.mxu0 0
      %1299 = vmatpush1.bf16.msra.mxu0 0
      %1300 = vmatprep.subr.bf16.mxu0 0
      %1301 = vmatpush1.bf16.msra.mxu0 0
      %1302 = vmatprep.subr.bf16.mxu0 0
      %1303 = vmatpush1.bf16.msra.mxu0 0
      %1304 = vmatprep.subr.bf16.mxu0 0
      %1305 = vmatpush1.bf16.msra.mxu0 0
      %1306 = vmatprep.subr.bf16.mxu0 0
      %1307 = vmatpush1.bf16.msra.mxu0 0
      %1308 = vmatprep.subr.bf16.mxu0 0
      %1309 = vmatpush1.bf16.msra.mxu0 0
      %1310 = vmatprep.subr.bf16.mxu0 0
      %1311 = vmatpush1.bf16.msra.mxu0 0
      %1312 = vmatprep.subr.bf16.mxu0 0
      %1313 = vmatpush1.bf16.msra.mxu0 0
      %1314 = vmatprep.subr.bf16.mxu0 0
      %1315 = vmatpush1.bf16.msra.mxu0 0
      %1316 = vmatprep.subr.bf16.mxu0 0
      %1317 = vmatpush1.bf16.msra.mxu0 0
      %1318 = vmatprep.subr.bf16.mxu0 0
      %1319 = vmatpush1.bf16.msra.mxu0 0
      %1320 = vmatprep.subr.bf16.mxu0 0
      %1321 = vmatpush1.bf16.msra.mxu0 0
      %1322 = vmatprep.subr.bf16.mxu0 0
      %1323 = vmatpush1.bf16.msra.mxu0 0
      %1324 = vmatprep.subr.bf16.mxu0 0
      %1325 = vmatpush1.bf16.msra.mxu0 0
      %1326 = vmatprep.subr.bf16.mxu0 0
      %1327 = vmatpush1.bf16.msra.mxu0 0
      %1328 = vmatprep.mubr.bf16.mxu0 0
      %1329 = vmatmul.mubr.bf16.gmra.mrb[0].mxu0 %v1285
      %v1330 = vpop.f32.mrb[0].mxu0
      %v1331 = vadd.f32 0.0, %v1330
      %v1332 = vpop.f32.mrb[0].mxu0
      %v1333 = vpop.f32.mrb[0].mxu0
      %v1334 = vadd.f32 0.0, %v1333
      %v1335 = vpop.f32.mrb[0].mxu0
      %1336 = vmatprep.mubr.bf16.mxu0 0
      %1337 = vmatmul.mubr.bf16.gmra.mrb[0].mxu0 %v1288
      %v1338 = vpop.f32.mrb[0].mxu0
      %v1339 = vadd.f32 0.0, %v1338
      %v1340 = vpop.f32.mrb[0].mxu0
      %v1341 = vpop.f32.mrb[0].mxu0
      %v1342 = vadd.f32 0.0, %v1341
      %v1343 = vpop.f32.mrb[0].mxu0
      %1344 = vmatprep.mubr.bf16.mxu0 0
      %1345 = vmatmul.mubr.bf16.gmra.mrb[0].mxu0 %v1291
      %v1346 = vpop.f32.mrb[0].mxu0
      %v1347 = vadd.f32 0.0, %v1346
      %v1348 = vpop.f32.mrb[0].mxu0
      %v1349 = vpop.f32.mrb[0].mxu0
      %v1350 = vadd.f32 0.0, %v1349
      %v1351 = vpop.f32.mrb[0].mxu0
      %1352 = vmatprep.mubr.bf16.mxu0 0
      %1353 = vmatmul.mubr.bf16.gmra.mrb[0].mxu0 %v1294
      %v1354 = vpop.f32.mrb[0].mxu0
      %v1355 = vadd.f32 0.0, %v1354
      %v1356 = vpop.f32.mrb[0].mxu0
      %v1357 = vpop.f32.mrb[0].mxu0
      %v1358 = vadd.f32 0.0, %v1357
      %v1359 = vpop.f32.mrb[0].mxu0
      %1360 = vdwg.mxu0
      %v1361 = vadd.f32 %v1238, %v1331
      %v1362 = vadd.f32 %v1239, %v1334
      %v1363 = vadd.f32 %v1240, %v1339
      %v1364 = vadd.f32 %v1241, %v1342
      %v1365 = vadd.f32 %v1242, %v1347
      %v1366 = vadd.f32 %v1243, %v1350
      %v1367 = vadd.f32 %v1244, %v1355
      %v1368 = vadd.f32 %v1245, %v1358
      %v1369 = vld [vmem:[%s1123] sm:$0xf]
      %v1370 = vld [vmem:[%s1123 + $0x4] sm:$0x1]
      %v1371 = vld [vmem:[%s1123 + $0x8] sm:$0xf]
      %v1372 = vld [vmem:[%s1123 + $0xc] sm:$0x1]
      %v1373 = vld [vmem:[%s1123 + $0x10] sm:$0xf]
      %v1374 = vld [vmem:[%s1123 + $0x14] sm:$0x1]
      %v1375 = vld [vmem:[%s1123 + $0x18] sm:$0xf]
      %v1376 = vld [vmem:[%s1123 + $0x1c] sm:$0x1]
      %v1377 = vld [vmem:[%s1123 + $0x20] sm:$0xf]
      %v1378 = vld [vmem:[%s1123 + $0x24] sm:$0x1]
      %v1379 = vld [vmem:[%s1123 + $0x28] sm:$0xf]
      %v1380 = vld [vmem:[%s1123 + $0x2c] sm:$0x1]
      %v1381 = vld [vmem:[%s1123 + $0x30] sm:$0xf]
      %v1382 = vld [vmem:[%s1123 + $0x34] sm:$0x1]
      %v1383 = vld [vmem:[%s1123 + $0x38] sm:$0xf]
      %v1384 = vld [vmem:[%s1123 + $0x3c] sm:$0x1]
      %v1386 = vshrl.u32 %v1369, 16
      %v1388 = vrot.slane %v1386, 4
      %v1389 = vshll.u32 %v1369, 16
      %v1391 = vrot.slane %v1389, 5
      %v1392 = vor.u32 %v1388, %v1391
      %v1393 = vrot.slane %v1392, 4
      %v1395 = vshll.u32 %v1370, 16
      %v1397 = vrot.slane %v1395, 5
      %v1398 = vsel %vm424, %v1393, %v1397
      %v1400 = vshrl.u32 %v1371, 16
      %v1402 = vrot.slane %v1400, 4
      %v1403 = vshll.u32 %v1371, 16
      %v1405 = vrot.slane %v1403, 5
      %v1406 = vor.u32 %v1402, %v1405
      %v1407 = vrot.slane %v1406, 4
      %v1409 = vshll.u32 %v1372, 16
      %v1411 = vrot.slane %v1409, 5
      %v1412 = vsel %vm424, %v1407, %v1411
      %v1414 = vshrl.u32 %v1373, 16
      %v1416 = vrot.slane %v1414, 4
      %v1417 = vshll.u32 %v1373, 16
      %v1419 = vrot.slane %v1417, 5
      %v1420 = vor.u32 %v1416, %v1419
      %v1421 = vrot.slane %v1420, 4
      %v1423 = vshll.u32 %v1374, 16
      %v1425 = vrot.slane %v1423, 5
      %v1426 = vsel %vm424, %v1421, %v1425
      %v1428 = vshrl.u32 %v1375, 16
      %v1430 = vrot.slane %v1428, 4
      %v1431 = vshll.u32 %v1375, 16
      %v1433 = vrot.slane %v1431, 5
      %v1434 = vor.u32 %v1430, %v1433
      %v1435 = vrot.slane %v1434, 4
      %v1437 = vshll.u32 %v1376, 16
      %v1439 = vrot.slane %v1437, 5
      %v1440 = vsel %vm424, %v1435, %v1439
      %v1442 = vshrl.u32 %v1377, 16
      %v1444 = vrot.slane %v1442, 4
      %v1445 = vshll.u32 %v1377, 16
      %v1447 = vrot.slane %v1445, 5
      %v1448 = vor.u32 %v1444, %v1447
      %v1449 = vrot.slane %v1448, 4
      %v1451 = vshll.u32 %v1378, 16
      %v1453 = vrot.slane %v1451, 5
      %v1454 = vsel %vm424, %v1449, %v1453
      %v1456 = vshrl.u32 %v1379, 16
      %v1458 = vrot.slane %v1456, 4
      %v1459 = vshll.u32 %v1379, 16
      %v1461 = vrot.slane %v1459, 5
      %v1462 = vor.u32 %v1458, %v1461
      %v1463 = vrot.slane %v1462, 4
      %v1465 = vshll.u32 %v1380, 16
      %v1467 = vrot.slane %v1465, 5
      %v1468 = vsel %vm424, %v1463, %v1467
      %v1470 = vshrl.u32 %v1381, 16
      %v1472 = vrot.slane %v1470, 4
      %v1473 = vshll.u32 %v1381, 16
      %v1475 = vrot.slane %v1473, 5
      %v1476 = vor.u32 %v1472, %v1475
      %v1477 = vrot.slane %v1476, 4
      %v1479 = vshll.u32 %v1382, 16
      %v1481 = vrot.slane %v1479, 5
      %v1482 = vsel %vm424, %v1477, %v1481
      %v1484 = vshrl.u32 %v1383, 16
      %v1486 = vrot.slane %v1484, 4
      %v1487 = vshll.u32 %v1383, 16
      %v1489 = vrot.slane %v1487, 5
      %v1490 = vor.u32 %v1486, %v1489
      %v1491 = vrot.slane %v1490, 4
      %v1493 = vshll.u32 %v1384, 16
      %v1495 = vrot.slane %v1493, 5
      %v1496 = vsel %vm424, %v1491, %v1495
      %s1497 = scalar_lea.vmem %s1, 64
      %v1498 = vld [vmem:[%s1497] sm:$0xf]
      %v1499 = vld [vmem:[%s1497 + $0x4] sm:$0xf]
      %v1500 = vunpack.c.l.b16 %v1398
      %v1501 = vunpack.c.l.b16 %v1412
      %v1502 = vunpack.c.l.b16 %v1426
      %v1503 = vunpack.c.l.b16 %v1440
      %v1504 = vunpack.c.l.b16 %v1454
      %v1505 = vunpack.c.l.b16 %v1468
      %v1506 = vunpack.c.l.b16 %v1482
      %v1507 = vunpack.c.l.b16 %v1496
      %v1508 = vpack.c.b16 %v1501, %v1500
      %v1509 = vpack.c.b16 %v1503, %v1502
      %v1510 = vpack.c.b16 %v1505, %v1504
      %v1511 = vpack.c.b16 %v1507, %v1506
      %v1514 = vunpack.c.l.b16 %v1498
      %v1515 = vunpack.c.l.b16 %v1499
      %v1516 = vpack.c.b16 %v1515, %v1514
      %v1519 = vsel %vm225, %v1508, 0
      %v1522 = vsel %vm225, %v1509, 0
      %v1525 = vsel %vm225, %v1510, 0
      %v1528 = vsel %vm225, %v1511, 0
      %1530 = vmatprep.subr.bf16.mxu0 0
      %1531 = vmatpush1.bf16.msra.mxu0 %v1516
      %1532 = vmatprep.subr.bf16.mxu0 0
      %1533 = vmatpush1.bf16.msra.mxu0 0
      %1534 = vmatprep.subr.bf16.mxu0 0
      %1535 = vmatpush1.bf16.msra.mxu0 0
      %1536 = vmatprep.subr.bf16.mxu0 0
      %1537 = vmatpush1.bf16.msra.mxu0 0
      %1538 = vmatprep.subr.bf16.mxu0 0
      %1539 = vmatpush1.bf16.msra.mxu0 0
      %1540 = vmatprep.subr.bf16.mxu0 0
      %1541 = vmatpush1.bf16.msra.mxu0 0
      %1542 = vmatprep.subr.bf16.mxu0 0
      %1543 = vmatpush1.bf16.msra.mxu0 0
      %1544 = vmatprep.subr.bf16.mxu0 0
      %1545 = vmatpush1.bf16.msra.mxu0 0
      %1546 = vmatprep.subr.bf16.mxu0 0
      %1547 = vmatpush1.bf16.msra.mxu0 0
      %1548 = vmatprep.subr.bf16.mxu0 0
      %1549 = vmatpush1.bf16.msra.mxu0 0
      %1550 = vmatprep.subr.bf16.mxu0 0
      %1551 = vmatpush1.bf16.msra.mxu0 0
      %1552 = vmatprep.subr.bf16.mxu0 0
      %1553 = vmatpush1.bf16.msra.mxu0 0
      %1554 = vmatprep.subr.bf16.mxu0 0
      %1555 = vmatpush1.bf16.msra.mxu0 0
      %1556 = vmatprep.subr.bf16.mxu0 0
      %1557 = vmatpush1.bf16.msra.mxu0 0
      %1558 = vmatprep.subr.bf16.mxu0 0
      %1559 = vmatpush1.bf16.msra.mxu0 0
      %1560 = vmatprep.subr.bf16.mxu0 0
      %1561 = vmatpush1.bf16.msra.mxu0 0
      %1562 = vmatprep.mubr.bf16.mxu0 0
      %1563 = vmatmul.mubr.bf16.gmra.mrb[0].mxu0 %v1519
      %v1564 = vpop.f32.mrb[0].mxu0
      %v1565 = vadd.f32 0.0, %v1564
      %v1566 = vpop.f32.mrb[0].mxu0
      %v1567 = vpop.f32.mrb[0].mxu0
      %v1568 = vadd.f32 0.0, %v1567
      %v1569 = vpop.f32.mrb[0].mxu0
      %1570 = vmatprep.mubr.bf16.mxu0 0
      %1571 = vmatmul.mubr.bf16.gmra.mrb[0].mxu0 %v1522
      %v1572 = vpop.f32.mrb[0].mxu0
      %v1573 = vadd.f32 0.0, %v1572
      %v1574 = vpop.f32.mrb[0].mxu0
      %v1575 = vpop.f32.mrb[0].mxu0
      %v1576 = vadd.f32 0.0, %v1575
      %v1577 = vpop.f32.mrb[0].mxu0
      %1578 = vmatprep.mubr.bf16.mxu0 0
      %1579 = vmatmul.mubr.bf16.gmra.mrb[0].mxu0 %v1525
      %v1580 = vpop.f32.mrb[0].mxu0
      %v1581 = vadd.f32 0.0, %v1580
      %v1582 = vpop.f32.mrb[0].mxu0
      %v1583 = vpop.f32.mrb[0].mxu0
      %v1584 = vadd.f32 0.0, %v1583
      %v1585 = vpop.f32.mrb[0].mxu0
      %1586 = vmatprep.mubr.bf16.mxu0 0
      %1587 = vmatmul.mubr.bf16.gmra.mrb[0].mxu0 %v1528
      %v1588 = vpop.f32.mrb[0].mxu0
      %v1589 = vadd.f32 0.0, %v1588
      %v1590 = vpop.f32.mrb[0].mxu0
      %v1591 = vpop.f32.mrb[0].mxu0
      %v1592 = vadd.f32 0.0, %v1591
      %v1593 = vpop.f32.mrb[0].mxu0
      %1594 = vdwg.mxu0
      %v1595 = vadd.f32 %v1361, %v1565
      %v1596 = vadd.f32 %v1362, %v1568
      %v1597 = vadd.f32 %v1363, %v1573
      %v1598 = vadd.f32 %v1364, %v1576
      %v1599 = vadd.f32 %v1365, %v1581
      %v1600 = vadd.f32 %v1366, %v1584
      %v1601 = vadd.f32 %v1367, %v1589
      %v1602 = vadd.f32 %v1368, %v1592
      %v1603 = vld [vmem:[%s2] sm:$0x1]
      %v1605 = vlaneseq
      %v1606 = vshrl.u32 %v1605, 7
      %v1607 = vsub.s32 0, %v1606
      %v1608 = vrot.slane %v1603, %v1607
      %v1610 = vadd.f32 %v1595, %v1608
      %v1611 = vadd.f32 %v1596, %v1608
      %v1612 = vadd.f32 %v1597, %v1608
      %v1613 = vadd.f32 %v1598, %v1608
      %v1614 = vadd.f32 %v1599, %v1608
      %v1615 = vadd.f32 %v1600, %v1608
      %v1616 = vadd.f32 %v1601, %v1608
      %v1617 = vadd.f32 %v1602, %v1608
      %v1618 = vmax.f32 %v1610, 0.0
      %v1619 = vmax.f32 %v1611, 0.0
      %v1620 = vmax.f32 %v1612, 0.0
      %v1621 = vmax.f32 %v1613, 0.0
      %v1622 = vmax.f32 %v1614, 0.0
      %v1623 = vmax.f32 %v1615, 0.0
      %v1624 = vmax.f32 %v1616, 0.0
      %v1625 = vmax.f32 %v1617, 0.0
      %v1626 = vpack.c.bf16 %v1618, %v1618
      %v1627 = vpack.c.bf16 %v1619, %v1619
      %v1628 = vpack.c.bf16 %v1620, %v1620
      %v1629 = vpack.c.bf16 %v1621, %v1621
      %v1630 = vpack.c.bf16 %v1622, %v1622
      %v1631 = vpack.c.bf16 %v1623, %v1623
      %v1632 = vpack.c.bf16 %v1624, %v1624
      %v1633 = vpack.c.bf16 %v1625, %v1625
      %vm1634 = vcmask 257024
      %1635 = vst.msk [vmem:[%s175] sm:$0xf] %vm1634, 0
      %vm1636 = vcmask 253952
      %1637 = vst.msk [vmem:[%s175 + $0x4] sm:$0x1] %vm1636, 0
      %1638 = vst.msk [vmem:[%s175 + $0x8] sm:$0xf] %vm1634, 0
      %1639 = vst.msk [vmem:[%s175 + $0xc] sm:$0x1] %vm1636, 0
      %1640 = vst.msk [vmem:[%s175 + $0x10] sm:$0xf] %vm1634, 0
      %1641 = vst.msk [vmem:[%s175 + $0x14] sm:$0x1] %vm1636, 0
      %1642 = vst.msk [vmem:[%s175 + $0x18] sm:$0xf] %vm1634, 0
      %1643 = vst.msk [vmem:[%s175 + $0x1c] sm:$0x1] %vm1636, 0
      %1644 = vst.msk [vmem:[%s175 + $0x20] sm:$0xf] %vm1634, 0
      %1645 = vst.msk [vmem:[%s175 + $0x24] sm:$0x1] %vm1636, 0
      %1646 = vst.msk [vmem:[%s175 + $0x28] sm:$0xf] %vm1634, 0
      %1647 = vst.msk [vmem:[%s175 + $0x2c] sm:$0x1] %vm1636, 0
      %1648 = vst.msk [vmem:[%s175 + $0x30] sm:$0xf] %vm1634, 0
      %1649 = vst.msk [vmem:[%s175 + $0x34] sm:$0x1] %vm1636, 0
      %1650 = vst.msk [vmem:[%s175 + $0x38] sm:$0xf] %vm1634, 0
      %1651 = vst.msk [vmem:[%s175 + $0x3c] sm:$0x1] %vm1636, 0
      %1652 = vst.msk [vmem:[%s175 + $0x40] sm:$0xf] %vm1634, 0
      %1653 = vst.msk [vmem:[%s175 + $0x44] sm:$0x1] %vm1636, 0
      %1654 = vst.msk [vmem:[%s175 + $0x48] sm:$0xf] %vm1634, 0
      %1655 = vst.msk [vmem:[%s175 + $0x4c] sm:$0x1] %vm1636, 0
      %v1664 = vunpack.c.l.b16 %v1626
      %v1665 = vunpack.c.l.b16 %v1627
      %v1666 = vunpack.c.l.b16 %v1628
      %v1667 = vunpack.c.l.b16 %v1629
      %v1668 = vunpack.c.l.b16 %v1630
      %v1669 = vunpack.c.l.b16 %v1631
      %v1670 = vunpack.c.l.b16 %v1632
      %v1671 = vunpack.c.l.b16 %v1633
      %v1672 = vpack.c.b16 %v1664, %v1664
      %v1673 = vpack.c.b16 %v1665, %v1665
      %v1674 = vpack.c.b16 %v1666, %v1666
      %v1675 = vpack.c.b16 %v1667, %v1667
      %v1676 = vpack.c.b16 %v1668, %v1668
      %v1677 = vpack.c.b16 %v1669, %v1669
      %v1678 = vpack.c.b16 %v1670, %v1670
      %v1679 = vpack.c.b16 %v1671, %v1671
      %v1681 = vshrl.u32 %v1672, 16
      %v1683 = vrot.slane %v1681, 7
      %v1684 = vshll.u32 %v1672, 16
      %v1686 = vor.u32 %v1683, %v1684
      %v1687 = vrot.slane %v1683, 4
      %v1689 = vshrl.u32 %v1673, 16
      %v1691 = vrot.slane %v1689, 7
      %v1692 = vshll.u32 %v1673, 16
      %v1694 = vor.u32 %v1691, %v1692
      %v1695 = vrot.slane %v1691, 4
      %v1697 = vshrl.u32 %v1674, 16
      %v1699 = vrot.slane %v1697, 7
      %v1700 = vshll.u32 %v1674, 16
      %v1702 = vor.u32 %v1699, %v1700
      %v1703 = vrot.slane %v1699, 4
      %v1705 = vshrl.u32 %v1675, 16
      %v1707 = vrot.slane %v1705, 7
      %v1708 = vshll.u32 %v1675, 16
      %v1710 = vor.u32 %v1707, %v1708
      %v1711 = vrot.slane %v1707, 4
      %v1713 = vshrl.u32 %v1676, 16
      %v1715 = vrot.slane %v1713, 7
      %v1716 = vshll.u32 %v1676, 16
      %v1718 = vor.u32 %v1715, %v1716
      %v1719 = vrot.slane %v1715, 4
      %v1721 = vshrl.u32 %v1677, 16
      %v1723 = vrot.slane %v1721, 7
      %v1724 = vshll.u32 %v1677, 16
      %v1726 = vor.u32 %v1723, %v1724
      %v1727 = vrot.slane %v1723, 4
      %v1729 = vshrl.u32 %v1678, 16
      %v1731 = vrot.slane %v1729, 7
      %v1732 = vshll.u32 %v1678, 16
      %v1734 = vor.u32 %v1731, %v1732
      %v1735 = vrot.slane %v1731, 4
      %v1737 = vshrl.u32 %v1679, 16
      %v1739 = vrot.slane %v1737, 7
      %v1740 = vshll.u32 %v1679, 16
      %v1742 = vor.u32 %v1739, %v1740
      %v1743 = vrot.slane %v1739, 4
      %s1760 = scalar_lea.vmem %s175, 8
      %vm1761 = vcmask 257024
      %vm1762 = vsmask.f32 7938
      %vm1763 = vmand %vm1761, %vm1762
      %v1764 = vld [vmem:[%s1760] sm:$0xf]
      %v1765 = vsel %vm1763, %v1686, %v1764
      %1766 = vst [vmem:[%s1760] sm:$0xf] %v1765
      %vm1767 = vcmask 253952
      %vm1768 = vsmask.f32 256
      %vm1769 = vmand %vm1767, %vm1768
      %v1770 = vld [vmem:[%s1760 + $0x4] sm:$0x1]
      %v1771 = vsel %vm1769, %v1687, %v1770
      %1772 = vst [vmem:[%s1760 + $0x4] sm:$0x1] %v1771
      %v1773 = vld [vmem:[%s1760 + $0x8] sm:$0xf]
      %v1774 = vsel %vm1763, %v1694, %v1773
      %1775 = vst [vmem:[%s1760 + $0x8] sm:$0xf] %v1774
      %v1776 = vld [vmem:[%s1760 + $0xc] sm:$0x1]
      %v1777 = vsel %vm1769, %v1695, %v1776
      %1778 = vst [vmem:[%s1760 + $0xc] sm:$0x1] %v1777
      %v1779 = vld [vmem:[%s1760 + $0x10] sm:$0xf]
      %v1780 = vsel %vm1763, %v1702, %v1779
      %1781 = vst [vmem:[%s1760 + $0x10] sm:$0xf] %v1780
      %v1782 = vld [vmem:[%s1760 + $0x14] sm:$0x1]
      %v1783 = vsel %vm1769, %v1703, %v1782
      %1784 = vst [vmem:[%s1760 + $0x14] sm:$0x1] %v1783
      %v1785 = vld [vmem:[%s1760 + $0x18] sm:$0xf]
      %v1786 = vsel %vm1763, %v1710, %v1785
      %1787 = vst [vmem:[%s1760 + $0x18] sm:$0xf] %v1786
      %v1788 = vld [vmem:[%s1760 + $0x1c] sm:$0x1]
      %v1789 = vsel %vm1769, %v1711, %v1788
      %1790 = vst [vmem:[%s1760 + $0x1c] sm:$0x1] %v1789
      %v1791 = vld [vmem:[%s1760 + $0x20] sm:$0xf]
      %v1792 = vsel %vm1763, %v1718, %v1791
      %1793 = vst [vmem:[%s1760 + $0x20] sm:$0xf] %v1792
      %v1794 = vld [vmem:[%s1760 + $0x24] sm:$0x1]
      %v1795 = vsel %vm1769, %v1719, %v1794
      %1796 = vst [vmem:[%s1760 + $0x24] sm:$0x1] %v1795
      %v1797 = vld [vmem:[%s1760 + $0x28] sm:$0xf]
      %v1798 = vsel %vm1763, %v1726, %v1797
      %1799 = vst [vmem:[%s1760 + $0x28] sm:$0xf] %v1798
      %v1800 = vld [vmem:[%s1760 + $0x2c] sm:$0x1]
      %v1801 = vsel %vm1769, %v1727, %v1800
      %1802 = vst [vmem:[%s1760 + $0x2c] sm:$0x1] %v1801
      %v1803 = vld [vmem:[%s1760 + $0x30] sm:$0xf]
      %v1804 = vsel %vm1763, %v1734, %v1803
      %1805 = vst [vmem:[%s1760 + $0x30] sm:$0xf] %v1804
      %v1806 = vld [vmem:[%s1760 + $0x34] sm:$0x1]
      %v1807 = vsel %vm1769, %v1735, %v1806
      %1808 = vst [vmem:[%s1760 + $0x34] sm:$0x1] %v1807
      %v1809 = vld [vmem:[%s1760 + $0x38] sm:$0xf]
      %v1810 = vsel %vm1763, %v1742, %v1809
      %1811 = vst [vmem:[%s1760 + $0x38] sm:$0xf] %v1810
      %v1812 = vld [vmem:[%s1760 + $0x3c] sm:$0x1]
      %v1813 = vsel %vm1769, %v1743, %v1812
      %1814 = vst [vmem:[%s1760 + $0x3c] sm:$0x1] %v1813
      %p1815 = scmp.lt.s32.totalorder %s14, 1
      %s1816 = scalar_select %p1815, %s14, 1
      %s1817 = smul.addr %s1816, 20
      %s1818 = smul.addr %s1817, 4
      %s1819 = scalar_lea.vmem %s3, %s1818
      // Predicated region
      $region33: #{basic_block_pallas.3} parent=31 // pred_check
        %p1820 = pneg %p100
      $region34: #{basic_block_pallas.3} parent=31 // pred_check_branch
        %1822 = sbr.rel (%p1820) target = $region36
      $region35: #{basic_block_pallas.3} parent=31 // pred_region
        _
      $region36: #{basic_block_pallas.3} parent=31 // pred_fallthru
        _
    $region32: #{basic_block_pallas.3} parent=5 // pred_fallthru
      _
    %p1823 = scmp.le.s32.totalorder 2, %s9
    // Predicated region
    $region37: #{basic_block_pallas.3} parent=5 // pred_check
      %p1824 = pneg %p1823
    $region38: #{basic_block_pallas.3} parent=5 // pred_check_branch
      %1826 = sbr.rel (%p1824) target = $region40
    $region39: #{basic_block_pallas.3} parent=5 // pred_region
      %s1827 = ssub.s32 %s9, 2
      // Predicated region
      $region41: #{basic_block_pallas.3} parent=39 // pred_check
        %p1828 = pneg %p106
      $region42: #{basic_block_pallas.3} parent=39 // pred_check_branch
        %1830 = sbr.rel (%p1828) target = $region44
      $region43: #{basic_block_pallas.3} parent=39 // pred_region
        %p1831 = scmp.lt.s32.totalorder %s15, 1
        %s1832 = scalar_select %p1831, %s15, 1
        %s1833 = smul.addr %s1832, 20
        %s1834 = smul.addr %s1833, 4
        %s1835 = scalar_lea.vmem %s3, %s1834
      $region44: #{basic_block_pallas.3} parent=39 // pred_fallthru
        _
    $region40: #{basic_block_pallas.3} parent=5 // pred_fallthru
      _
  $region6: #{basic_block_pallas.3} parent=0 // loop_footer
    %s13 = sadd.s32 1, %s9
  $region7: #{basic_block_pallas.3} parent=0 // loop_footer_branch
    %8 = sbr.rel target = $region3
  $region8: #{basic_block_pallas.3} parent=0 // loop_exit
    _

</llo_original>
